<compile_context>
chip_gen: v6e
topology: v6e:2x2x1
jax: 0.10.0
libtpu: 0.0.40
codegen_flags: <defaults>
</compile_context>

<pallas_src>
import functools

import jax
import jax.numpy as jnp
import numpy as np
from jax.experimental import pallas as pl
from jax.experimental.pallas import tpu as pltpu


def _lstm_kernel(x_ref, w_ih_ref, w_hh_ref, b_ref, w_fc_ref, b_fc_ref, out_ref,
                 *, seq_len, hidden_pad):
    """Runs the full T-step LSTM recurrence + final fc in one invocation.

    x_ref    : (T, D)        bf16   flattened frames
    w_ih_ref : (D, 4*Hp)     bf16   W_ih^T, gate-padded
    w_hh_ref : (Hp, 4*Hp)    bf16   W_hh^T, gate-padded
    b_ref    : (1, 4*Hp)     f32    b_ih + b_hh, gate-padded
    w_fc_ref : (Hp, D)       bf16   W_fc^T, row-padded
    b_fc_ref : (1, D)        f32
    out_ref  : (1, D)        f32    context = fc(h_T)
    """
    Hp = hidden_pad

    # (1) Time-batched input projection: one MXU matmul for all T steps.
    gates_x = (jnp.dot(x_ref[...], w_ih_ref[...],
                       preferred_element_type=jnp.float32)
               + b_ref[...])                                  # (T, 4*Hp) f32

    w_hh = w_hh_ref[...]                                      # loaded once

    h = jnp.zeros((1, Hp), jnp.float32)
    c = jnp.zeros((1, Hp), jnp.float32)

    # (2) Statically-unrolled recurrence; only the tiny h @ W_hh^T matmul and
    #     the gate nonlinearities sit on the serial dependence chain.
    for t in range(seq_len):
        gates = gates_x[t:t + 1, :] + jnp.dot(
            h.astype(jnp.bfloat16), w_hh, preferred_element_type=jnp.float32)
        # Lane-aligned gate slices (each is a full 128-lane group).
        i_g = jax.nn.sigmoid(gates[:, 0 * Hp:1 * Hp])
        f_g = jax.nn.sigmoid(gates[:, 1 * Hp:2 * Hp])
        g_g = jnp.tanh(gates[:, 2 * Hp:3 * Hp])
        o_g = jax.nn.sigmoid(gates[:, 3 * Hp:4 * Hp])
        c = f_g * c + i_g * g_g
        h = o_g * jnp.tanh(c)

    # (3) Final fc: context = h_T @ W_fc^T + b_fc  -> lane-dense (1, D).
    out_ref[...] = (jnp.dot(h.astype(jnp.bfloat16), w_fc_ref[...],
                            preferred_element_type=jnp.float32)
                    + b_fc_ref[...])


def _pad_gates_last(m, hd, hp):
    """Zero-pad each of the 4 gate blocks along the last axis from hd to hp."""
    if hp == hd:
        return m
    parts = jnp.split(m, 4, axis=-1)
    pad = ((0, 0), (0, hp - hd))
    return jnp.concatenate([jnp.pad(p, pad) for p in parts], axis=-1)


def _prepare_params(params, hidden_pad):
    """Gate-pad hidden dim to a lane multiple and cast matmul weights to bf16."""
    hd = params["w_hh_t"].shape[0]
    hp = hidden_pad
    w_ih = _pad_gates_last(params["w_ih_t"], hd, hp).astype(jnp.bfloat16)
    w_hh = jnp.pad(params["w_hh_t"], ((0, hp - hd), (0, 0)))
    w_hh = _pad_gates_last(w_hh, hd, hp).astype(jnp.bfloat16)
    b = _pad_gates_last(params["b"], hd, hp)                     # f32
    w_fc = jnp.pad(params["w_fc_t"], ((0, hp - hd), (0, 0))).astype(jnp.bfloat16)
    b_fc = params["b_fc"]                                        # f32
    return w_ih, w_hh, b, w_fc, b_fc


def stepwise_frame_lstm(frames, params, output_shape):
    """frames: (T, C, H, W) float32.  Returns (1, *output_shape)."""
    T = frames.shape[0]
    D = int(np.prod(frames.shape[1:]))           # input_size = C*H*W
    Hd = params["w_hh_t"].shape[0]               # hidden_size
    Hp = ((Hd + 127) // 128) * 128               # lane-aligned hidden size

    x = frames.reshape(T, D).astype(jnp.bfloat16)
    w_ih, w_hh, b, w_fc, b_fc = _prepare_params(params, Hp)

    kernel = functools.partial(_lstm_kernel, seq_len=T, hidden_pad=Hp)

    vmem = pl.BlockSpec(memory_space=pltpu.MemorySpace.VMEM)
    context_flat = pl.pallas_call(
        kernel,
        out_shape=jax.ShapeDtypeStruct((1, D), jnp.float32),
        in_specs=[vmem] * 6,        # whole operands resident in VMEM, single buffer
        out_specs=vmem,
    )(x, w_ih, w_hh, b, w_fc, b_fc)

    return context_flat.reshape((1,) + tuple(output_shape))


def init_params(key, input_size, hidden_size):
    """Deterministic init matching PyTorch shapes (uniform +-1/sqrt(hidden))."""
    ks = jax.random.split(key, 6)
    bound = 1.0 / np.sqrt(hidden_size)
    u = lambda k, shape: jax.random.uniform(k, shape, jnp.float32, -bound, bound)
    w_ih = u(ks[0], (4 * hidden_size, input_size))   # torch layout (4H, D)
    w_hh = u(ks[1], (4 * hidden_size, hidden_size))
    b_ih = u(ks[2], (4 * hidden_size,))
    b_hh = u(ks[3], (4 * hidden_size,))
    w_fc = u(ks[4], (input_size, hidden_size))
    b_fc = u(ks[5], (input_size,))
    return {
        "w_ih_t": jnp.transpose(w_ih),                       # (D, 4H)
        "w_hh_t": jnp.transpose(w_hh),                       # (H, 4H)
        "b": (b_ih + b_hh).reshape(1, 4 * hidden_size),      # (1, 4H)
        "w_fc_t": jnp.transpose(w_fc),                       # (H, D)
        "b_fc": b_fc.reshape(1, input_size),                 # (1, D)
    }


def reference_forward(frames, params, output_shape):
    """Pure-JAX f32 reference mirroring torch.nn.LSTMCell semantics."""
    T = frames.shape[0]
    D = int(np.prod(frames.shape[1:]))
    Hd = params["w_hh_t"].shape[0]
    x_all = frames.reshape(T, D).astype(jnp.float32)
    h = jnp.zeros((1, Hd), jnp.float32)
    c = jnp.zeros((1, Hd), jnp.float32)
    for t in range(T):
        x = x_all[t:t + 1]
        gates = x @ params["w_ih_t"] + h @ params["w_hh_t"] + params["b"]
        i = jax.nn.sigmoid(gates[:, 0 * Hd:1 * Hd])
        f = jax.nn.sigmoid(gates[:, 1 * Hd:2 * Hd])
        g = jnp.tanh(gates[:, 2 * Hd:3 * Hd])
        o = jax.nn.sigmoid(gates[:, 3 * Hd:4 * Hd])
        c = f * c + i * g
        h = o * jnp.tanh(c)
    ctx = h @ params["w_fc_t"] + params["b_fc"]
    return ctx.reshape((1,) + tuple(output_shape))


if __name__ == "__main__":
    T, C, H, W = 8, 4, 16, 16          # frames: (T, C, H, W)
    hidden_size = 32
    input_size = C * H * W
    output_shape = (C, H, W)

    key = jax.random.PRNGKey(0)
    k_frames, k_params = jax.random.split(key)
    frames = jax.random.normal(k_frames, (T, C, H, W), jnp.float32)
    params = init_params(k_params, input_size, hidden_size)

    out = stepwise_frame_lstm(frames, params, output_shape)
    out = jax.block_until_ready(out)
    assert out.shape == (1, C, H, W), out.shape

    ref = jax.block_until_ready(reference_forward(frames, params, output_shape))
    # bf16 matmul operands (f32 accumulation) vs pure-f32 reference: tolerance
    # loosened per the review; observed error is ~1e-2 absolute at these sizes.
    np.testing.assert_allclose(np.asarray(out), np.asarray(ref),
                               rtol=5e-2, atol=5e-2)

    print("KERNEL_OK")
</pallas_src>

<mosaic_0001>
module attributes {stable_mosaic.version = 11 : i64} {
  func.func @_lstm_kernel(%arg0: memref<8x1024xbf16, #tpu.memory_space<vmem>>, %arg1: memref<1024x512xbf16, #tpu.memory_space<vmem>>, %arg2: memref<128x512xbf16, #tpu.memory_space<vmem>>, %arg3: memref<1x512xf32, #tpu.memory_space<vmem>>, %arg4: memref<128x1024xbf16, #tpu.memory_space<vmem>>, %arg5: memref<1x1024xf32, #tpu.memory_space<vmem>>, %arg6: memref<1x1024xf32, #tpu.memory_space<vmem>>) attributes {dimension_semantics = [], scalar_prefetch = 0 : i64, scratch_operands = 0 : i64, tpu.core_type = #tpu.core_type<tc>} {
    %c0 = arith.constant 0 : index
    %c0_0 = arith.constant 0 : index
    %0 = vector.load %arg0[%c0, %c0_0] : memref<8x1024xbf16, #tpu.memory_space<vmem>>, vector<8x1024xbf16>
    %c0_1 = arith.constant 0 : index
    %c0_2 = arith.constant 0 : index
    %1 = vector.load %arg1[%c0_1, %c0_2] : memref<1024x512xbf16, #tpu.memory_space<vmem>>, vector<1024x512xbf16>
    %cst = arith.constant dense<0.000000e+00> : vector<8x512xf32>
    %2 = tpu.matmul %0, %1, %cst {dimension_numbers = #tpu.dot_dimension_numbers<[1], [0], [0], [1], [0, 0, 1, 1], [], []>} : vector<8x1024xbf16>, vector<1024x512xbf16>, vector<8x512xf32> -> vector<8x512xf32>
    %c0_3 = arith.constant 0 : index
    %c0_4 = arith.constant 0 : index
    %3 = vector.load %arg3[%c0_3, %c0_4] : memref<1x512xf32, #tpu.memory_space<vmem>>, vector<1x512xf32>
    %4 = vector.broadcast %3 : vector<1x512xf32> to vector<8x512xf32>
    %5 = arith.addf %2, %4 : vector<8x512xf32>
    %c0_5 = arith.constant 0 : index
    %c0_6 = arith.constant 0 : index
    %6 = vector.load %arg2[%c0_5, %c0_6] : memref<128x512xbf16, #tpu.memory_space<vmem>>, vector<128x512xbf16>
    %cst_7 = arith.constant 0.000000e+00 : f32
    %7 = vector.broadcast %cst_7 : f32 to vector<1x128xf32>
    %cst_8 = arith.constant 0.000000e+00 : f32
    %8 = vector.broadcast %cst_8 : f32 to vector<1x128xf32>
    %9 = vector.extract_strided_slice %5 {offsets = [0, 0], sizes = [1, 512], strides = [1, 1]} : vector<8x512xf32> to vector<1x512xf32>
    %10 = arith.truncf %7 : vector<1x128xf32> to vector<1x128xbf16>
    %cst_9 = arith.constant dense<0.000000e+00> : vector<1x512xf32>
    %11 = tpu.matmul %10, %6, %cst_9 {dimension_numbers = #tpu.dot_dimension_numbers<[1], [0], [0], [1], [0, 0, 1, 1], [], []>} : vector<1x128xbf16>, vector<128x512xbf16>, vector<1x512xf32> -> vector<1x512xf32>
    %12 = arith.addf %9, %11 : vector<1x512xf32>
    %13 = vector.extract_strided_slice %12 {offsets = [0, 0], sizes = [1, 128], strides = [1, 1]} : vector<1x512xf32> to vector<1x128xf32>
    %14 = arith.negf %13 : vector<1x128xf32>
    %15 = math.exp %14 : vector<1x128xf32>
    %cst_10 = arith.constant 1.000000e+00 : f32
    %16 = vector.broadcast %cst_10 : f32 to vector<1x128xf32>
    %17 = arith.addf %16, %15 : vector<1x128xf32>
    %18 = arith.divf %16, %17 : vector<1x128xf32>
    %19 = vector.extract_strided_slice %12 {offsets = [0, 128], sizes = [1, 128], strides = [1, 1]} : vector<1x512xf32> to vector<1x128xf32>
    %20 = arith.negf %19 : vector<1x128xf32>
    %21 = math.exp %20 : vector<1x128xf32>
    %cst_11 = arith.constant 1.000000e+00 : f32
    %22 = vector.broadcast %cst_11 : f32 to vector<1x128xf32>
    %23 = arith.addf %22, %21 : vector<1x128xf32>
    %24 = arith.divf %22, %23 : vector<1x128xf32>
    %25 = vector.extract_strided_slice %12 {offsets = [0, 256], sizes = [1, 128], strides = [1, 1]} : vector<1x512xf32> to vector<1x128xf32>
    %26 = math.tanh %25 : vector<1x128xf32>
    %27 = vector.extract_strided_slice %12 {offsets = [0, 384], sizes = [1, 128], strides = [1, 1]} : vector<1x512xf32> to vector<1x128xf32>
    %28 = arith.negf %27 : vector<1x128xf32>
    %29 = math.exp %28 : vector<1x128xf32>
    %cst_12 = arith.constant 1.000000e+00 : f32
    %30 = vector.broadcast %cst_12 : f32 to vector<1x128xf32>
    %31 = arith.addf %30, %29 : vector<1x128xf32>
    %32 = arith.divf %30, %31 : vector<1x128xf32>
    %33 = arith.mulf %24, %8 : vector<1x128xf32>
    %34 = arith.mulf %18, %26 : vector<1x128xf32>
    %35 = arith.addf %33, %34 : vector<1x128xf32>
    %36 = math.tanh %35 : vector<1x128xf32>
    %37 = arith.mulf %32, %36 : vector<1x128xf32>
    %38 = vector.extract_strided_slice %5 {offsets = [1, 0], sizes = [1, 512], strides = [1, 1]} : vector<8x512xf32> to vector<1x512xf32>
    %39 = arith.truncf %37 : vector<1x128xf32> to vector<1x128xbf16>
    %cst_13 = arith.constant dense<0.000000e+00> : vector<1x512xf32>
    %40 = tpu.matmul %39, %6, %cst_13 {dimension_numbers = #tpu.dot_dimension_numbers<[1], [0], [0], [1], [0, 0, 1, 1], [], []>} : vector<1x128xbf16>, vector<128x512xbf16>, vector<1x512xf32> -> vector<1x512xf32>
    %41 = arith.addf %38, %40 : vector<1x512xf32>
    %42 = vector.extract_strided_slice %41 {offsets = [0, 0], sizes = [1, 128], strides = [1, 1]} : vector<1x512xf32> to vector<1x128xf32>
    %43 = arith.negf %42 : vector<1x128xf32>
    %44 = math.exp %43 : vector<1x128xf32>
    %cst_14 = arith.constant 1.000000e+00 : f32
    %45 = vector.broadcast %cst_14 : f32 to vector<1x128xf32>
    %46 = arith.addf %45, %44 : vector<1x128xf32>
    %47 = arith.divf %45, %46 : vector<1x128xf32>
    %48 = vector.extract_strided_slice %41 {offsets = [0, 128], sizes = [1, 128], strides = [1, 1]} : vector<1x512xf32> to vector<1x128xf32>
    %49 = arith.negf %48 : vector<1x128xf32>
    %50 = math.exp %49 : vector<1x128xf32>
    %cst_15 = arith.constant 1.000000e+00 : f32
    %51 = vector.broadcast %cst_15 : f32 to vector<1x128xf32>
    %52 = arith.addf %51, %50 : vector<1x128xf32>
    %53 = arith.divf %51, %52 : vector<1x128xf32>
    %54 = vector.extract_strided_slice %41 {offsets = [0, 256], sizes = [1, 128], strides = [1, 1]} : vector<1x512xf32> to vector<1x128xf32>
    %55 = math.tanh %54 : vector<1x128xf32>
    %56 = vector.extract_strided_slice %41 {offsets = [0, 384], sizes = [1, 128], strides = [1, 1]} : vector<1x512xf32> to vector<1x128xf32>
    %57 = arith.negf %56 : vector<1x128xf32>
    %58 = math.exp %57 : vector<1x128xf32>
    %cst_16 = arith.constant 1.000000e+00 : f32
    %59 = vector.broadcast %cst_16 : f32 to vector<1x128xf32>
    %60 = arith.addf %59, %58 : vector<1x128xf32>
    %61 = arith.divf %59, %60 : vector<1x128xf32>
    %62 = arith.mulf %53, %35 : vector<1x128xf32>
    %63 = arith.mulf %47, %55 : vector<1x128xf32>
    %64 = arith.addf %62, %63 : vector<1x128xf32>
    %65 = math.tanh %64 : vector<1x128xf32>
    %66 = arith.mulf %61, %65 : vector<1x128xf32>
    %67 = vector.extract_strided_slice %5 {offsets = [2, 0], sizes = [1, 512], strides = [1, 1]} : vector<8x512xf32> to vector<1x512xf32>
    %68 = arith.truncf %66 : vector<1x128xf32> to vector<1x128xbf16>
    %cst_17 = arith.constant dense<0.000000e+00> : vector<1x512xf32>
    %69 = tpu.matmul %68, %6, %cst_17 {dimension_numbers = #tpu.dot_dimension_numbers<[1], [0], [0], [1], [0, 0, 1, 1], [], []>} : vector<1x128xbf16>, vector<128x512xbf16>, vector<1x512xf32> -> vector<1x512xf32>
    %70 = arith.addf %67, %69 : vector<1x512xf32>
    %71 = vector.extract_strided_slice %70 {offsets = [0, 0], sizes = [1, 128], strides = [1, 1]} : vector<1x512xf32> to vector<1x128xf32>
    %72 = arith.negf %71 : vector<1x128xf32>
    %73 = math.exp %72 : vector<1x128xf32>
    %cst_18 = arith.constant 1.000000e+00 : f32
    %74 = vector.broadcast %cst_18 : f32 to vector<1x128xf32>
    %75 = arith.addf %74, %73 : vector<1x128xf32>
    %76 = arith.divf %74, %75 : vector<1x128xf32>
    %77 = vector.extract_strided_slice %70 {offsets = [0, 128], sizes = [1, 128], strides = [1, 1]} : vector<1x512xf32> to vector<1x128xf32>
    %78 = arith.negf %77 : vector<1x128xf32>
    %79 = math.exp %78 : vector<1x128xf32>
    %cst_19 = arith.constant 1.000000e+00 : f32
    %80 = vector.broadcast %cst_19 : f32 to vector<1x128xf32>
    %81 = arith.addf %80, %79 : vector<1x128xf32>
    %82 = arith.divf %80, %81 : vector<1x128xf32>
    %83 = vector.extract_strided_slice %70 {offsets = [0, 256], sizes = [1, 128], strides = [1, 1]} : vector<1x512xf32> to vector<1x128xf32>
    %84 = math.tanh %83 : vector<1x128xf32>
    %85 = vector.extract_strided_slice %70 {offsets = [0, 384], sizes = [1, 128], strides = [1, 1]} : vector<1x512xf32> to vector<1x128xf32>
    %86 = arith.negf %85 : vector<1x128xf32>
    %87 = math.exp %86 : vector<1x128xf32>
    %cst_20 = arith.constant 1.000000e+00 : f32
    %88 = vector.broadcast %cst_20 : f32 to vector<1x128xf32>
    %89 = arith.addf %88, %87 : vector<1x128xf32>
    %90 = arith.divf %88, %89 : vector<1x128xf32>
    %91 = arith.mulf %82, %64 : vector<1x128xf32>
    %92 = arith.mulf %76, %84 : vector<1x128xf32>
    %93 = arith.addf %91, %92 : vector<1x128xf32>
    %94 = math.tanh %93 : vector<1x128xf32>
    %95 = arith.mulf %90, %94 : vector<1x128xf32>
    %96 = vector.extract_strided_slice %5 {offsets = [3, 0], sizes = [1, 512], strides = [1, 1]} : vector<8x512xf32> to vector<1x512xf32>
    %97 = arith.truncf %95 : vector<1x128xf32> to vector<1x128xbf16>
    %cst_21 = arith.constant dense<0.000000e+00> : vector<1x512xf32>
    %98 = tpu.matmul %97, %6, %cst_21 {dimension_numbers = #tpu.dot_dimension_numbers<[1], [0], [0], [1], [0, 0, 1, 1], [], []>} : vector<1x128xbf16>, vector<128x512xbf16>, vector<1x512xf32> -> vector<1x512xf32>
    %99 = arith.addf %96, %98 : vector<1x512xf32>
    %100 = vector.extract_strided_slice %99 {offsets = [0, 0], sizes = [1, 128], strides = [1, 1]} : vector<1x512xf32> to vector<1x128xf32>
    %101 = arith.negf %100 : vector<1x128xf32>
    %102 = math.exp %101 : vector<1x128xf32>
    %cst_22 = arith.constant 1.000000e+00 : f32
    %103 = vector.broadcast %cst_22 : f32 to vector<1x128xf32>
    %104 = arith.addf %103, %102 : vector<1x128xf32>
    %105 = arith.divf %103, %104 : vector<1x128xf32>
    %106 = vector.extract_strided_slice %99 {offsets = [0, 128], sizes = [1, 128], strides = [1, 1]} : vector<1x512xf32> to vector<1x128xf32>
    %107 = arith.negf %106 : vector<1x128xf32>
    %108 = math.exp %107 : vector<1x128xf32>
    %cst_23 = arith.constant 1.000000e+00 : f32
    %109 = vector.broadcast %cst_23 : f32 to vector<1x128xf32>
    %110 = arith.addf %109, %108 : vector<1x128xf32>
    %111 = arith.divf %109, %110 : vector<1x128xf32>
    %112 = vector.extract_strided_slice %99 {offsets = [0, 256], sizes = [1, 128], strides = [1, 1]} : vector<1x512xf32> to vector<1x128xf32>
    %113 = math.tanh %112 : vector<1x128xf32>
    %114 = vector.extract_strided_slice %99 {offsets = [0, 384], sizes = [1, 128], strides = [1, 1]} : vector<1x512xf32> to vector<1x128xf32>
    %115 = arith.negf %114 : vector<1x128xf32>
    %116 = math.exp %115 : vector<1x128xf32>
    %cst_24 = arith.constant 1.000000e+00 : f32
    %117 = vector.broadcast %cst_24 : f32 to vector<1x128xf32>
    %118 = arith.addf %117, %116 : vector<1x128xf32>
    %119 = arith.divf %117, %118 : vector<1x128xf32>
    %120 = arith.mulf %111, %93 : vector<1x128xf32>
    %121 = arith.mulf %105, %113 : vector<1x128xf32>
    %122 = arith.addf %120, %121 : vector<1x128xf32>
    %123 = math.tanh %122 : vector<1x128xf32>
    %124 = arith.mulf %119, %123 : vector<1x128xf32>
    %125 = vector.extract_strided_slice %5 {offsets = [4, 0], sizes = [1, 512], strides = [1, 1]} : vector<8x512xf32> to vector<1x512xf32>
    %126 = arith.truncf %124 : vector<1x128xf32> to vector<1x128xbf16>
    %cst_25 = arith.constant dense<0.000000e+00> : vector<1x512xf32>
    %127 = tpu.matmul %126, %6, %cst_25 {dimension_numbers = #tpu.dot_dimension_numbers<[1], [0], [0], [1], [0, 0, 1, 1], [], []>} : vector<1x128xbf16>, vector<128x512xbf16>, vector<1x512xf32> -> vector<1x512xf32>
    %128 = arith.addf %125, %127 : vector<1x512xf32>
    %129 = vector.extract_strided_slice %128 {offsets = [0, 0], sizes = [1, 128], strides = [1, 1]} : vector<1x512xf32> to vector<1x128xf32>
    %130 = arith.negf %129 : vector<1x128xf32>
    %131 = math.exp %130 : vector<1x128xf32>
    %cst_26 = arith.constant 1.000000e+00 : f32
    %132 = vector.broadcast %cst_26 : f32 to vector<1x128xf32>
    %133 = arith.addf %132, %131 : vector<1x128xf32>
    %134 = arith.divf %132, %133 : vector<1x128xf32>
    %135 = vector.extract_strided_slice %128 {offsets = [0, 128], sizes = [1, 128], strides = [1, 1]} : vector<1x512xf32> to vector<1x128xf32>
    %136 = arith.negf %135 : vector<1x128xf32>
    %137 = math.exp %136 : vector<1x128xf32>
    %cst_27 = arith.constant 1.000000e+00 : f32
    %138 = vector.broadcast %cst_27 : f32 to vector<1x128xf32>
    %139 = arith.addf %138, %137 : vector<1x128xf32>
    %140 = arith.divf %138, %139 : vector<1x128xf32>
    %141 = vector.extract_strided_slice %128 {offsets = [0, 256], sizes = [1, 128], strides = [1, 1]} : vector<1x512xf32> to vector<1x128xf32>
    %142 = math.tanh %141 : vector<1x128xf32>
    %143 = vector.extract_strided_slice %128 {offsets = [0, 384], sizes = [1, 128], strides = [1, 1]} : vector<1x512xf32> to vector<1x128xf32>
    %144 = arith.negf %143 : vector<1x128xf32>
    %145 = math.exp %144 : vector<1x128xf32>
    %cst_28 = arith.constant 1.000000e+00 : f32
    %146 = vector.broadcast %cst_28 : f32 to vector<1x128xf32>
    %147 = arith.addf %146, %145 : vector<1x128xf32>
    %148 = arith.divf %146, %147 : vector<1x128xf32>
    %149 = arith.mulf %140, %122 : vector<1x128xf32>
    %150 = arith.mulf %134, %142 : vector<1x128xf32>
    %151 = arith.addf %149, %150 : vector<1x128xf32>
    %152 = math.tanh %151 : vector<1x128xf32>
    %153 = arith.mulf %148, %152 : vector<1x128xf32>
    %154 = vector.extract_strided_slice %5 {offsets = [5, 0], sizes = [1, 512], strides = [1, 1]} : vector<8x512xf32> to vector<1x512xf32>
    %155 = arith.truncf %153 : vector<1x128xf32> to vector<1x128xbf16>
    %cst_29 = arith.constant dense<0.000000e+00> : vector<1x512xf32>
    %156 = tpu.matmul %155, %6, %cst_29 {dimension_numbers = #tpu.dot_dimension_numbers<[1], [0], [0], [1], [0, 0, 1, 1], [], []>} : vector<1x128xbf16>, vector<128x512xbf16>, vector<1x512xf32> -> vector<1x512xf32>
    %157 = arith.addf %154, %156 : vector<1x512xf32>
    %158 = vector.extract_strided_slice %157 {offsets = [0, 0], sizes = [1, 128], strides = [1, 1]} : vector<1x512xf32> to vector<1x128xf32>
    %159 = arith.negf %158 : vector<1x128xf32>
    %160 = math.exp %159 : vector<1x128xf32>
    %cst_30 = arith.constant 1.000000e+00 : f32
    %161 = vector.broadcast %cst_30 : f32 to vector<1x128xf32>
    %162 = arith.addf %161, %160 : vector<1x128xf32>
    %163 = arith.divf %161, %162 : vector<1x128xf32>
    %164 = vector.extract_strided_slice %157 {offsets = [0, 128], sizes = [1, 128], strides = [1, 1]} : vector<1x512xf32> to vector<1x128xf32>
    %165 = arith.negf %164 : vector<1x128xf32>
    %166 = math.exp %165 : vector<1x128xf32>
    %cst_31 = arith.constant 1.000000e+00 : f32
    %167 = vector.broadcast %cst_31 : f32 to vector<1x128xf32>
    %168 = arith.addf %167, %166 : vector<1x128xf32>
    %169 = arith.divf %167, %168 : vector<1x128xf32>
    %170 = vector.extract_strided_slice %157 {offsets = [0, 256], sizes = [1, 128], strides = [1, 1]} : vector<1x512xf32> to vector<1x128xf32>
    %171 = math.tanh %170 : vector<1x128xf32>
    %172 = vector.extract_strided_slice %157 {offsets = [0, 384], sizes = [1, 128], strides = [1, 1]} : vector<1x512xf32> to vector<1x128xf32>
    %173 = arith.negf %172 : vector<1x128xf32>
    %174 = math.exp %173 : vector<1x128xf32>
    %cst_32 = arith.constant 1.000000e+00 : f32
    %175 = vector.broadcast %cst_32 : f32 to vector<1x128xf32>
    %176 = arith.addf %175, %174 : vector<1x128xf32>
    %177 = arith.divf %175, %176 : vector<1x128xf32>
    %178 = arith.mulf %169, %151 : vector<1x128xf32>
    %179 = arith.mulf %163, %171 : vector<1x128xf32>
    %180 = arith.addf %178, %179 : vector<1x128xf32>
    %181 = math.tanh %180 : vector<1x128xf32>
    %182 = arith.mulf %177, %181 : vector<1x128xf32>
    %183 = vector.extract_strided_slice %5 {offsets = [6, 0], sizes = [1, 512], strides = [1, 1]} : vector<8x512xf32> to vector<1x512xf32>
    %184 = arith.truncf %182 : vector<1x128xf32> to vector<1x128xbf16>
    %cst_33 = arith.constant dense<0.000000e+00> : vector<1x512xf32>
    %185 = tpu.matmul %184, %6, %cst_33 {dimension_numbers = #tpu.dot_dimension_numbers<[1], [0], [0], [1], [0, 0, 1, 1], [], []>} : vector<1x128xbf16>, vector<128x512xbf16>, vector<1x512xf32> -> vector<1x512xf32>
    %186 = arith.addf %183, %185 : vector<1x512xf32>
    %187 = vector.extract_strided_slice %186 {offsets = [0, 0], sizes = [1, 128], strides = [1, 1]} : vector<1x512xf32> to vector<1x128xf32>
    %188 = arith.negf %187 : vector<1x128xf32>
    %189 = math.exp %188 : vector<1x128xf32>
    %cst_34 = arith.constant 1.000000e+00 : f32
    %190 = vector.broadcast %cst_34 : f32 to vector<1x128xf32>
    %191 = arith.addf %190, %189 : vector<1x128xf32>
    %192 = arith.divf %190, %191 : vector<1x128xf32>
    %193 = vector.extract_strided_slice %186 {offsets = [0, 128], sizes = [1, 128], strides = [1, 1]} : vector<1x512xf32> to vector<1x128xf32>
    %194 = arith.negf %193 : vector<1x128xf32>
    %195 = math.exp %194 : vector<1x128xf32>
    %cst_35 = arith.constant 1.000000e+00 : f32
    %196 = vector.broadcast %cst_35 : f32 to vector<1x128xf32>
    %197 = arith.addf %196, %195 : vector<1x128xf32>
    %198 = arith.divf %196, %197 : vector<1x128xf32>
    %199 = vector.extract_strided_slice %186 {offsets = [0, 256], sizes = [1, 128], strides = [1, 1]} : vector<1x512xf32> to vector<1x128xf32>
    %200 = math.tanh %199 : vector<1x128xf32>
    %201 = vector.extract_strided_slice %186 {offsets = [0, 384], sizes = [1, 128], strides = [1, 1]} : vector<1x512xf32> to vector<1x128xf32>
    %202 = arith.negf %201 : vector<1x128xf32>
    %203 = math.exp %202 : vector<1x128xf32>
    %cst_36 = arith.constant 1.000000e+00 : f32
    %204 = vector.broadcast %cst_36 : f32 to vector<1x128xf32>
    %205 = arith.addf %204, %203 : vector<1x128xf32>
    %206 = arith.divf %204, %205 : vector<1x128xf32>
    %207 = arith.mulf %198, %180 : vector<1x128xf32>
    %208 = arith.mulf %192, %200 : vector<1x128xf32>
    %209 = arith.addf %207, %208 : vector<1x128xf32>
    %210 = math.tanh %209 : vector<1x128xf32>
    %211 = arith.mulf %206, %210 : vector<1x128xf32>
    %212 = vector.extract_strided_slice %5 {offsets = [7, 0], sizes = [1, 512], strides = [1, 1]} : vector<8x512xf32> to vector<1x512xf32>
    %213 = arith.truncf %211 : vector<1x128xf32> to vector<1x128xbf16>
    %cst_37 = arith.constant dense<0.000000e+00> : vector<1x512xf32>
    %214 = tpu.matmul %213, %6, %cst_37 {dimension_numbers = #tpu.dot_dimension_numbers<[1], [0], [0], [1], [0, 0, 1, 1], [], []>} : vector<1x128xbf16>, vector<128x512xbf16>, vector<1x512xf32> -> vector<1x512xf32>
    %215 = arith.addf %212, %214 : vector<1x512xf32>
    %216 = vector.extract_strided_slice %215 {offsets = [0, 0], sizes = [1, 128], strides = [1, 1]} : vector<1x512xf32> to vector<1x128xf32>
    %217 = arith.negf %216 : vector<1x128xf32>
    %218 = math.exp %217 : vector<1x128xf32>
    %cst_38 = arith.constant 1.000000e+00 : f32
    %219 = vector.broadcast %cst_38 : f32 to vector<1x128xf32>
    %220 = arith.addf %219, %218 : vector<1x128xf32>
    %221 = arith.divf %219, %220 : vector<1x128xf32>
    %222 = vector.extract_strided_slice %215 {offsets = [0, 128], sizes = [1, 128], strides = [1, 1]} : vector<1x512xf32> to vector<1x128xf32>
    %223 = arith.negf %222 : vector<1x128xf32>
    %224 = math.exp %223 : vector<1x128xf32>
    %cst_39 = arith.constant 1.000000e+00 : f32
    %225 = vector.broadcast %cst_39 : f32 to vector<1x128xf32>
    %226 = arith.addf %225, %224 : vector<1x128xf32>
    %227 = arith.divf %225, %226 : vector<1x128xf32>
    %228 = vector.extract_strided_slice %215 {offsets = [0, 256], sizes = [1, 128], strides = [1, 1]} : vector<1x512xf32> to vector<1x128xf32>
    %229 = math.tanh %228 : vector<1x128xf32>
    %230 = vector.extract_strided_slice %215 {offsets = [0, 384], sizes = [1, 128], strides = [1, 1]} : vector<1x512xf32> to vector<1x128xf32>
    %231 = arith.negf %230 : vector<1x128xf32>
    %232 = math.exp %231 : vector<1x128xf32>
    %cst_40 = arith.constant 1.000000e+00 : f32
    %233 = vector.broadcast %cst_40 : f32 to vector<1x128xf32>
    %234 = arith.addf %233, %232 : vector<1x128xf32>
    %235 = arith.divf %233, %234 : vector<1x128xf32>
    %236 = arith.mulf %227, %209 : vector<1x128xf32>
    %237 = arith.mulf %221, %229 : vector<1x128xf32>
    %238 = arith.addf %236, %237 : vector<1x128xf32>
    %239 = math.tanh %238 : vector<1x128xf32>
    %240 = arith.mulf %235, %239 : vector<1x128xf32>
    %241 = arith.truncf %240 : vector<1x128xf32> to vector<1x128xbf16>
    %c0_41 = arith.constant 0 : index
    %c0_42 = arith.constant 0 : index
    %242 = vector.load %arg4[%c0_41, %c0_42] : memref<128x1024xbf16, #tpu.memory_space<vmem>>, vector<128x1024xbf16>
    %cst_43 = arith.constant dense<0.000000e+00> : vector<1x1024xf32>
    %243 = tpu.matmul %241, %242, %cst_43 {dimension_numbers = #tpu.dot_dimension_numbers<[1], [0], [0], [1], [0, 0, 1, 1], [], []>} : vector<1x128xbf16>, vector<128x1024xbf16>, vector<1x1024xf32> -> vector<1x1024xf32>
    %c0_44 = arith.constant 0 : index
    %c0_45 = arith.constant 0 : index
    %244 = vector.load %arg5[%c0_44, %c0_45] : memref<1x1024xf32, #tpu.memory_space<vmem>>, vector<1x1024xf32>
    %245 = arith.addf %243, %244 : vector<1x1024xf32>
    %c0_46 = arith.constant 0 : index
    %c0_47 = arith.constant 0 : index
    %246 = vector.load %arg6[%c0_46, %c0_47] : memref<1x1024xf32, #tpu.memory_space<vmem>>, vector<1x1024xf32>
    tpu.vector_store %arg6[%c0_46, %c0_47], %245 {strides = array<i32>} : memref<1x1024xf32, #tpu.memory_space<vmem>>, vector<1x1024xf32>,
    return
  }
}

</mosaic_0001>

<llo_original>
// kernel: tpu_custom_call.1
$region0: #{tpu_custom_call.1}
  #allocation0 [shape = 'u32[]', space=smem, size = 0x4, offset = 0x4, fixed_abs, tag = 'smem constant byte address 0x4 - core index']
  #allocation1 [shape = 'u32[144,128]{1,0:T(1,128)}', space=vmem, size = 0x12000, scoped, tag = 'internal scratch']
  %s0 = inlined_call_operand.hbm [shape: bf16[8,1024], index: 0, kind: input, shape index: {}]
  %s1 = inlined_call_operand.hbm [shape: bf16[1024,512], index: 1, kind: input, shape index: {}]
  %s2 = inlined_call_operand.hbm [shape: bf16[128,512], index: 2, kind: input, shape index: {}]
  %s3 = inlined_call_operand.hbm [shape: f32[1,512], index: 3, kind: input, shape index: {}]
  %s4 = inlined_call_operand.hbm [shape: bf16[128,1024], index: 4, kind: input, shape index: {}]
  %s5 = inlined_call_operand.vmem [shape: f32[1,1024], index: 5, kind: input, shape index: {}]
  %s6 = inlined_call_operand.hbm [shape: f32[1,1024], index: 6, kind: output, shape index: {}]
  %s7 = sld [smem:[#allocation0]]
  $region54: #{tpu_custom_call.1} parent=0
    _
  %s9 = ssub.s32 1, %s7
  %s10 = scalar_select 0, %s9, %s7
  $region1: #{tpu_custom_call.1} parent=0
    #allocation2 [shape = 'u8[16384]{0}', space=vmem, size = 0x4000, scoped, tag = 'input window, operand 0, single buffered']
    #allocation3 [shape = 's32[1]{0}', space=sflag, size = 0x4, scoped, tag = 'scoped memory for tpu_custom_call.1']
    #allocation4 [shape = 's32[1]{0}', space=sflag, size = 0x4, scoped, tag = 'scoped memory for tpu_custom_call.1']
    #allocation5 [shape = 'u8[1048576]{0}', space=vmem, size = 0x100000, scoped, tag = 'input window, operand 1, single buffered']
    #allocation6 [shape = 's32[1]{0}', space=sflag, size = 0x4, scoped, tag = 'scoped memory for tpu_custom_call.1']
    #allocation7 [shape = 'u8[131072]{0}', space=vmem, size = 0x20000, scoped, tag = 'input window, operand 2, single buffered']
    #allocation8 [shape = 'u8[2048]{0}', space=vmem, size = 0x800, scoped, tag = 'input window, operand 3, single buffered']
    #allocation9 [shape = 's32[1]{0}', space=sflag, size = 0x4, scoped, tag = 'scoped memory for tpu_custom_call.1']
    #allocation10 [shape = 'u8[262144]{0}', space=vmem, size = 0x40000, scoped, tag = 'input window, operand 4, single buffered']
    #allocation11 [shape = 'u8[4096]{0}', space=vmem, size = 0x1000, scoped, tag = 'output window, operand 0, single buffered']
    %11 = vsyncpa [#allocation3], 0
    %12 = vsyncpa [#allocation6], 0
    %13 = vsyncpa [#allocation9], 0
    %14 = vsyncpa [#allocation4], 0
    // Predicated region
    $region2: #{tpu_custom_call.1} parent=1 // pred_check
      _
    $region3: #{tpu_custom_call.1} parent=1 // pred_check_branch
      %16 = sbr.rel (0) target = $region5
    $region4: #{tpu_custom_call.1} parent=1 // pred_region
      %s18 = ssub.s32 512, 512
      %19 = vsyncadd [#allocation3], %s18
      %s21 = sshll.u32 [#allocation2], 4
      %s22 = int_to_ptr.vmem [resolvable:$true] %s21
      %24 = dma.hbm_to_vmem [thread:$0]  %s0, 512, %s22, [#allocation3]
    $region5: #{tpu_custom_call.1} parent=1 // pred_fallthru
      _
    // Predicated region
    $region6: #{tpu_custom_call.1} parent=1 // pred_check
      _
    $region7: #{tpu_custom_call.1} parent=1 // pred_check_branch
      %26 = sbr.rel (0) target = $region9
    $region8: #{tpu_custom_call.1} parent=1 // pred_region
      %s28 = ssub.s32 32768, 32768
      %29 = vsyncadd [#allocation6], %s28
      %s30 = sshll.u32 [#allocation5], 4
      %s31 = int_to_ptr.vmem [resolvable:$true] %s30
      %36 = dma.hbm_to_vmem [thread:$0]  %s1, 32768, %s31, [#allocation6], 256, 256, 16
    $region9: #{tpu_custom_call.1} parent=1 // pred_fallthru
      _
    // Predicated region
    $region10: #{tpu_custom_call.1} parent=1 // pred_check
      _
    $region11: #{tpu_custom_call.1} parent=1 // pred_check_branch
      %38 = sbr.rel (0) target = $region13
    $region12: #{tpu_custom_call.1} parent=1 // pred_region
      %s40 = ssub.s32 4096, 4096
      %41 = vsyncadd [#allocation6], %s40
      %s42 = sshll.u32 [#allocation7], 4
      %s43 = int_to_ptr.vmem [resolvable:$true] %s42
      %48 = dma.hbm_to_vmem [thread:$0]  %s2, 4096, %s43, [#allocation6], 256, 256, 16
    $region13: #{tpu_custom_call.1} parent=1 // pred_fallthru
      _
    // Predicated region
    $region14: #{tpu_custom_call.1} parent=1 // pred_check
      _
    $region15: #{tpu_custom_call.1} parent=1 // pred_check_branch
      %50 = sbr.rel (0) target = $region17
    $region16: #{tpu_custom_call.1} parent=1 // pred_region
      %s52 = ssub.s32 64, 64
      %53 = vsyncadd [#allocation9], %s52
      %s55 = sshll.u32 [#allocation8], 4
      %s56 = int_to_ptr.vmem [resolvable:$true] %s55
      %58 = dma.hbm_to_vmem [thread:$0]  %s3, 64, %s56, [#allocation9]
    $region17: #{tpu_custom_call.1} parent=1 // pred_fallthru
      _
    // Predicated region
    $region18: #{tpu_custom_call.1} parent=1 // pred_check
      _
    $region19: #{tpu_custom_call.1} parent=1 // pred_check_branch
      %60 = sbr.rel (0) target = $region21
    $region20: #{tpu_custom_call.1} parent=1 // pred_region
      %s62 = ssub.s32 8192, 8192
      %63 = vsyncadd [#allocation9], %s62
      %s64 = sshll.u32 [#allocation10], 4
      %s65 = int_to_ptr.vmem [resolvable:$true] %s64
      %70 = dma.hbm_to_vmem [thread:$0]  %s4, 8192, %s65, [#allocation9], 512, 512, 32
    $region21: #{tpu_custom_call.1} parent=1 // pred_fallthru
      _
    // Predicated region
    $region22: #{tpu_custom_call.1} parent=1 // pred_check
      _
    $region23: #{tpu_custom_call.1} parent=1 // pred_check_branch
      %72 = sbr.rel (0) target = $region25
    $region24: #{tpu_custom_call.1} parent=1 // pred_region
      _
    $region25: #{tpu_custom_call.1} parent=1 // pred_fallthru
      _
    // Predicated region
    $region26: #{tpu_custom_call.1} parent=1 // pred_check
      _
    $region27: #{tpu_custom_call.1} parent=1 // pred_check_branch
      %74 = sbr.rel (0) target = $region29
    $region28: #{tpu_custom_call.1} parent=1 // pred_region
      %75 = dma.done [#allocation3], 512
    $region29: #{tpu_custom_call.1} parent=1 // pred_fallthru
      _
    // Predicated region
    $region30: #{tpu_custom_call.1} parent=1 // pred_check
      _
    $region31: #{tpu_custom_call.1} parent=1 // pred_check_branch
      %77 = sbr.rel (0) target = $region33
    $region32: #{tpu_custom_call.1} parent=1 // pred_region
      %78 = dma.done [#allocation6], 32768
    $region33: #{tpu_custom_call.1} parent=1 // pred_fallthru
      _
    // Predicated region
    $region34: #{tpu_custom_call.1} parent=1 // pred_check
      _
    $region35: #{tpu_custom_call.1} parent=1 // pred_check_branch
      %80 = sbr.rel (0) target = $region37
    $region36: #{tpu_custom_call.1} parent=1 // pred_region
      %81 = dma.done [#allocation6], 4096
    $region37: #{tpu_custom_call.1} parent=1 // pred_fallthru
      _
    // Predicated region
    $region38: #{tpu_custom_call.1} parent=1 // pred_check
      _
    $region39: #{tpu_custom_call.1} parent=1 // pred_check_branch
      %83 = sbr.rel (0) target = $region41
    $region40: #{tpu_custom_call.1} parent=1 // pred_region
      %84 = dma.done [#allocation9], 64
    $region41: #{tpu_custom_call.1} parent=1 // pred_fallthru
      _
    // Predicated region
    $region42: #{tpu_custom_call.1} parent=1 // pred_check
      _
    $region43: #{tpu_custom_call.1} parent=1 // pred_check_branch
      %86 = sbr.rel (0) target = $region45
    $region44: #{tpu_custom_call.1} parent=1 // pred_region
      %87 = dma.done [#allocation9], 8192
    $region45: #{tpu_custom_call.1} parent=1 // pred_fallthru
      _
    %v89 = vld [vmem:[#allocation2] sm:$0xff]
    %v90 = vld [vmem:[#allocation2 + $0x8] sm:$0xff]
    %v91 = vld [vmem:[#allocation2 + $0x10] sm:$0xff]
    %v92 = vld [vmem:[#allocation2 + $0x18] sm:$0xff]
    %v93 = vld [vmem:[#allocation5] sm:$0xff]
    %v94 = vld [vmem:[#allocation5 + $0x8] sm:$0xff]
    %v95 = vld [vmem:[#allocation5 + $0x10] sm:$0xff]
    %v96 = vld [vmem:[#allocation5 + $0x18] sm:$0xff]
    %v97 = vld [vmem:[#allocation5 + $0x20] sm:$0xff]
    %v98 = vld [vmem:[#allocation5 + $0x28] sm:$0xff]
    %v99 = vld [vmem:[#allocation5 + $0x30] sm:$0xff]
    %v100 = vld [vmem:[#allocation5 + $0x38] sm:$0xff]
    %v101 = vld [vmem:[#allocation5 + $0x40] sm:$0xff]
    %v102 = vld [vmem:[#allocation5 + $0x48] sm:$0xff]
    %v103 = vld [vmem:[#allocation5 + $0x50] sm:$0xff]
    %v104 = vld [vmem:[#allocation5 + $0x58] sm:$0xff]
    %v105 = vld [vmem:[#allocation5 + $0x60] sm:$0xff]
    %v106 = vld [vmem:[#allocation5 + $0x68] sm:$0xff]
    %v107 = vld [vmem:[#allocation5 + $0x70] sm:$0xff]
    %v108 = vld [vmem:[#allocation5 + $0x78] sm:$0xff]
    %v109 = vld [vmem:[#allocation5 + $0x80] sm:$0xff]
    %v110 = vld [vmem:[#allocation5 + $0x88] sm:$0xff]
    %v111 = vld [vmem:[#allocation5 + $0x90] sm:$0xff]
    %v112 = vld [vmem:[#allocation5 + $0x98] sm:$0xff]
    %v113 = vld [vmem:[#allocation5 + $0xa0] sm:$0xff]
    %v114 = vld [vmem:[#allocation5 + $0xa8] sm:$0xff]
    %v115 = vld [vmem:[#allocation5 + $0xb0] sm:$0xff]
    %v116 = vld [vmem:[#allocation5 + $0xb8] sm:$0xff]
    %v117 = vld [vmem:[#allocation5 + $0xc0] sm:$0xff]
    %v118 = vld [vmem:[#allocation5 + $0xc8] sm:$0xff]
    %v119 = vld [vmem:[#allocation5 + $0xd0] sm:$0xff]
    %v120 = vld [vmem:[#allocation5 + $0xd8] sm:$0xff]
    %v121 = vld [vmem:[#allocation5 + $0xe0] sm:$0xff]
    %v122 = vld [vmem:[#allocation5 + $0xe8] sm:$0xff]
    %v123 = vld [vmem:[#allocation5 + $0xf0] sm:$0xff]
    %v124 = vld [vmem:[#allocation5 + $0xf8] sm:$0xff]
    %v125 = vld [vmem:[#allocation5 + $0x100] sm:$0xff]
    %v126 = vld [vmem:[#allocation5 + $0x108] sm:$0xff]
    %v127 = vld [vmem:[#allocation5 + $0x110] sm:$0xff]
    %v128 = vld [vmem:[#allocation5 + $0x118] sm:$0xff]
    %v129 = vld [vmem:[#allocation5 + $0x120] sm:$0xff]
    %v130 = vld [vmem:[#allocation5 + $0x128] sm:$0xff]
    %v131 = vld [vmem:[#allocation5 + $0x130] sm:$0xff]
    %v132 = vld [vmem:[#allocation5 + $0x138] sm:$0xff]
    %v133 = vld [vmem:[#allocation5 + $0x140] sm:$0xff]
    %v134 = vld [vmem:[#allocation5 + $0x148] sm:$0xff]
    %v135 = vld [vmem:[#allocation5 + $0x150] sm:$0xff]
    %v136 = vld [vmem:[#allocation5 + $0x158] sm:$0xff]
    %v137 = vld [vmem:[#allocation5 + $0x160] sm:$0xff]
    %v138 = vld [vmem:[#allocation5 + $0x168] sm:$0xff]
    %v139 = vld [vmem:[#allocation5 + $0x170] sm:$0xff]
    %v140 = vld [vmem:[#allocation5 + $0x178] sm:$0xff]
    %v141 = vld [vmem:[#allocation5 + $0x180] sm:$0xff]
    %v142 = vld [vmem:[#allocation5 + $0x188] sm:$0xff]
    %v143 = vld [vmem:[#allocation5 + $0x190] sm:$0xff]
    %v144 = vld [vmem:[#allocation5 + $0x198] sm:$0xff]
    %v145 = vld [vmem:[#allocation5 + $0x1a0] sm:$0xff]
    %v146 = vld [vmem:[#allocation5 + $0x1a8] sm:$0xff]
    %v147 = vld [vmem:[#allocation5 + $0x1b0] sm:$0xff]
    %v148 = vld [vmem:[#allocation5 + $0x1b8] sm:$0xff]
    %v149 = vld [vmem:[#allocation5 + $0x1c0] sm:$0xff]
    %v150 = vld [vmem:[#allocation5 + $0x1c8] sm:$0xff]
    %v151 = vld [vmem:[#allocation5 + $0x1d0] sm:$0xff]
    %v152 = vld [vmem:[#allocation5 + $0x1d8] sm:$0xff]
    %v153 = vld [vmem:[#allocation5 + $0x1e0] sm:$0xff]
    %v154 = vld [vmem:[#allocation5 + $0x1e8] sm:$0xff]
    %v155 = vld [vmem:[#allocation5 + $0x1f0] sm:$0xff]
    %v156 = vld [vmem:[#allocation5 + $0x1f8] sm:$0xff]
    %v157 = vld [vmem:[#allocation5 + $0x200] sm:$0xff]
    %v158 = vld [vmem:[#allocation5 + $0x208] sm:$0xff]
    %v159 = vld [vmem:[#allocation5 + $0x210] sm:$0xff]
    %v160 = vld [vmem:[#allocation5 + $0x218] sm:$0xff]
    %v161 = vld [vmem:[#allocation5 + $0x220] sm:$0xff]
    %v162 = vld [vmem:[#allocation5 + $0x228] sm:$0xff]
    %v163 = vld [vmem:[#allocation5 + $0x230] sm:$0xff]
    %v164 = vld [vmem:[#allocation5 + $0x238] sm:$0xff]
    %v165 = vld [vmem:[#allocation5 + $0x240] sm:$0xff]
    %v166 = vld [vmem:[#allocation5 + $0x248] sm:$0xff]
    %v167 = vld [vmem:[#allocation5 + $0x250] sm:$0xff]
    %v168 = vld [vmem:[#allocation5 + $0x258] sm:$0xff]
    %v169 = vld [vmem:[#allocation5 + $0x260] sm:$0xff]
    %v170 = vld [vmem:[#allocation5 + $0x268] sm:$0xff]
    %v171 = vld [vmem:[#allocation5 + $0x270] sm:$0xff]
    %v172 = vld [vmem:[#allocation5 + $0x278] sm:$0xff]
    %v173 = vld [vmem:[#allocation5 + $0x280] sm:$0xff]
    %v174 = vld [vmem:[#allocation5 + $0x288] sm:$0xff]
    %v175 = vld [vmem:[#allocation5 + $0x290] sm:$0xff]
    %v176 = vld [vmem:[#allocation5 + $0x298] sm:$0xff]
    %v177 = vld [vmem:[#allocation5 + $0x2a0] sm:$0xff]
    %v178 = vld [vmem:[#allocation5 + $0x2a8] sm:$0xff]
    %v179 = vld [vmem:[#allocation5 + $0x2b0] sm:$0xff]
    %v180 = vld [vmem:[#allocation5 + $0x2b8] sm:$0xff]
    %v181 = vld [vmem:[#allocation5 + $0x2c0] sm:$0xff]
    %v182 = vld [vmem:[#allocation5 + $0x2c8] sm:$0xff]
    %v183 = vld [vmem:[#allocation5 + $0x2d0] sm:$0xff]
    %v184 = vld [vmem:[#allocation5 + $0x2d8] sm:$0xff]
    %v185 = vld [vmem:[#allocation5 + $0x2e0] sm:$0xff]
    %v186 = vld [vmem:[#allocation5 + $0x2e8] sm:$0xff]
    %v187 = vld [vmem:[#allocation5 + $0x2f0] sm:$0xff]
    %v188 = vld [vmem:[#allocation5 + $0x2f8] sm:$0xff]
    %v189 = vld [vmem:[#allocation5 + $0x300] sm:$0xff]
    %v190 = vld [vmem:[#allocation5 + $0x308] sm:$0xff]
    %v191 = vld [vmem:[#allocation5 + $0x310] sm:$0xff]
    %v192 = vld [vmem:[#allocation5 + $0x318] sm:$0xff]
    %v193 = vld [vmem:[#allocation5 + $0x320] sm:$0xff]
    %v194 = vld [vmem:[#allocation5 + $0x328] sm:$0xff]
    %v195 = vld [vmem:[#allocation5 + $0x330] sm:$0xff]
    %v196 = vld [vmem:[#allocation5 + $0x338] sm:$0xff]
    %v197 = vld [vmem:[#allocation5 + $0x340] sm:$0xff]
    %v198 = vld [vmem:[#allocation5 + $0x348] sm:$0xff]
    %v199 = vld [vmem:[#allocation5 + $0x350] sm:$0xff]
    %v200 = vld [vmem:[#allocation5 + $0x358] sm:$0xff]
    %v201 = vld [vmem:[#allocation5 + $0x360] sm:$0xff]
    %v202 = vld [vmem:[#allocation5 + $0x368] sm:$0xff]
    %v203 = vld [vmem:[#allocation5 + $0x370] sm:$0xff]
    %v204 = vld [vmem:[#allocation5 + $0x378] sm:$0xff]
    %v205 = vld [vmem:[#allocation5 + $0x380] sm:$0xff]
    %v206 = vld [vmem:[#allocation5 + $0x388] sm:$0xff]
    %v207 = vld [vmem:[#allocation5 + $0x390] sm:$0xff]
    %v208 = vld [vmem:[#allocation5 + $0x398] sm:$0xff]
    %v209 = vld [vmem:[#allocation5 + $0x3a0] sm:$0xff]
    %v210 = vld [vmem:[#allocation5 + $0x3a8] sm:$0xff]
    %v211 = vld [vmem:[#allocation5 + $0x3b0] sm:$0xff]
    %v212 = vld [vmem:[#allocation5 + $0x3b8] sm:$0xff]
    %v213 = vld [vmem:[#allocation5 + $0x3c0] sm:$0xff]
    %v214 = vld [vmem:[#allocation5 + $0x3c8] sm:$0xff]
    %v215 = vld [vmem:[#allocation5 + $0x3d0] sm:$0xff]
    %v216 = vld [vmem:[#allocation5 + $0x3d8] sm:$0xff]
    %v217 = vld [vmem:[#allocation5 + $0x3e0] sm:$0xff]
    %v218 = vld [vmem:[#allocation5 + $0x3e8] sm:$0xff]
    %v219 = vld [vmem:[#allocation5 + $0x3f0] sm:$0xff]
    %v220 = vld [vmem:[#allocation5 + $0x3f8] sm:$0xff]
    %v221 = vld [vmem:[#allocation5 + $0x400] sm:$0xff]
    %v222 = vld [vmem:[#allocation5 + $0x408] sm:$0xff]
    %v223 = vld [vmem:[#allocation5 + $0x410] sm:$0xff]
    %v224 = vld [vmem:[#allocation5 + $0x418] sm:$0xff]
    %v225 = vld [vmem:[#allocation5 + $0x420] sm:$0xff]
    %v226 = vld [vmem:[#allocation5 + $0x428] sm:$0xff]
    %v227 = vld [vmem:[#allocation5 + $0x430] sm:$0xff]
    %v228 = vld [vmem:[#allocation5 + $0x438] sm:$0xff]
    %v229 = vld [vmem:[#allocation5 + $0x440] sm:$0xff]
    %v230 = vld [vmem:[#allocation5 + $0x448] sm:$0xff]
    %v231 = vld [vmem:[#allocation5 + $0x450] sm:$0xff]
    %v232 = vld [vmem:[#allocation5 + $0x458] sm:$0xff]
    %v233 = vld [vmem:[#allocation5 + $0x460] sm:$0xff]
    %v234 = vld [vmem:[#allocation5 + $0x468] sm:$0xff]
    %v235 = vld [vmem:[#allocation5 + $0x470] sm:$0xff]
    %v236 = vld [vmem:[#allocation5 + $0x478] sm:$0xff]
    %v237 = vld [vmem:[#allocation5 + $0x480] sm:$0xff]
    %v238 = vld [vmem:[#allocation5 + $0x488] sm:$0xff]
    %v239 = vld [vmem:[#allocation5 + $0x490] sm:$0xff]
    %v240 = vld [vmem:[#allocation5 + $0x498] sm:$0xff]
    %v241 = vld [vmem:[#allocation5 + $0x4a0] sm:$0xff]
    %v242 = vld [vmem:[#allocation5 + $0x4a8] sm:$0xff]
    %v243 = vld [vmem:[#allocation5 + $0x4b0] sm:$0xff]
    %v244 = vld [vmem:[#allocation5 + $0x4b8] sm:$0xff]
    %v245 = vld [vmem:[#allocation5 + $0x4c0] sm:$0xff]
    %v246 = vld [vmem:[#allocation5 + $0x4c8] sm:$0xff]
    %v247 = vld [vmem:[#allocation5 + $0x4d0] sm:$0xff]
    %v248 = vld [vmem:[#allocation5 + $0x4d8] sm:$0xff]
    %v249 = vld [vmem:[#allocation5 + $0x4e0] sm:$0xff]
    %v250 = vld [vmem:[#allocation5 + $0x4e8] sm:$0xff]
    %v251 = vld [vmem:[#allocation5 + $0x4f0] sm:$0xff]
    %v252 = vld [vmem:[#allocation5 + $0x4f8] sm:$0xff]
    %v253 = vld [vmem:[#allocation5 + $0x500] sm:$0xff]
    %v254 = vld [vmem:[#allocation5 + $0x508] sm:$0xff]
    %v255 = vld [vmem:[#allocation5 + $0x510] sm:$0xff]
    %v256 = vld [vmem:[#allocation5 + $0x518] sm:$0xff]
    %v257 = vld [vmem:[#allocation5 + $0x520] sm:$0xff]
    %v258 = vld [vmem:[#allocation5 + $0x528] sm:$0xff]
    %v259 = vld [vmem:[#allocation5 + $0x530] sm:$0xff]
    %v260 = vld [vmem:[#allocation5 + $0x538] sm:$0xff]
    %v261 = vld [vmem:[#allocation5 + $0x540] sm:$0xff]
    %v262 = vld [vmem:[#allocation5 + $0x548] sm:$0xff]
    %v263 = vld [vmem:[#allocation5 + $0x550] sm:$0xff]
    %v264 = vld [vmem:[#allocation5 + $0x558] sm:$0xff]
    %v265 = vld [vmem:[#allocation5 + $0x560] sm:$0xff]
    %v266 = vld [vmem:[#allocation5 + $0x568] sm:$0xff]
    %v267 = vld [vmem:[#allocation5 + $0x570] sm:$0xff]
    %v268 = vld [vmem:[#allocation5 + $0x578] sm:$0xff]
    %v269 = vld [vmem:[#allocation5 + $0x580] sm:$0xff]
    %v270 = vld [vmem:[#allocation5 + $0x588] sm:$0xff]
    %v271 = vld [vmem:[#allocation5 + $0x590] sm:$0xff]
    %v272 = vld [vmem:[#allocation5 + $0x598] sm:$0xff]
    %v273 = vld [vmem:[#allocation5 + $0x5a0] sm:$0xff]
    %v274 = vld [vmem:[#allocation5 + $0x5a8] sm:$0xff]
    %v275 = vld [vmem:[#allocation5 + $0x5b0] sm:$0xff]
    %v276 = vld [vmem:[#allocation5 + $0x5b8] sm:$0xff]
    %v277 = vld [vmem:[#allocation5 + $0x5c0] sm:$0xff]
    %v278 = vld [vmem:[#allocation5 + $0x5c8] sm:$0xff]
    %v279 = vld [vmem:[#allocation5 + $0x5d0] sm:$0xff]
    %v280 = vld [vmem:[#allocation5 + $0x5d8] sm:$0xff]
    %v281 = vld [vmem:[#allocation5 + $0x5e0] sm:$0xff]
    %v282 = vld [vmem:[#allocation5 + $0x5e8] sm:$0xff]
    %v283 = vld [vmem:[#allocation5 + $0x5f0] sm:$0xff]
    %v284 = vld [vmem:[#allocation5 + $0x5f8] sm:$0xff]
    %v285 = vld [vmem:[#allocation5 + $0x600] sm:$0xff]
    %v286 = vld [vmem:[#allocation5 + $0x608] sm:$0xff]
    %v287 = vld [vmem:[#allocation5 + $0x610] sm:$0xff]
    %v288 = vld [vmem:[#allocation5 + $0x618] sm:$0xff]
    %v289 = vld [vmem:[#allocation5 + $0x620] sm:$0xff]
    %v290 = vld [vmem:[#allocation5 + $0x628] sm:$0xff]
    %v291 = vld [vmem:[#allocation5 + $0x630] sm:$0xff]
    %v292 = vld [vmem:[#allocation5 + $0x638] sm:$0xff]
    %v293 = vld [vmem:[#allocation5 + $0x640] sm:$0xff]
    %v294 = vld [vmem:[#allocation5 + $0x648] sm:$0xff]
    %v295 = vld [vmem:[#allocation5 + $0x650] sm:$0xff]
    %v296 = vld [vmem:[#allocation5 + $0x658] sm:$0xff]
    %v297 = vld [vmem:[#allocation5 + $0x660] sm:$0xff]
    %v298 = vld [vmem:[#allocation5 + $0x668] sm:$0xff]
    %v299 = vld [vmem:[#allocation5 + $0x670] sm:$0xff]
    %v300 = vld [vmem:[#allocation5 + $0x678] sm:$0xff]
    %v301 = vld [vmem:[#allocation5 + $0x680] sm:$0xff]
    %v302 = vld [vmem:[#allocation5 + $0x688] sm:$0xff]
    %v303 = vld [vmem:[#allocation5 + $0x690] sm:$0xff]
    %v304 = vld [vmem:[#allocation5 + $0x698] sm:$0xff]
    %v305 = vld [vmem:[#allocation5 + $0x6a0] sm:$0xff]
    %v306 = vld [vmem:[#allocation5 + $0x6a8] sm:$0xff]
    %v307 = vld [vmem:[#allocation5 + $0x6b0] sm:$0xff]
    %v308 = vld [vmem:[#allocation5 + $0x6b8] sm:$0xff]
    %v309 = vld [vmem:[#allocation5 + $0x6c0] sm:$0xff]
    %v310 = vld [vmem:[#allocation5 + $0x6c8] sm:$0xff]
    %v311 = vld [vmem:[#allocation5 + $0x6d0] sm:$0xff]
    %v312 = vld [vmem:[#allocation5 + $0x6d8] sm:$0xff]
    %v313 = vld [vmem:[#allocation5 + $0x6e0] sm:$0xff]
    %v314 = vld [vmem:[#allocation5 + $0x6e8] sm:$0xff]
    %v315 = vld [vmem:[#allocation5 + $0x6f0] sm:$0xff]
    %v316 = vld [vmem:[#allocation5 + $0x6f8] sm:$0xff]
    %v317 = vld [vmem:[#allocation5 + $0x700] sm:$0xff]
    %v318 = vld [vmem:[#allocation5 + $0x708] sm:$0xff]
    %v319 = vld [vmem:[#allocation5 + $0x710] sm:$0xff]
    %v320 = vld [vmem:[#allocation5 + $0x718] sm:$0xff]
    %v321 = vld [vmem:[#allocation5 + $0x720] sm:$0xff]
    %v322 = vld [vmem:[#allocation5 + $0x728] sm:$0xff]
    %v323 = vld [vmem:[#allocation5 + $0x730] sm:$0xff]
    %v324 = vld [vmem:[#allocation5 + $0x738] sm:$0xff]
    %v325 = vld [vmem:[#allocation5 + $0x740] sm:$0xff]
    %v326 = vld [vmem:[#allocation5 + $0x748] sm:$0xff]
    %v327 = vld [vmem:[#allocation5 + $0x750] sm:$0xff]
    %v328 = vld [vmem:[#allocation5 + $0x758] sm:$0xff]
    %v329 = vld [vmem:[#allocation5 + $0x760] sm:$0xff]
    %v330 = vld [vmem:[#allocation5 + $0x768] sm:$0xff]
    %v331 = vld [vmem:[#allocation5 + $0x770] sm:$0xff]
    %v332 = vld [vmem:[#allocation5 + $0x778] sm:$0xff]
    %v333 = vld [vmem:[#allocation5 + $0x780] sm:$0xff]
    %v334 = vld [vmem:[#allocation5 + $0x788] sm:$0xff]
    %v335 = vld [vmem:[#allocation5 + $0x790] sm:$0xff]
    %v336 = vld [vmem:[#allocation5 + $0x798] sm:$0xff]
    %v337 = vld [vmem:[#allocation5 + $0x7a0] sm:$0xff]
    %v338 = vld [vmem:[#allocation5 + $0x7a8] sm:$0xff]
    %v339 = vld [vmem:[#allocation5 + $0x7b0] sm:$0xff]
    %v340 = vld [vmem:[#allocation5 + $0x7b8] sm:$0xff]
    %v341 = vld [vmem:[#allocation5 + $0x7c0] sm:$0xff]
    %v342 = vld [vmem:[#allocation5 + $0x7c8] sm:$0xff]
    %v343 = vld [vmem:[#allocation5 + $0x7d0] sm:$0xff]
    %v344 = vld [vmem:[#allocation5 + $0x7d8] sm:$0xff]
    %v345 = vld [vmem:[#allocation5 + $0x7e0] sm:$0xff]
    %v346 = vld [vmem:[#allocation5 + $0x7e8] sm:$0xff]
    %v347 = vld [vmem:[#allocation5 + $0x7f0] sm:$0xff]
    %v348 = vld [vmem:[#allocation5 + $0x7f8] sm:$0xff]
    %v349 = vld [vmem:[#allocation8] sm:$0xf]
    %v351 = vlaneseq
    %v352 = vshrl.u32 %v351, 7
    %v353 = vsub.s32 0, %v352
    %v354 = vrot.slane %v349, %v353
    %v355 = vlaneseq
    %v356 = vshrl.u32 %v355, 7
    %v357 = vsub.s32 1, %v356
    %v358 = vrot.slane %v349, %v357
    %v359 = vlaneseq
    %v360 = vshrl.u32 %v359, 7
    %v361 = vsub.s32 2, %v360
    %v362 = vrot.slane %v349, %v361
    %v363 = vlaneseq
    %v364 = vshrl.u32 %v363, 7
    %v365 = vsub.s32 3, %v364
    %v366 = vrot.slane %v349, %v365
    %v375 = vunpack.c.l.b16 %v89
    %v376 = vunpack.c.h.b16 %v89
    %v377 = vunpack.c.l.b16 %v90
    %v378 = vunpack.c.h.b16 %v90
    %v379 = vunpack.c.l.b16 %v91
    %v380 = vunpack.c.h.b16 %v91
    %v381 = vunpack.c.l.b16 %v92
    %v382 = vunpack.c.h.b16 %v92
    %v383 = vpack.c.b16 %v375, %v375
    %v384 = vpack.c.b16 %v376, %v376
    %v385 = vpack.c.b16 %v377, %v377
    %v386 = vpack.c.b16 %v378, %v378
    %v387 = vpack.c.b16 %v379, %v379
    %v388 = vpack.c.b16 %v380, %v380
    %v389 = vpack.c.b16 %v381, %v381
    %v390 = vpack.c.b16 %v382, %v382
    %v655 = vunpack.c.l.b16 %v93
    %v656 = vunpack.c.h.b16 %v93
    %v657 = vunpack.c.l.b16 %v94
    %v658 = vunpack.c.h.b16 %v94
    %v659 = vunpack.c.l.b16 %v95
    %v660 = vunpack.c.h.b16 %v95
    %v661 = vunpack.c.l.b16 %v96
    %v662 = vunpack.c.h.b16 %v96
    %v663 = vunpack.c.l.b16 %v97
    %v664 = vunpack.c.h.b16 %v97
    %v665 = vunpack.c.l.b16 %v98
    %v666 = vunpack.c.h.b16 %v98
    %v667 = vunpack.c.l.b16 %v99
    %v668 = vunpack.c.h.b16 %v99
    %v669 = vunpack.c.l.b16 %v100
    %v670 = vunpack.c.h.b16 %v100
    %v671 = vunpack.c.l.b16 %v101
    %v672 = vunpack.c.h.b16 %v101
    %v673 = vunpack.c.l.b16 %v102
    %v674 = vunpack.c.h.b16 %v102
    %v675 = vunpack.c.l.b16 %v103
    %v676 = vunpack.c.h.b16 %v103
    %v677 = vunpack.c.l.b16 %v104
    %v678 = vunpack.c.h.b16 %v104
    %v679 = vunpack.c.l.b16 %v105
    %v680 = vunpack.c.h.b16 %v105
    %v681 = vunpack.c.l.b16 %v106
    %v682 = vunpack.c.h.b16 %v106
    %v683 = vunpack.c.l.b16 %v107
    %v684 = vunpack.c.h.b16 %v107
    %v685 = vunpack.c.l.b16 %v108
    %v686 = vunpack.c.h.b16 %v108
    %v687 = vunpack.c.l.b16 %v109
    %v688 = vunpack.c.h.b16 %v109
    %v689 = vunpack.c.l.b16 %v110
    %v690 = vunpack.c.h.b16 %v110
    %v691 = vunpack.c.l.b16 %v111
    %v692 = vunpack.c.h.b16 %v111
    %v693 = vunpack.c.l.b16 %v112
    %v694 = vunpack.c.h.b16 %v112
    %v695 = vunpack.c.l.b16 %v113
    %v696 = vunpack.c.h.b16 %v113
    %v697 = vunpack.c.l.b16 %v114
    %v698 = vunpack.c.h.b16 %v114
    %v699 = vunpack.c.l.b16 %v115
    %v700 = vunpack.c.h.b16 %v115
    %v701 = vunpack.c.l.b16 %v116
    %v702 = vunpack.c.h.b16 %v116
    %v703 = vunpack.c.l.b16 %v117
    %v704 = vunpack.c.h.b16 %v117
    %v705 = vunpack.c.l.b16 %v118
    %v706 = vunpack.c.h.b16 %v118
    %v707 = vunpack.c.l.b16 %v119
    %v708 = vunpack.c.h.b16 %v119
    %v709 = vunpack.c.l.b16 %v120
    %v710 = vunpack.c.h.b16 %v120
    %v711 = vunpack.c.l.b16 %v121
    %v712 = vunpack.c.h.b16 %v121
    %v713 = vunpack.c.l.b16 %v122
    %v714 = vunpack.c.h.b16 %v122
    %v715 = vunpack.c.l.b16 %v123
    %v716 = vunpack.c.h.b16 %v123
    %v717 = vunpack.c.l.b16 %v124
    %v718 = vunpack.c.h.b16 %v124
    %v719 = vunpack.c.l.b16 %v125
    %v720 = vunpack.c.h.b16 %v125
    %v721 = vunpack.c.l.b16 %v126
    %v722 = vunpack.c.h.b16 %v126
    %v723 = vunpack.c.l.b16 %v127
    %v724 = vunpack.c.h.b16 %v127
    %v725 = vunpack.c.l.b16 %v128
    %v726 = vunpack.c.h.b16 %v128
    %v727 = vunpack.c.l.b16 %v129
    %v728 = vunpack.c.h.b16 %v129
    %v729 = vunpack.c.l.b16 %v130
    %v730 = vunpack.c.h.b16 %v130
    %v731 = vunpack.c.l.b16 %v131
    %v732 = vunpack.c.h.b16 %v131
    %v733 = vunpack.c.l.b16 %v132
    %v734 = vunpack.c.h.b16 %v132
    %v735 = vunpack.c.l.b16 %v133
    %v736 = vunpack.c.h.b16 %v133
    %v737 = vunpack.c.l.b16 %v134
    %v738 = vunpack.c.h.b16 %v134
    %v739 = vunpack.c.l.b16 %v135
    %v740 = vunpack.c.h.b16 %v135
    %v741 = vunpack.c.l.b16 %v136
    %v742 = vunpack.c.h.b16 %v136
    %v743 = vunpack.c.l.b16 %v137
    %v744 = vunpack.c.h.b16 %v137
    %v745 = vunpack.c.l.b16 %v138
    %v746 = vunpack.c.h.b16 %v138
    %v747 = vunpack.c.l.b16 %v139
    %v748 = vunpack.c.h.b16 %v139
    %v749 = vunpack.c.l.b16 %v140
    %v750 = vunpack.c.h.b16 %v140
    %v751 = vunpack.c.l.b16 %v141
    %v752 = vunpack.c.h.b16 %v141
    %v753 = vunpack.c.l.b16 %v142
    %v754 = vunpack.c.h.b16 %v142
    %v755 = vunpack.c.l.b16 %v143
    %v756 = vunpack.c.h.b16 %v143
    %v757 = vunpack.c.l.b16 %v144
    %v758 = vunpack.c.h.b16 %v144
    %v759 = vunpack.c.l.b16 %v145
    %v760 = vunpack.c.h.b16 %v145
    %v761 = vunpack.c.l.b16 %v146
    %v762 = vunpack.c.h.b16 %v146
    %v763 = vunpack.c.l.b16 %v147
    %v764 = vunpack.c.h.b16 %v147
    %v765 = vunpack.c.l.b16 %v148
    %v766 = vunpack.c.h.b16 %v148
    %v767 = vunpack.c.l.b16 %v149
    %v768 = vunpack.c.h.b16 %v149
    %v769 = vunpack.c.l.b16 %v150
    %v770 = vunpack.c.h.b16 %v150
    %v771 = vunpack.c.l.b16 %v151
    %v772 = vunpack.c.h.b16 %v151
    %v773 = vunpack.c.l.b16 %v152
    %v774 = vunpack.c.h.b16 %v152
    %v775 = vunpack.c.l.b16 %v153
    %v776 = vunpack.c.h.b16 %v153
    %v777 = vunpack.c.l.b16 %v154
    %v778 = vunpack.c.h.b16 %v154
    %v779 = vunpack.c.l.b16 %v155
    %v780 = vunpack.c.h.b16 %v155
    %v781 = vunpack.c.l.b16 %v156
    %v782 = vunpack.c.h.b16 %v156
    %v783 = vunpack.c.l.b16 %v157
    %v784 = vunpack.c.h.b16 %v157
    %v785 = vunpack.c.l.b16 %v158
    %v786 = vunpack.c.h.b16 %v158
    %v787 = vunpack.c.l.b16 %v159
    %v788 = vunpack.c.h.b16 %v159
    %v789 = vunpack.c.l.b16 %v160
    %v790 = vunpack.c.h.b16 %v160
    %v791 = vunpack.c.l.b16 %v161
    %v792 = vunpack.c.h.b16 %v161
    %v793 = vunpack.c.l.b16 %v162
    %v794 = vunpack.c.h.b16 %v162
    %v795 = vunpack.c.l.b16 %v163
    %v796 = vunpack.c.h.b16 %v163
    %v797 = vunpack.c.l.b16 %v164
    %v798 = vunpack.c.h.b16 %v164
    %v799 = vunpack.c.l.b16 %v165
    %v800 = vunpack.c.h.b16 %v165
    %v801 = vunpack.c.l.b16 %v166
    %v802 = vunpack.c.h.b16 %v166
    %v803 = vunpack.c.l.b16 %v167
    %v804 = vunpack.c.h.b16 %v167
    %v805 = vunpack.c.l.b16 %v168
    %v806 = vunpack.c.h.b16 %v168
    %v807 = vunpack.c.l.b16 %v169
    %v808 = vunpack.c.h.b16 %v169
    %v809 = vunpack.c.l.b16 %v170
    %v810 = vunpack.c.h.b16 %v170
    %v811 = vunpack.c.l.b16 %v171
    %v812 = vunpack.c.h.b16 %v171
    %v813 = vunpack.c.l.b16 %v172
    %v814 = vunpack.c.h.b16 %v172
    %v815 = vunpack.c.l.b16 %v173
    %v816 = vunpack.c.h.b16 %v173
    %v817 = vunpack.c.l.b16 %v174
    %v818 = vunpack.c.h.b16 %v174
    %v819 = vunpack.c.l.b16 %v175
    %v820 = vunpack.c.h.b16 %v175
    %v821 = vunpack.c.l.b16 %v176
    %v822 = vunpack.c.h.b16 %v176
    %v823 = vunpack.c.l.b16 %v177
    %v824 = vunpack.c.h.b16 %v177
    %v825 = vunpack.c.l.b16 %v178
    %v826 = vunpack.c.h.b16 %v178
    %v827 = vunpack.c.l.b16 %v179
    %v828 = vunpack.c.h.b16 %v179
    %v829 = vunpack.c.l.b16 %v180
    %v830 = vunpack.c.h.b16 %v180
    %v831 = vunpack.c.l.b16 %v181
    %v832 = vunpack.c.h.b16 %v181
    %v833 = vunpack.c.l.b16 %v182
    %v834 = vunpack.c.h.b16 %v182
    %v835 = vunpack.c.l.b16 %v183
    %v836 = vunpack.c.h.b16 %v183
    %v837 = vunpack.c.l.b16 %v184
    %v838 = vunpack.c.h.b16 %v184
    %v839 = vunpack.c.l.b16 %v185
    %v840 = vunpack.c.h.b16 %v185
    %v841 = vunpack.c.l.b16 %v186
    %v842 = vunpack.c.h.b16 %v186
    %v843 = vunpack.c.l.b16 %v187
    %v844 = vunpack.c.h.b16 %v187
    %v845 = vunpack.c.l.b16 %v188
    %v846 = vunpack.c.h.b16 %v188
    %v847 = vunpack.c.l.b16 %v189
    %v848 = vunpack.c.h.b16 %v189
    %v849 = vunpack.c.l.b16 %v190
    %v850 = vunpack.c.h.b16 %v190
    %v851 = vunpack.c.l.b16 %v191
    %v852 = vunpack.c.h.b16 %v191
    %v853 = vunpack.c.l.b16 %v192
    %v854 = vunpack.c.h.b16 %v192
    %v855 = vunpack.c.l.b16 %v193
    %v856 = vunpack.c.h.b16 %v193
    %v857 = vunpack.c.l.b16 %v194
    %v858 = vunpack.c.h.b16 %v194
    %v859 = vunpack.c.l.b16 %v195
    %v860 = vunpack.c.h.b16 %v195
    %v861 = vunpack.c.l.b16 %v196
    %v862 = vunpack.c.h.b16 %v196
    %v863 = vunpack.c.l.b16 %v197
    %v864 = vunpack.c.h.b16 %v197
    %v865 = vunpack.c.l.b16 %v198
    %v866 = vunpack.c.h.b16 %v198
    %v867 = vunpack.c.l.b16 %v199
    %v868 = vunpack.c.h.b16 %v199
    %v869 = vunpack.c.l.b16 %v200
    %v870 = vunpack.c.h.b16 %v200
    %v871 = vunpack.c.l.b16 %v201
    %v872 = vunpack.c.h.b16 %v201
    %v873 = vunpack.c.l.b16 %v202
    %v874 = vunpack.c.h.b16 %v202
    %v875 = vunpack.c.l.b16 %v203
    %v876 = vunpack.c.h.b16 %v203
    %v877 = vunpack.c.l.b16 %v204
    %v878 = vunpack.c.h.b16 %v204
    %v879 = vunpack.c.l.b16 %v205
    %v880 = vunpack.c.h.b16 %v205
    %v881 = vunpack.c.l.b16 %v206
    %v882 = vunpack.c.h.b16 %v206
    %v883 = vunpack.c.l.b16 %v207
    %v884 = vunpack.c.h.b16 %v207
    %v885 = vunpack.c.l.b16 %v208
    %v886 = vunpack.c.h.b16 %v208
    %v887 = vunpack.c.l.b16 %v209
    %v888 = vunpack.c.h.b16 %v209
    %v889 = vunpack.c.l.b16 %v210
    %v890 = vunpack.c.h.b16 %v210
    %v891 = vunpack.c.l.b16 %v211
    %v892 = vunpack.c.h.b16 %v211
    %v893 = vunpack.c.l.b16 %v212
    %v894 = vunpack.c.h.b16 %v212
    %v895 = vunpack.c.l.b16 %v213
    %v896 = vunpack.c.h.b16 %v213
    %v897 = vunpack.c.l.b16 %v214
    %v898 = vunpack.c.h.b16 %v214
    %v899 = vunpack.c.l.b16 %v215
    %v900 = vunpack.c.h.b16 %v215
    %v901 = vunpack.c.l.b16 %v216
    %v902 = vunpack.c.h.b16 %v216
    %v903 = vunpack.c.l.b16 %v217
    %v904 = vunpack.c.h.b16 %v217
    %v905 = vunpack.c.l.b16 %v218
    %v906 = vunpack.c.h.b16 %v218
    %v907 = vunpack.c.l.b16 %v219
    %v908 = vunpack.c.h.b16 %v219
    %v909 = vunpack.c.l.b16 %v220
    %v910 = vunpack.c.h.b16 %v220
    %v911 = vunpack.c.l.b16 %v221
    %v912 = vunpack.c.h.b16 %v221
    %v913 = vunpack.c.l.b16 %v222
    %v914 = vunpack.c.h.b16 %v222
    %v915 = vunpack.c.l.b16 %v223
    %v916 = vunpack.c.h.b16 %v223
    %v917 = vunpack.c.l.b16 %v224
    %v918 = vunpack.c.h.b16 %v224
    %v919 = vunpack.c.l.b16 %v225
    %v920 = vunpack.c.h.b16 %v225
    %v921 = vunpack.c.l.b16 %v226
    %v922 = vunpack.c.h.b16 %v226
    %v923 = vunpack.c.l.b16 %v227
    %v924 = vunpack.c.h.b16 %v227
    %v925 = vunpack.c.l.b16 %v228
    %v926 = vunpack.c.h.b16 %v228
    %v927 = vunpack.c.l.b16 %v229
    %v928 = vunpack.c.h.b16 %v229
    %v929 = vunpack.c.l.b16 %v230
    %v930 = vunpack.c.h.b16 %v230
    %v931 = vunpack.c.l.b16 %v231
    %v932 = vunpack.c.h.b16 %v231
    %v933 = vunpack.c.l.b16 %v232
    %v934 = vunpack.c.h.b16 %v232
    %v935 = vunpack.c.l.b16 %v233
    %v936 = vunpack.c.h.b16 %v233
    %v937 = vunpack.c.l.b16 %v234
    %v938 = vunpack.c.h.b16 %v234
    %v939 = vunpack.c.l.b16 %v235
    %v940 = vunpack.c.h.b16 %v235
    %v941 = vunpack.c.l.b16 %v236
    %v942 = vunpack.c.h.b16 %v236
    %v943 = vunpack.c.l.b16 %v237
    %v944 = vunpack.c.h.b16 %v237
    %v945 = vunpack.c.l.b16 %v238
    %v946 = vunpack.c.h.b16 %v238
    %v947 = vunpack.c.l.b16 %v239
    %v948 = vunpack.c.h.b16 %v239
    %v949 = vunpack.c.l.b16 %v240
    %v950 = vunpack.c.h.b16 %v240
    %v951 = vunpack.c.l.b16 %v241
    %v952 = vunpack.c.h.b16 %v241
    %v953 = vunpack.c.l.b16 %v242
    %v954 = vunpack.c.h.b16 %v242
    %v955 = vunpack.c.l.b16 %v243
    %v956 = vunpack.c.h.b16 %v243
    %v957 = vunpack.c.l.b16 %v244
    %v958 = vunpack.c.h.b16 %v244
    %v959 = vunpack.c.l.b16 %v245
    %v960 = vunpack.c.h.b16 %v245
    %v961 = vunpack.c.l.b16 %v246
    %v962 = vunpack.c.h.b16 %v246
    %v963 = vunpack.c.l.b16 %v247
    %v964 = vunpack.c.h.b16 %v247
    %v965 = vunpack.c.l.b16 %v248
    %v966 = vunpack.c.h.b16 %v248
    %v967 = vunpack.c.l.b16 %v249
    %v968 = vunpack.c.h.b16 %v249
    %v969 = vunpack.c.l.b16 %v250
    %v970 = vunpack.c.h.b16 %v250
    %v971 = vunpack.c.l.b16 %v251
    %v972 = vunpack.c.h.b16 %v251
    %v973 = vunpack.c.l.b16 %v252
    %v974 = vunpack.c.h.b16 %v252
    %v975 = vunpack.c.l.b16 %v253
    %v976 = vunpack.c.h.b16 %v253
    %v977 = vunpack.c.l.b16 %v254
    %v978 = vunpack.c.h.b16 %v254
    %v979 = vunpack.c.l.b16 %v255
    %v980 = vunpack.c.h.b16 %v255
    %v981 = vunpack.c.l.b16 %v256
    %v982 = vunpack.c.h.b16 %v256
    %v983 = vunpack.c.l.b16 %v257
    %v984 = vunpack.c.h.b16 %v257
    %v985 = vunpack.c.l.b16 %v258
    %v986 = vunpack.c.h.b16 %v258
    %v987 = vunpack.c.l.b16 %v259
    %v988 = vunpack.c.h.b16 %v259
    %v989 = vunpack.c.l.b16 %v260
    %v990 = vunpack.c.h.b16 %v260
    %v991 = vunpack.c.l.b16 %v261
    %v992 = vunpack.c.h.b16 %v261
    %v993 = vunpack.c.l.b16 %v262
    %v994 = vunpack.c.h.b16 %v262
    %v995 = vunpack.c.l.b16 %v263
    %v996 = vunpack.c.h.b16 %v263
    %v997 = vunpack.c.l.b16 %v264
    %v998 = vunpack.c.h.b16 %v264
    %v999 = vunpack.c.l.b16 %v265
    %v1000 = vunpack.c.h.b16 %v265
    %v1001 = vunpack.c.l.b16 %v266
    %v1002 = vunpack.c.h.b16 %v266
    %v1003 = vunpack.c.l.b16 %v267
    %v1004 = vunpack.c.h.b16 %v267
    %v1005 = vunpack.c.l.b16 %v268
    %v1006 = vunpack.c.h.b16 %v268
    %v1007 = vunpack.c.l.b16 %v269
    %v1008 = vunpack.c.h.b16 %v269
    %v1009 = vunpack.c.l.b16 %v270
    %v1010 = vunpack.c.h.b16 %v270
    %v1011 = vunpack.c.l.b16 %v271
    %v1012 = vunpack.c.h.b16 %v271
    %v1013 = vunpack.c.l.b16 %v272
    %v1014 = vunpack.c.h.b16 %v272
    %v1015 = vunpack.c.l.b16 %v273
    %v1016 = vunpack.c.h.b16 %v273
    %v1017 = vunpack.c.l.b16 %v274
    %v1018 = vunpack.c.h.b16 %v274
    %v1019 = vunpack.c.l.b16 %v275
    %v1020 = vunpack.c.h.b16 %v275
    %v1021 = vunpack.c.l.b16 %v276
    %v1022 = vunpack.c.h.b16 %v276
    %v1023 = vunpack.c.l.b16 %v277
    %v1024 = vunpack.c.h.b16 %v277
    %v1025 = vunpack.c.l.b16 %v278
    %v1026 = vunpack.c.h.b16 %v278
    %v1027 = vunpack.c.l.b16 %v279
    %v1028 = vunpack.c.h.b16 %v279
    %v1029 = vunpack.c.l.b16 %v280
    %v1030 = vunpack.c.h.b16 %v280
    %v1031 = vunpack.c.l.b16 %v281
    %v1032 = vunpack.c.h.b16 %v281
    %v1033 = vunpack.c.l.b16 %v282
    %v1034 = vunpack.c.h.b16 %v282
    %v1035 = vunpack.c.l.b16 %v283
    %v1036 = vunpack.c.h.b16 %v283
    %v1037 = vunpack.c.l.b16 %v284
    %v1038 = vunpack.c.h.b16 %v284
    %v1039 = vunpack.c.l.b16 %v285
    %v1040 = vunpack.c.h.b16 %v285
    %v1041 = vunpack.c.l.b16 %v286
    %v1042 = vunpack.c.h.b16 %v286
    %v1043 = vunpack.c.l.b16 %v287
    %v1044 = vunpack.c.h.b16 %v287
    %v1045 = vunpack.c.l.b16 %v288
    %v1046 = vunpack.c.h.b16 %v288
    %v1047 = vunpack.c.l.b16 %v289
    %v1048 = vunpack.c.h.b16 %v289
    %v1049 = vunpack.c.l.b16 %v290
    %v1050 = vunpack.c.h.b16 %v290
    %v1051 = vunpack.c.l.b16 %v291
    %v1052 = vunpack.c.h.b16 %v291
    %v1053 = vunpack.c.l.b16 %v292
    %v1054 = vunpack.c.h.b16 %v292
    %v1055 = vunpack.c.l.b16 %v293
    %v1056 = vunpack.c.h.b16 %v293
    %v1057 = vunpack.c.l.b16 %v294
    %v1058 = vunpack.c.h.b16 %v294
    %v1059 = vunpack.c.l.b16 %v295
    %v1060 = vunpack.c.h.b16 %v295
    %v1061 = vunpack.c.l.b16 %v296
    %v1062 = vunpack.c.h.b16 %v296
    %v1063 = vunpack.c.l.b16 %v297
    %v1064 = vunpack.c.h.b16 %v297
    %v1065 = vunpack.c.l.b16 %v298
    %v1066 = vunpack.c.h.b16 %v298
    %v1067 = vunpack.c.l.b16 %v299
    %v1068 = vunpack.c.h.b16 %v299
    %v1069 = vunpack.c.l.b16 %v300
    %v1070 = vunpack.c.h.b16 %v300
    %v1071 = vunpack.c.l.b16 %v301
    %v1072 = vunpack.c.h.b16 %v301
    %v1073 = vunpack.c.l.b16 %v302
    %v1074 = vunpack.c.h.b16 %v302
    %v1075 = vunpack.c.l.b16 %v303
    %v1076 = vunpack.c.h.b16 %v303
    %v1077 = vunpack.c.l.b16 %v304
    %v1078 = vunpack.c.h.b16 %v304
    %v1079 = vunpack.c.l.b16 %v305
    %v1080 = vunpack.c.h.b16 %v305
    %v1081 = vunpack.c.l.b16 %v306
    %v1082 = vunpack.c.h.b16 %v306
    %v1083 = vunpack.c.l.b16 %v307
    %v1084 = vunpack.c.h.b16 %v307
    %v1085 = vunpack.c.l.b16 %v308
    %v1086 = vunpack.c.h.b16 %v308
    %v1087 = vunpack.c.l.b16 %v309
    %v1088 = vunpack.c.h.b16 %v309
    %v1089 = vunpack.c.l.b16 %v310
    %v1090 = vunpack.c.h.b16 %v310
    %v1091 = vunpack.c.l.b16 %v311
    %v1092 = vunpack.c.h.b16 %v311
    %v1093 = vunpack.c.l.b16 %v312
    %v1094 = vunpack.c.h.b16 %v312
    %v1095 = vunpack.c.l.b16 %v313
    %v1096 = vunpack.c.h.b16 %v313
    %v1097 = vunpack.c.l.b16 %v314
    %v1098 = vunpack.c.h.b16 %v314
    %v1099 = vunpack.c.l.b16 %v315
    %v1100 = vunpack.c.h.b16 %v315
    %v1101 = vunpack.c.l.b16 %v316
    %v1102 = vunpack.c.h.b16 %v316
    %v1103 = vunpack.c.l.b16 %v317
    %v1104 = vunpack.c.h.b16 %v317
    %v1105 = vunpack.c.l.b16 %v318
    %v1106 = vunpack.c.h.b16 %v318
    %v1107 = vunpack.c.l.b16 %v319
    %v1108 = vunpack.c.h.b16 %v319
    %v1109 = vunpack.c.l.b16 %v320
    %v1110 = vunpack.c.h.b16 %v320
    %v1111 = vunpack.c.l.b16 %v321
    %v1112 = vunpack.c.h.b16 %v321
    %v1113 = vunpack.c.l.b16 %v322
    %v1114 = vunpack.c.h.b16 %v322
    %v1115 = vunpack.c.l.b16 %v323
    %v1116 = vunpack.c.h.b16 %v323
    %v1117 = vunpack.c.l.b16 %v324
    %v1118 = vunpack.c.h.b16 %v324
    %v1119 = vunpack.c.l.b16 %v325
    %v1120 = vunpack.c.h.b16 %v325
    %v1121 = vunpack.c.l.b16 %v326
    %v1122 = vunpack.c.h.b16 %v326
    %v1123 = vunpack.c.l.b16 %v327
    %v1124 = vunpack.c.h.b16 %v327
    %v1125 = vunpack.c.l.b16 %v328
    %v1126 = vunpack.c.h.b16 %v328
    %v1127 = vunpack.c.l.b16 %v329
    %v1128 = vunpack.c.h.b16 %v329
    %v1129 = vunpack.c.l.b16 %v330
    %v1130 = vunpack.c.h.b16 %v330
    %v1131 = vunpack.c.l.b16 %v331
    %v1132 = vunpack.c.h.b16 %v331
    %v1133 = vunpack.c.l.b16 %v332
    %v1134 = vunpack.c.h.b16 %v332
    %v1135 = vunpack.c.l.b16 %v333
    %v1136 = vunpack.c.h.b16 %v333
    %v1137 = vunpack.c.l.b16 %v334
    %v1138 = vunpack.c.h.b16 %v334
    %v1139 = vunpack.c.l.b16 %v335
    %v1140 = vunpack.c.h.b16 %v335
    %v1141 = vunpack.c.l.b16 %v336
    %v1142 = vunpack.c.h.b16 %v336
    %v1143 = vunpack.c.l.b16 %v337
    %v1144 = vunpack.c.h.b16 %v337
    %v1145 = vunpack.c.l.b16 %v338
    %v1146 = vunpack.c.h.b16 %v338
    %v1147 = vunpack.c.l.b16 %v339
    %v1148 = vunpack.c.h.b16 %v339
    %v1149 = vunpack.c.l.b16 %v340
    %v1150 = vunpack.c.h.b16 %v340
    %v1151 = vunpack.c.l.b16 %v341
    %v1152 = vunpack.c.h.b16 %v341
    %v1153 = vunpack.c.l.b16 %v342
    %v1154 = vunpack.c.h.b16 %v342
    %v1155 = vunpack.c.l.b16 %v343
    %v1156 = vunpack.c.h.b16 %v343
    %v1157 = vunpack.c.l.b16 %v344
    %v1158 = vunpack.c.h.b16 %v344
    %v1159 = vunpack.c.l.b16 %v345
    %v1160 = vunpack.c.h.b16 %v345
    %v1161 = vunpack.c.l.b16 %v346
    %v1162 = vunpack.c.h.b16 %v346
    %v1163 = vunpack.c.l.b16 %v347
    %v1164 = vunpack.c.h.b16 %v347
    %v1165 = vunpack.c.l.b16 %v348
    %v1166 = vunpack.c.h.b16 %v348
    %v1167 = vpack.c.b16 %v659, %v655
    %v1168 = vpack.c.b16 %v660, %v656
    %v1169 = vpack.c.b16 %v661, %v657
    %v1170 = vpack.c.b16 %v662, %v658
    %v1171 = vpack.c.b16 %v667, %v663
    %v1172 = vpack.c.b16 %v668, %v664
    %v1173 = vpack.c.b16 %v669, %v665
    %v1174 = vpack.c.b16 %v670, %v666
    %v1175 = vpack.c.b16 %v675, %v671
    %v1176 = vpack.c.b16 %v676, %v672
    %v1177 = vpack.c.b16 %v677, %v673
    %v1178 = vpack.c.b16 %v678, %v674
    %v1179 = vpack.c.b16 %v683, %v679
    %v1180 = vpack.c.b16 %v684, %v680
    %v1181 = vpack.c.b16 %v685, %v681
    %v1182 = vpack.c.b16 %v686, %v682
    %v1183 = vpack.c.b16 %v691, %v687
    %v1184 = vpack.c.b16 %v692, %v688
    %v1185 = vpack.c.b16 %v693, %v689
    %v1186 = vpack.c.b16 %v694, %v690
    %v1187 = vpack.c.b16 %v699, %v695
    %v1188 = vpack.c.b16 %v700, %v696
    %v1189 = vpack.c.b16 %v701, %v697
    %v1190 = vpack.c.b16 %v702, %v698
    %v1191 = vpack.c.b16 %v707, %v703
    %v1192 = vpack.c.b16 %v708, %v704
    %v1193 = vpack.c.b16 %v709, %v705
    %v1194 = vpack.c.b16 %v710, %v706
    %v1195 = vpack.c.b16 %v715, %v711
    %v1196 = vpack.c.b16 %v716, %v712
    %v1197 = vpack.c.b16 %v717, %v713
    %v1198 = vpack.c.b16 %v718, %v714
    %v1199 = vpack.c.b16 %v723, %v719
    %v1200 = vpack.c.b16 %v724, %v720
    %v1201 = vpack.c.b16 %v725, %v721
    %v1202 = vpack.c.b16 %v726, %v722
    %v1203 = vpack.c.b16 %v731, %v727
    %v1204 = vpack.c.b16 %v732, %v728
    %v1205 = vpack.c.b16 %v733, %v729
    %v1206 = vpack.c.b16 %v734, %v730
    %v1207 = vpack.c.b16 %v739, %v735
    %v1208 = vpack.c.b16 %v740, %v736
    %v1209 = vpack.c.b16 %v741, %v737
    %v1210 = vpack.c.b16 %v742, %v738
    %v1211 = vpack.c.b16 %v747, %v743
    %v1212 = vpack.c.b16 %v748, %v744
    %v1213 = vpack.c.b16 %v749, %v745
    %v1214 = vpack.c.b16 %v750, %v746
    %v1215 = vpack.c.b16 %v755, %v751
    %v1216 = vpack.c.b16 %v756, %v752
    %v1217 = vpack.c.b16 %v757, %v753
    %v1218 = vpack.c.b16 %v758, %v754
    %v1219 = vpack.c.b16 %v763, %v759
    %v1220 = vpack.c.b16 %v764, %v760
    %v1221 = vpack.c.b16 %v765, %v761
    %v1222 = vpack.c.b16 %v766, %v762
    %v1223 = vpack.c.b16 %v771, %v767
    %v1224 = vpack.c.b16 %v772, %v768
    %v1225 = vpack.c.b16 %v773, %v769
    %v1226 = vpack.c.b16 %v774, %v770
    %v1227 = vpack.c.b16 %v779, %v775
    %v1228 = vpack.c.b16 %v780, %v776
    %v1229 = vpack.c.b16 %v781, %v777
    %v1230 = vpack.c.b16 %v782, %v778
    %v1231 = vpack.c.b16 %v787, %v783
    %v1232 = vpack.c.b16 %v788, %v784
    %v1233 = vpack.c.b16 %v789, %v785
    %v1234 = vpack.c.b16 %v790, %v786
    %v1235 = vpack.c.b16 %v795, %v791
    %v1236 = vpack.c.b16 %v796, %v792
    %v1237 = vpack.c.b16 %v797, %v793
    %v1238 = vpack.c.b16 %v798, %v794
    %v1239 = vpack.c.b16 %v803, %v799
    %v1240 = vpack.c.b16 %v804, %v800
    %v1241 = vpack.c.b16 %v805, %v801
    %v1242 = vpack.c.b16 %v806, %v802
    %v1243 = vpack.c.b16 %v811, %v807
    %v1244 = vpack.c.b16 %v812, %v808
    %v1245 = vpack.c.b16 %v813, %v809
    %v1246 = vpack.c.b16 %v814, %v810
    %v1247 = vpack.c.b16 %v819, %v815
    %v1248 = vpack.c.b16 %v820, %v816
    %v1249 = vpack.c.b16 %v821, %v817
    %v1250 = vpack.c.b16 %v822, %v818
    %v1251 = vpack.c.b16 %v827, %v823
    %v1252 = vpack.c.b16 %v828, %v824
    %v1253 = vpack.c.b16 %v829, %v825
    %v1254 = vpack.c.b16 %v830, %v826
    %v1255 = vpack.c.b16 %v835, %v831
    %v1256 = vpack.c.b16 %v836, %v832
    %v1257 = vpack.c.b16 %v837, %v833
    %v1258 = vpack.c.b16 %v838, %v834
    %v1259 = vpack.c.b16 %v843, %v839
    %v1260 = vpack.c.b16 %v844, %v840
    %v1261 = vpack.c.b16 %v845, %v841
    %v1262 = vpack.c.b16 %v846, %v842
    %v1263 = vpack.c.b16 %v851, %v847
    %v1264 = vpack.c.b16 %v852, %v848
    %v1265 = vpack.c.b16 %v853, %v849
    %v1266 = vpack.c.b16 %v854, %v850
    %v1267 = vpack.c.b16 %v859, %v855
    %v1268 = vpack.c.b16 %v860, %v856
    %v1269 = vpack.c.b16 %v861, %v857
    %v1270 = vpack.c.b16 %v862, %v858
    %v1271 = vpack.c.b16 %v867, %v863
    %v1272 = vpack.c.b16 %v868, %v864
    %v1273 = vpack.c.b16 %v869, %v865
    %v1274 = vpack.c.b16 %v870, %v866
    %v1275 = vpack.c.b16 %v875, %v871
    %v1276 = vpack.c.b16 %v876, %v872
    %v1277 = vpack.c.b16 %v877, %v873
    %v1278 = vpack.c.b16 %v878, %v874
    %v1279 = vpack.c.b16 %v883, %v879
    %v1280 = vpack.c.b16 %v884, %v880
    %v1281 = vpack.c.b16 %v885, %v881
    %v1282 = vpack.c.b16 %v886, %v882
    %v1283 = vpack.c.b16 %v891, %v887
    %v1284 = vpack.c.b16 %v892, %v888
    %v1285 = vpack.c.b16 %v893, %v889
    %v1286 = vpack.c.b16 %v894, %v890
    %v1287 = vpack.c.b16 %v899, %v895
    %v1288 = vpack.c.b16 %v900, %v896
    %v1289 = vpack.c.b16 %v901, %v897
    %v1290 = vpack.c.b16 %v902, %v898
    %v1291 = vpack.c.b16 %v907, %v903
    %v1292 = vpack.c.b16 %v908, %v904
    %v1293 = vpack.c.b16 %v909, %v905
    %v1294 = vpack.c.b16 %v910, %v906
    %v1295 = vpack.c.b16 %v915, %v911
    %v1296 = vpack.c.b16 %v916, %v912
    %v1297 = vpack.c.b16 %v917, %v913
    %v1298 = vpack.c.b16 %v918, %v914
    %v1299 = vpack.c.b16 %v923, %v919
    %v1300 = vpack.c.b16 %v924, %v920
    %v1301 = vpack.c.b16 %v925, %v921
    %v1302 = vpack.c.b16 %v926, %v922
    %v1303 = vpack.c.b16 %v931, %v927
    %v1304 = vpack.c.b16 %v932, %v928
    %v1305 = vpack.c.b16 %v933, %v929
    %v1306 = vpack.c.b16 %v934, %v930
    %v1307 = vpack.c.b16 %v939, %v935
    %v1308 = vpack.c.b16 %v940, %v936
    %v1309 = vpack.c.b16 %v941, %v937
    %v1310 = vpack.c.b16 %v942, %v938
    %v1311 = vpack.c.b16 %v947, %v943
    %v1312 = vpack.c.b16 %v948, %v944
    %v1313 = vpack.c.b16 %v949, %v945
    %v1314 = vpack.c.b16 %v950, %v946
    %v1315 = vpack.c.b16 %v955, %v951
    %v1316 = vpack.c.b16 %v956, %v952
    %v1317 = vpack.c.b16 %v957, %v953
    %v1318 = vpack.c.b16 %v958, %v954
    %v1319 = vpack.c.b16 %v963, %v959
    %v1320 = vpack.c.b16 %v964, %v960
    %v1321 = vpack.c.b16 %v965, %v961
    %v1322 = vpack.c.b16 %v966, %v962
    %v1323 = vpack.c.b16 %v971, %v967
    %v1324 = vpack.c.b16 %v972, %v968
    %v1325 = vpack.c.b16 %v973, %v969
    %v1326 = vpack.c.b16 %v974, %v970
    %v1327 = vpack.c.b16 %v979, %v975
    %v1328 = vpack.c.b16 %v980, %v976
    %v1329 = vpack.c.b16 %v981, %v977
    %v1330 = vpack.c.b16 %v982, %v978
    %v1331 = vpack.c.b16 %v987, %v983
    %v1332 = vpack.c.b16 %v988, %v984
    %v1333 = vpack.c.b16 %v989, %v985
    %v1334 = vpack.c.b16 %v990, %v986
    %v1335 = vpack.c.b16 %v995, %v991
    %v1336 = vpack.c.b16 %v996, %v992
    %v1337 = vpack.c.b16 %v997, %v993
    %v1338 = vpack.c.b16 %v998, %v994
    %v1339 = vpack.c.b16 %v1003, %v999
    %v1340 = vpack.c.b16 %v1004, %v1000
    %v1341 = vpack.c.b16 %v1005, %v1001
    %v1342 = vpack.c.b16 %v1006, %v1002
    %v1343 = vpack.c.b16 %v1011, %v1007
    %v1344 = vpack.c.b16 %v1012, %v1008
    %v1345 = vpack.c.b16 %v1013, %v1009
    %v1346 = vpack.c.b16 %v1014, %v1010
    %v1347 = vpack.c.b16 %v1019, %v1015
    %v1348 = vpack.c.b16 %v1020, %v1016
    %v1349 = vpack.c.b16 %v1021, %v1017
    %v1350 = vpack.c.b16 %v1022, %v1018
    %v1351 = vpack.c.b16 %v1027, %v1023
    %v1352 = vpack.c.b16 %v1028, %v1024
    %v1353 = vpack.c.b16 %v1029, %v1025
    %v1354 = vpack.c.b16 %v1030, %v1026
    %v1355 = vpack.c.b16 %v1035, %v1031
    %v1356 = vpack.c.b16 %v1036, %v1032
    %v1357 = vpack.c.b16 %v1037, %v1033
    %v1358 = vpack.c.b16 %v1038, %v1034
    %v1359 = vpack.c.b16 %v1043, %v1039
    %v1360 = vpack.c.b16 %v1044, %v1040
    %v1361 = vpack.c.b16 %v1045, %v1041
    %v1362 = vpack.c.b16 %v1046, %v1042
    %v1363 = vpack.c.b16 %v1051, %v1047
    %v1364 = vpack.c.b16 %v1052, %v1048
    %v1365 = vpack.c.b16 %v1053, %v1049
    %v1366 = vpack.c.b16 %v1054, %v1050
    %v1367 = vpack.c.b16 %v1059, %v1055
    %v1368 = vpack.c.b16 %v1060, %v1056
    %v1369 = vpack.c.b16 %v1061, %v1057
    %v1370 = vpack.c.b16 %v1062, %v1058
    %v1371 = vpack.c.b16 %v1067, %v1063
    %v1372 = vpack.c.b16 %v1068, %v1064
    %v1373 = vpack.c.b16 %v1069, %v1065
    %v1374 = vpack.c.b16 %v1070, %v1066
    %v1375 = vpack.c.b16 %v1075, %v1071
    %v1376 = vpack.c.b16 %v1076, %v1072
    %v1377 = vpack.c.b16 %v1077, %v1073
    %v1378 = vpack.c.b16 %v1078, %v1074
    %v1379 = vpack.c.b16 %v1083, %v1079
    %v1380 = vpack.c.b16 %v1084, %v1080
    %v1381 = vpack.c.b16 %v1085, %v1081
    %v1382 = vpack.c.b16 %v1086, %v1082
    %v1383 = vpack.c.b16 %v1091, %v1087
    %v1384 = vpack.c.b16 %v1092, %v1088
    %v1385 = vpack.c.b16 %v1093, %v1089
    %v1386 = vpack.c.b16 %v1094, %v1090
    %v1387 = vpack.c.b16 %v1099, %v1095
    %v1388 = vpack.c.b16 %v1100, %v1096
    %v1389 = vpack.c.b16 %v1101, %v1097
    %v1390 = vpack.c.b16 %v1102, %v1098
    %v1391 = vpack.c.b16 %v1107, %v1103
    %v1392 = vpack.c.b16 %v1108, %v1104
    %v1393 = vpack.c.b16 %v1109, %v1105
    %v1394 = vpack.c.b16 %v1110, %v1106
    %v1395 = vpack.c.b16 %v1115, %v1111
    %v1396 = vpack.c.b16 %v1116, %v1112
    %v1397 = vpack.c.b16 %v1117, %v1113
    %v1398 = vpack.c.b16 %v1118, %v1114
    %v1399 = vpack.c.b16 %v1123, %v1119
    %v1400 = vpack.c.b16 %v1124, %v1120
    %v1401 = vpack.c.b16 %v1125, %v1121
    %v1402 = vpack.c.b16 %v1126, %v1122
    %v1403 = vpack.c.b16 %v1131, %v1127
    %v1404 = vpack.c.b16 %v1132, %v1128
    %v1405 = vpack.c.b16 %v1133, %v1129
    %v1406 = vpack.c.b16 %v1134, %v1130
    %v1407 = vpack.c.b16 %v1139, %v1135
    %v1408 = vpack.c.b16 %v1140, %v1136
    %v1409 = vpack.c.b16 %v1141, %v1137
    %v1410 = vpack.c.b16 %v1142, %v1138
    %v1411 = vpack.c.b16 %v1147, %v1143
    %v1412 = vpack.c.b16 %v1148, %v1144
    %v1413 = vpack.c.b16 %v1149, %v1145
    %v1414 = vpack.c.b16 %v1150, %v1146
    %v1415 = vpack.c.b16 %v1155, %v1151
    %v1416 = vpack.c.b16 %v1156, %v1152
    %v1417 = vpack.c.b16 %v1157, %v1153
    %v1418 = vpack.c.b16 %v1158, %v1154
    %v1419 = vpack.c.b16 %v1163, %v1159
    %v1420 = vpack.c.b16 %v1164, %v1160
    %v1421 = vpack.c.b16 %v1165, %v1161
    %v1422 = vpack.c.b16 %v1166, %v1162
    %1679 = vmatprep.subr.bf16.mxu0 %v1196
    %1680 = vmatpush1.bf16.msra.mxu0 %v1195
    %1681 = vmatprep.subr.bf16.mxu0 %v1192
    %1682 = vmatpush1.bf16.msra.mxu0 %v1191
    %1683 = vmatprep.subr.bf16.mxu0 %v1188
    %1684 = vmatpush1.bf16.msra.mxu0 %v1187
    %1685 = vmatprep.subr.bf16.mxu0 %v1184
    %1686 = vmatpush1.bf16.msra.mxu0 %v1183
    %1687 = vmatprep.subr.bf16.mxu0 %v1180
    %1688 = vmatpush1.bf16.msra.mxu0 %v1179
    %1689 = vmatprep.subr.bf16.mxu0 %v1176
    %1690 = vmatpush1.bf16.msra.mxu0 %v1175
    %1691 = vmatprep.subr.bf16.mxu0 %v1172
    %1692 = vmatpush1.bf16.msra.mxu0 %v1171
    %1693 = vmatprep.subr.bf16.mxu0 %v1168
    %1694 = vmatpush1.bf16.msra.mxu0 %v1167
    %1695 = vmatprep.subr.bf16.mxu0 %v1228
    %1696 = vmatpush2.bf16.msra.mxu0 %v1227
    %1697 = vmatprep.subr.bf16.mxu0 %v1224
    %1698 = vmatpush2.bf16.msra.mxu0 %v1223
    %1699 = vmatprep.subr.bf16.mxu0 %v1220
    %1700 = vmatpush2.bf16.msra.mxu0 %v1219
    %1701 = vmatprep.subr.bf16.mxu0 %v1216
    %1702 = vmatpush2.bf16.msra.mxu0 %v1215
    %1703 = vmatprep.subr.bf16.mxu0 %v1212
    %1704 = vmatpush2.bf16.msra.mxu0 %v1211
    %1705 = vmatprep.subr.bf16.mxu0 %v1208
    %1706 = vmatpush2.bf16.msra.mxu0 %v1207
    %1707 = vmatprep.subr.bf16.mxu0 %v1204
    %1708 = vmatpush2.bf16.msra.mxu0 %v1203
    %1709 = vmatprep.subr.bf16.mxu0 %v1200
    %1710 = vmatpush2.bf16.msra.mxu0 %v1199
    %1711 = vmatprep.mubr.bf16.mxu0 %v384
    %1712 = vmatmul.mubr.bf16.gmra.mxu0 %v383
    %v1713 = vpop.f32.mrf.mxu0
    %v1714 = vadd.f32 %v354, %v1713
    %v1715 = vpop.f32.mrf.mxu0
    %v1716 = vadd.f32 %v358, %v1715
    %v1717 = vpop.f32.mrf.mxu0
    %v1718 = vpop.f32.mrf.mxu0
    %1719 = vdwg.mxu0
    %1720 = vmatprep.subr.bf16.mxu0 %v1260
    %1721 = vmatpush1.bf16.msra.mxu0 %v1259
    %1722 = vmatprep.subr.bf16.mxu0 %v1256
    %1723 = vmatpush1.bf16.msra.mxu0 %v1255
    %1724 = vmatprep.subr.bf16.mxu0 %v1252
    %1725 = vmatpush1.bf16.msra.mxu0 %v1251
    %1726 = vmatprep.subr.bf16.mxu0 %v1248
    %1727 = vmatpush1.bf16.msra.mxu0 %v1247
    %1728 = vmatprep.subr.bf16.mxu0 %v1244
    %1729 = vmatpush1.bf16.msra.mxu0 %v1243
    %1730 = vmatprep.subr.bf16.mxu0 %v1240
    %1731 = vmatpush1.bf16.msra.mxu0 %v1239
    %1732 = vmatprep.subr.bf16.mxu0 %v1236
    %1733 = vmatpush1.bf16.msra.mxu0 %v1235
    %1734 = vmatprep.subr.bf16.mxu0 %v1232
    %1735 = vmatpush1.bf16.msra.mxu0 %v1231
    %1736 = vmatprep.subr.bf16.mxu0 %v1292
    %1737 = vmatpush2.bf16.msra.mxu0 %v1291
    %1738 = vmatprep.subr.bf16.mxu0 %v1288
    %1739 = vmatpush2.bf16.msra.mxu0 %v1287
    %1740 = vmatprep.subr.bf16.mxu0 %v1284
    %1741 = vmatpush2.bf16.msra.mxu0 %v1283
    %1742 = vmatprep.subr.bf16.mxu0 %v1280
    %1743 = vmatpush2.bf16.msra.mxu0 %v1279
    %1744 = vmatprep.subr.bf16.mxu0 %v1276
    %1745 = vmatpush2.bf16.msra.mxu0 %v1275
    %1746 = vmatprep.subr.bf16.mxu0 %v1272
    %1747 = vmatpush2.bf16.msra.mxu0 %v1271
    %1748 = vmatprep.subr.bf16.mxu0 %v1268
    %1749 = vmatpush2.bf16.msra.mxu0 %v1267
    %1750 = vmatprep.subr.bf16.mxu0 %v1264
    %1751 = vmatpush2.bf16.msra.mxu0 %v1263
    %1752 = vmatprep.mubr.bf16.mxu0 %v386
    %1753 = vmatmul.mubr.bf16.gmra.mxu0 %v385
    %v1754 = vpop.f32.mrf.mxu0
    %v1755 = vadd.f32 %v1714, %v1754
    %v1756 = vpop.f32.mrf.mxu0
    %v1757 = vadd.f32 %v1716, %v1756
    %v1758 = vpop.f32.mrf.mxu0
    %v1759 = vpop.f32.mrf.mxu0
    %1760 = vdwg.mxu0
    %1761 = vmatprep.subr.bf16.mxu0 %v1324
    %1762 = vmatpush1.bf16.msra.mxu0 %v1323
    %1763 = vmatprep.subr.bf16.mxu0 %v1320
    %1764 = vmatpush1.bf16.msra.mxu0 %v1319
    %1765 = vmatprep.subr.bf16.mxu0 %v1316
    %1766 = vmatpush1.bf16.msra.mxu0 %v1315
    %1767 = vmatprep.subr.bf16.mxu0 %v1312
    %1768 = vmatpush1.bf16.msra.mxu0 %v1311
    %1769 = vmatprep.subr.bf16.mxu0 %v1308
    %1770 = vmatpush1.bf16.msra.mxu0 %v1307
    %1771 = vmatprep.subr.bf16.mxu0 %v1304
    %1772 = vmatpush1.bf16.msra.mxu0 %v1303
    %1773 = vmatprep.subr.bf16.mxu0 %v1300
    %1774 = vmatpush1.bf16.msra.mxu0 %v1299
    %1775 = vmatprep.subr.bf16.mxu0 %v1296
    %1776 = vmatpush1.bf16.msra.mxu0 %v1295
    %1777 = vmatprep.subr.bf16.mxu0 %v1356
    %1778 = vmatpush2.bf16.msra.mxu0 %v1355
    %1779 = vmatprep.subr.bf16.mxu0 %v1352
    %1780 = vmatpush2.bf16.msra.mxu0 %v1351
    %1781 = vmatprep.subr.bf16.mxu0 %v1348
    %1782 = vmatpush2.bf16.msra.mxu0 %v1347
    %1783 = vmatprep.subr.bf16.mxu0 %v1344
    %1784 = vmatpush2.bf16.msra.mxu0 %v1343
    %1785 = vmatprep.subr.bf16.mxu0 %v1340
    %1786 = vmatpush2.bf16.msra.mxu0 %v1339
    %1787 = vmatprep.subr.bf16.mxu0 %v1336
    %1788 = vmatpush2.bf16.msra.mxu0 %v1335
    %1789 = vmatprep.subr.bf16.mxu0 %v1332
    %1790 = vmatpush2.bf16.msra.mxu0 %v1331
    %1791 = vmatprep.subr.bf16.mxu0 %v1328
    %1792 = vmatpush2.bf16.msra.mxu0 %v1327
    %1793 = vmatprep.mubr.bf16.mxu0 %v388
    %1794 = vmatmul.mubr.bf16.gmra.mxu0 %v387
    %v1795 = vpop.f32.mrf.mxu0
    %v1796 = vadd.f32 %v1755, %v1795
    %v1797 = vpop.f32.mrf.mxu0
    %v1798 = vadd.f32 %v1757, %v1797
    %v1799 = vpop.f32.mrf.mxu0
    %v1800 = vpop.f32.mrf.mxu0
    %1801 = vdwg.mxu0
    %1802 = vmatprep.subr.bf16.mxu0 %v1388
    %1803 = vmatpush1.bf16.msra.mxu0 %v1387
    %1804 = vmatprep.subr.bf16.mxu0 %v1384
    %1805 = vmatpush1.bf16.msra.mxu0 %v1383
    %1806 = vmatprep.subr.bf16.mxu0 %v1380
    %1807 = vmatpush1.bf16.msra.mxu0 %v1379
    %1808 = vmatprep.subr.bf16.mxu0 %v1376
    %1809 = vmatpush1.bf16.msra.mxu0 %v1375
    %1810 = vmatprep.subr.bf16.mxu0 %v1372
    %1811 = vmatpush1.bf16.msra.mxu0 %v1371
    %1812 = vmatprep.subr.bf16.mxu0 %v1368
    %1813 = vmatpush1.bf16.msra.mxu0 %v1367
    %1814 = vmatprep.subr.bf16.mxu0 %v1364
    %1815 = vmatpush1.bf16.msra.mxu0 %v1363
    %1816 = vmatprep.subr.bf16.mxu0 %v1360
    %1817 = vmatpush1.bf16.msra.mxu0 %v1359
    %1818 = vmatprep.subr.bf16.mxu0 %v1420
    %1819 = vmatpush2.bf16.msra.mxu0 %v1419
    %1820 = vmatprep.subr.bf16.mxu0 %v1416
    %1821 = vmatpush2.bf16.msra.mxu0 %v1415
    %1822 = vmatprep.subr.bf16.mxu0 %v1412
    %1823 = vmatpush2.bf16.msra.mxu0 %v1411
    %1824 = vmatprep.subr.bf16.mxu0 %v1408
    %1825 = vmatpush2.bf16.msra.mxu0 %v1407
    %1826 = vmatprep.subr.bf16.mxu0 %v1404
    %1827 = vmatpush2.bf16.msra.mxu0 %v1403
    %1828 = vmatprep.subr.bf16.mxu0 %v1400
    %1829 = vmatpush2.bf16.msra.mxu0 %v1399
    %1830 = vmatprep.subr.bf16.mxu0 %v1396
    %1831 = vmatpush2.bf16.msra.mxu0 %v1395
    %1832 = vmatprep.subr.bf16.mxu0 %v1392
    %1833 = vmatpush2.bf16.msra.mxu0 %v1391
    %1834 = vmatprep.mubr.bf16.mxu0 %v390
    %1835 = vmatmul.mubr.bf16.gmra.mxu0 %v389
    %v1836 = vpop.f32.mrf.mxu0
    %v1837 = vadd.f32 %v1796, %v1836
    %v1838 = vpop.f32.mrf.mxu0
    %v1839 = vadd.f32 %v1798, %v1838
    %v1840 = vpop.f32.mrf.mxu0
    %v1841 = vpop.f32.mrf.mxu0
    %1842 = vdwg.mxu0
    %1843 = vmatprep.subr.bf16.mxu0 %v1198
    %1844 = vmatpush1.bf16.msra.mxu0 %v1197
    %1845 = vmatprep.subr.bf16.mxu0 %v1194
    %1846 = vmatpush1.bf16.msra.mxu0 %v1193
    %1847 = vmatprep.subr.bf16.mxu0 %v1190
    %1848 = vmatpush1.bf16.msra.mxu0 %v1189
    %1849 = vmatprep.subr.bf16.mxu0 %v1186
    %1850 = vmatpush1.bf16.msra.mxu0 %v1185
    %1851 = vmatprep.subr.bf16.mxu0 %v1182
    %1852 = vmatpush1.bf16.msra.mxu0 %v1181
    %1853 = vmatprep.subr.bf16.mxu0 %v1178
    %1854 = vmatpush1.bf16.msra.mxu0 %v1177
    %1855 = vmatprep.subr.bf16.mxu0 %v1174
    %1856 = vmatpush1.bf16.msra.mxu0 %v1173
    %1857 = vmatprep.subr.bf16.mxu0 %v1170
    %1858 = vmatpush1.bf16.msra.mxu0 %v1169
    %1859 = vmatprep.subr.bf16.mxu0 %v1230
    %1860 = vmatpush2.bf16.msra.mxu0 %v1229
    %1861 = vmatprep.subr.bf16.mxu0 %v1226
    %1862 = vmatpush2.bf16.msra.mxu0 %v1225
    %1863 = vmatprep.subr.bf16.mxu0 %v1222
    %1864 = vmatpush2.bf16.msra.mxu0 %v1221
    %1865 = vmatprep.subr.bf16.mxu0 %v1218
    %1866 = vmatpush2.bf16.msra.mxu0 %v1217
    %1867 = vmatprep.subr.bf16.mxu0 %v1214
    %1868 = vmatpush2.bf16.msra.mxu0 %v1213
    %1869 = vmatprep.subr.bf16.mxu0 %v1210
    %1870 = vmatpush2.bf16.msra.mxu0 %v1209
    %1871 = vmatprep.subr.bf16.mxu0 %v1206
    %1872 = vmatpush2.bf16.msra.mxu0 %v1205
    %1873 = vmatprep.subr.bf16.mxu0 %v1202
    %1874 = vmatpush2.bf16.msra.mxu0 %v1201
    %1875 = vmatprep.mubr.bf16.mxu0 %v384
    %1876 = vmatmul.mubr.bf16.gmra.mxu0 %v383
    %v1877 = vpop.f32.mrf.mxu0
    %v1878 = vadd.f32 %v362, %v1877
    %v1879 = vpop.f32.mrf.mxu0
    %v1880 = vadd.f32 %v366, %v1879
    %v1881 = vpop.f32.mrf.mxu0
    %v1882 = vpop.f32.mrf.mxu0
    %1883 = vdwg.mxu0
    %1884 = vmatprep.subr.bf16.mxu0 %v1262
    %1885 = vmatpush1.bf16.msra.mxu0 %v1261
    %1886 = vmatprep.subr.bf16.mxu0 %v1258
    %1887 = vmatpush1.bf16.msra.mxu0 %v1257
    %1888 = vmatprep.subr.bf16.mxu0 %v1254
    %1889 = vmatpush1.bf16.msra.mxu0 %v1253
    %1890 = vmatprep.subr.bf16.mxu0 %v1250
    %1891 = vmatpush1.bf16.msra.mxu0 %v1249
    %1892 = vmatprep.subr.bf16.mxu0 %v1246
    %1893 = vmatpush1.bf16.msra.mxu0 %v1245
    %1894 = vmatprep.subr.bf16.mxu0 %v1242
    %1895 = vmatpush1.bf16.msra.mxu0 %v1241
    %1896 = vmatprep.subr.bf16.mxu0 %v1238
    %1897 = vmatpush1.bf16.msra.mxu0 %v1237
    %1898 = vmatprep.subr.bf16.mxu0 %v1234
    %1899 = vmatpush1.bf16.msra.mxu0 %v1233
    %1900 = vmatprep.subr.bf16.mxu0 %v1294
    %1901 = vmatpush2.bf16.msra.mxu0 %v1293
    %1902 = vmatprep.subr.bf16.mxu0 %v1290
    %1903 = vmatpush2.bf16.msra.mxu0 %v1289
    %1904 = vmatprep.subr.bf16.mxu0 %v1286
    %1905 = vmatpush2.bf16.msra.mxu0 %v1285
    %1906 = vmatprep.subr.bf16.mxu0 %v1282
    %1907 = vmatpush2.bf16.msra.mxu0 %v1281
    %1908 = vmatprep.subr.bf16.mxu0 %v1278
    %1909 = vmatpush2.bf16.msra.mxu0 %v1277
    %1910 = vmatprep.subr.bf16.mxu0 %v1274
    %1911 = vmatpush2.bf16.msra.mxu0 %v1273
    %1912 = vmatprep.subr.bf16.mxu0 %v1270
    %1913 = vmatpush2.bf16.msra.mxu0 %v1269
    %1914 = vmatprep.subr.bf16.mxu0 %v1266
    %1915 = vmatpush2.bf16.msra.mxu0 %v1265
    %1916 = vmatprep.mubr.bf16.mxu0 %v386
    %1917 = vmatmul.mubr.bf16.gmra.mxu0 %v385
    %v1918 = vpop.f32.mrf.mxu0
    %v1919 = vadd.f32 %v1878, %v1918
    %v1920 = vpop.f32.mrf.mxu0
    %v1921 = vadd.f32 %v1880, %v1920
    %v1922 = vpop.f32.mrf.mxu0
    %v1923 = vpop.f32.mrf.mxu0
    %1924 = vdwg.mxu0
    %1925 = vmatprep.subr.bf16.mxu0 %v1326
    %1926 = vmatpush1.bf16.msra.mxu0 %v1325
    %1927 = vmatprep.subr.bf16.mxu0 %v1322
    %1928 = vmatpush1.bf16.msra.mxu0 %v1321
    %1929 = vmatprep.subr.bf16.mxu0 %v1318
    %1930 = vmatpush1.bf16.msra.mxu0 %v1317
    %1931 = vmatprep.subr.bf16.mxu0 %v1314
    %1932 = vmatpush1.bf16.msra.mxu0 %v1313
    %1933 = vmatprep.subr.bf16.mxu0 %v1310
    %1934 = vmatpush1.bf16.msra.mxu0 %v1309
    %1935 = vmatprep.subr.bf16.mxu0 %v1306
    %1936 = vmatpush1.bf16.msra.mxu0 %v1305
    %1937 = vmatprep.subr.bf16.mxu0 %v1302
    %1938 = vmatpush1.bf16.msra.mxu0 %v1301
    %1939 = vmatprep.subr.bf16.mxu0 %v1298
    %1940 = vmatpush1.bf16.msra.mxu0 %v1297
    %1941 = vmatprep.subr.bf16.mxu0 %v1358
    %1942 = vmatpush2.bf16.msra.mxu0 %v1357
    %1943 = vmatprep.subr.bf16.mxu0 %v1354
    %1944 = vmatpush2.bf16.msra.mxu0 %v1353
    %1945 = vmatprep.subr.bf16.mxu0 %v1350
    %1946 = vmatpush2.bf16.msra.mxu0 %v1349
    %1947 = vmatprep.subr.bf16.mxu0 %v1346
    %1948 = vmatpush2.bf16.msra.mxu0 %v1345
    %1949 = vmatprep.subr.bf16.mxu0 %v1342
    %1950 = vmatpush2.bf16.msra.mxu0 %v1341
    %1951 = vmatprep.subr.bf16.mxu0 %v1338
    %1952 = vmatpush2.bf16.msra.mxu0 %v1337
    %1953 = vmatprep.subr.bf16.mxu0 %v1334
    %1954 = vmatpush2.bf16.msra.mxu0 %v1333
    %1955 = vmatprep.subr.bf16.mxu0 %v1330
    %1956 = vmatpush2.bf16.msra.mxu0 %v1329
    %1957 = vmatprep.mubr.bf16.mxu0 %v388
    %1958 = vmatmul.mubr.bf16.gmra.mxu0 %v387
    %v1959 = vpop.f32.mrf.mxu0
    %v1960 = vadd.f32 %v1919, %v1959
    %v1961 = vpop.f32.mrf.mxu0
    %v1962 = vadd.f32 %v1921, %v1961
    %v1963 = vpop.f32.mrf.mxu0
    %v1964 = vpop.f32.mrf.mxu0
    %1965 = vdwg.mxu0
    %1966 = vmatprep.subr.bf16.mxu0 %v1390
    %1967 = vmatpush1.bf16.msra.mxu0 %v1389
    %1968 = vmatprep.subr.bf16.mxu0 %v1386
    %1969 = vmatpush1.bf16.msra.mxu0 %v1385
    %1970 = vmatprep.subr.bf16.mxu0 %v1382
    %1971 = vmatpush1.bf16.msra.mxu0 %v1381
    %1972 = vmatprep.subr.bf16.mxu0 %v1378
    %1973 = vmatpush1.bf16.msra.mxu0 %v1377
    %1974 = vmatprep.subr.bf16.mxu0 %v1374
    %1975 = vmatpush1.bf16.msra.mxu0 %v1373
    %1976 = vmatprep.subr.bf16.mxu0 %v1370
    %1977 = vmatpush1.bf16.msra.mxu0 %v1369
    %1978 = vmatprep.subr.bf16.mxu0 %v1366
    %1979 = vmatpush1.bf16.msra.mxu0 %v1365
    %1980 = vmatprep.subr.bf16.mxu0 %v1362
    %1981 = vmatpush1.bf16.msra.mxu0 %v1361
    %1982 = vmatprep.subr.bf16.mxu0 %v1422
    %1983 = vmatpush2.bf16.msra.mxu0 %v1421
    %1984 = vmatprep.subr.bf16.mxu0 %v1418
    %1985 = vmatpush2.bf16.msra.mxu0 %v1417
    %1986 = vmatprep.subr.bf16.mxu0 %v1414
    %1987 = vmatpush2.bf16.msra.mxu0 %v1413
    %1988 = vmatprep.subr.bf16.mxu0 %v1410
    %1989 = vmatpush2.bf16.msra.mxu0 %v1409
    %1990 = vmatprep.subr.bf16.mxu0 %v1406
    %1991 = vmatpush2.bf16.msra.mxu0 %v1405
    %1992 = vmatprep.subr.bf16.mxu0 %v1402
    %1993 = vmatpush2.bf16.msra.mxu0 %v1401
    %1994 = vmatprep.subr.bf16.mxu0 %v1398
    %1995 = vmatpush2.bf16.msra.mxu0 %v1397
    %1996 = vmatprep.subr.bf16.mxu0 %v1394
    %1997 = vmatpush2.bf16.msra.mxu0 %v1393
    %1998 = vmatprep.mubr.bf16.mxu0 %v390
    %1999 = vmatmul.mubr.bf16.gmra.mxu0 %v389
    %v2000 = vpop.f32.mrf.mxu0
    %v2001 = vadd.f32 %v1960, %v2000
    %v2002 = vpop.f32.mrf.mxu0
    %v2003 = vadd.f32 %v1962, %v2002
    %v2004 = vpop.f32.mrf.mxu0
    %v2005 = vpop.f32.mrf.mxu0
    %2006 = vdwg.mxu0
    %v2007 = vld [vmem:[#allocation7] sm:$0xff]
    %v2008 = vld [vmem:[#allocation7 + $0x8] sm:$0xff]
    %v2009 = vld [vmem:[#allocation7 + $0x10] sm:$0xff]
    %v2010 = vld [vmem:[#allocation7 + $0x18] sm:$0xff]
    %v2011 = vld [vmem:[#allocation7 + $0x20] sm:$0xff]
    %v2012 = vld [vmem:[#allocation7 + $0x28] sm:$0xff]
    %v2013 = vld [vmem:[#allocation7 + $0x30] sm:$0xff]
    %v2014 = vld [vmem:[#allocation7 + $0x38] sm:$0xff]
    %v2015 = vld [vmem:[#allocation7 + $0x40] sm:$0xff]
    %v2016 = vld [vmem:[#allocation7 + $0x48] sm:$0xff]
    %v2017 = vld [vmem:[#allocation7 + $0x50] sm:$0xff]
    %v2018 = vld [vmem:[#allocation7 + $0x58] sm:$0xff]
    %v2019 = vld [vmem:[#allocation7 + $0x60] sm:$0xff]
    %v2020 = vld [vmem:[#allocation7 + $0x68] sm:$0xff]
    %v2021 = vld [vmem:[#allocation7 + $0x70] sm:$0xff]
    %v2022 = vld [vmem:[#allocation7 + $0x78] sm:$0xff]
    %v2023 = vld [vmem:[#allocation7 + $0x80] sm:$0xff]
    %v2024 = vld [vmem:[#allocation7 + $0x88] sm:$0xff]
    %v2025 = vld [vmem:[#allocation7 + $0x90] sm:$0xff]
    %v2026 = vld [vmem:[#allocation7 + $0x98] sm:$0xff]
    %v2027 = vld [vmem:[#allocation7 + $0xa0] sm:$0xff]
    %v2028 = vld [vmem:[#allocation7 + $0xa8] sm:$0xff]
    %v2029 = vld [vmem:[#allocation7 + $0xb0] sm:$0xff]
    %v2030 = vld [vmem:[#allocation7 + $0xb8] sm:$0xff]
    %v2031 = vld [vmem:[#allocation7 + $0xc0] sm:$0xff]
    %v2032 = vld [vmem:[#allocation7 + $0xc8] sm:$0xff]
    %v2033 = vld [vmem:[#allocation7 + $0xd0] sm:$0xff]
    %v2034 = vld [vmem:[#allocation7 + $0xd8] sm:$0xff]
    %v2035 = vld [vmem:[#allocation7 + $0xe0] sm:$0xff]
    %v2036 = vld [vmem:[#allocation7 + $0xe8] sm:$0xff]
    %v2037 = vld [vmem:[#allocation7 + $0xf0] sm:$0xff]
    %v2038 = vld [vmem:[#allocation7 + $0xf8] sm:$0xff]
    %v2071 = vunpack.c.l.b16 %v2007
    %v2072 = vunpack.c.h.b16 %v2007
    %v2073 = vunpack.c.l.b16 %v2008
    %v2074 = vunpack.c.h.b16 %v2008
    %v2075 = vunpack.c.l.b16 %v2009
    %v2076 = vunpack.c.h.b16 %v2009
    %v2077 = vunpack.c.l.b16 %v2010
    %v2078 = vunpack.c.h.b16 %v2010
    %v2079 = vunpack.c.l.b16 %v2011
    %v2080 = vunpack.c.h.b16 %v2011
    %v2081 = vunpack.c.l.b16 %v2012
    %v2082 = vunpack.c.h.b16 %v2012
    %v2083 = vunpack.c.l.b16 %v2013
    %v2084 = vunpack.c.h.b16 %v2013
    %v2085 = vunpack.c.l.b16 %v2014
    %v2086 = vunpack.c.h.b16 %v2014
    %v2087 = vunpack.c.l.b16 %v2015
    %v2088 = vunpack.c.h.b16 %v2015
    %v2089 = vunpack.c.l.b16 %v2016
    %v2090 = vunpack.c.h.b16 %v2016
    %v2091 = vunpack.c.l.b16 %v2017
    %v2092 = vunpack.c.h.b16 %v2017
    %v2093 = vunpack.c.l.b16 %v2018
    %v2094 = vunpack.c.h.b16 %v2018
    %v2095 = vunpack.c.l.b16 %v2019
    %v2096 = vunpack.c.h.b16 %v2019
    %v2097 = vunpack.c.l.b16 %v2020
    %v2098 = vunpack.c.h.b16 %v2020
    %v2099 = vunpack.c.l.b16 %v2021
    %v2100 = vunpack.c.h.b16 %v2021
    %v2101 = vunpack.c.l.b16 %v2022
    %v2102 = vunpack.c.h.b16 %v2022
    %v2103 = vunpack.c.l.b16 %v2023
    %v2104 = vunpack.c.h.b16 %v2023
    %v2105 = vunpack.c.l.b16 %v2024
    %v2106 = vunpack.c.h.b16 %v2024
    %v2107 = vunpack.c.l.b16 %v2025
    %v2108 = vunpack.c.h.b16 %v2025
    %v2109 = vunpack.c.l.b16 %v2026
    %v2110 = vunpack.c.h.b16 %v2026
    %v2111 = vunpack.c.l.b16 %v2027
    %v2112 = vunpack.c.h.b16 %v2027
    %v2113 = vunpack.c.l.b16 %v2028
    %v2114 = vunpack.c.h.b16 %v2028
    %v2115 = vunpack.c.l.b16 %v2029
    %v2116 = vunpack.c.h.b16 %v2029
    %v2117 = vunpack.c.l.b16 %v2030
    %v2118 = vunpack.c.h.b16 %v2030
    %v2119 = vunpack.c.l.b16 %v2031
    %v2120 = vunpack.c.h.b16 %v2031
    %v2121 = vunpack.c.l.b16 %v2032
    %v2122 = vunpack.c.h.b16 %v2032
    %v2123 = vunpack.c.l.b16 %v2033
    %v2124 = vunpack.c.h.b16 %v2033
    %v2125 = vunpack.c.l.b16 %v2034
    %v2126 = vunpack.c.h.b16 %v2034
    %v2127 = vunpack.c.l.b16 %v2035
    %v2128 = vunpack.c.h.b16 %v2035
    %v2129 = vunpack.c.l.b16 %v2036
    %v2130 = vunpack.c.h.b16 %v2036
    %v2131 = vunpack.c.l.b16 %v2037
    %v2132 = vunpack.c.h.b16 %v2037
    %v2133 = vunpack.c.l.b16 %v2038
    %v2134 = vunpack.c.h.b16 %v2038
    %v2135 = vpack.c.b16 %v2075, %v2071
    %v2136 = vpack.c.b16 %v2076, %v2072
    %v2137 = vpack.c.b16 %v2077, %v2073
    %v2138 = vpack.c.b16 %v2078, %v2074
    %v2139 = vpack.c.b16 %v2083, %v2079
    %v2140 = vpack.c.b16 %v2084, %v2080
    %v2141 = vpack.c.b16 %v2085, %v2081
    %v2142 = vpack.c.b16 %v2086, %v2082
    %v2143 = vpack.c.b16 %v2091, %v2087
    %v2144 = vpack.c.b16 %v2092, %v2088
    %v2145 = vpack.c.b16 %v2093, %v2089
    %v2146 = vpack.c.b16 %v2094, %v2090
    %v2147 = vpack.c.b16 %v2099, %v2095
    %v2148 = vpack.c.b16 %v2100, %v2096
    %v2149 = vpack.c.b16 %v2101, %v2097
    %v2150 = vpack.c.b16 %v2102, %v2098
    %v2151 = vpack.c.b16 %v2107, %v2103
    %v2152 = vpack.c.b16 %v2108, %v2104
    %v2153 = vpack.c.b16 %v2109, %v2105
    %v2154 = vpack.c.b16 %v2110, %v2106
    %v2155 = vpack.c.b16 %v2115, %v2111
    %v2156 = vpack.c.b16 %v2116, %v2112
    %v2157 = vpack.c.b16 %v2117, %v2113
    %v2158 = vpack.c.b16 %v2118, %v2114
    %v2159 = vpack.c.b16 %v2123, %v2119
    %v2160 = vpack.c.b16 %v2124, %v2120
    %v2161 = vpack.c.b16 %v2125, %v2121
    %v2162 = vpack.c.b16 %v2126, %v2122
    %v2163 = vpack.c.b16 %v2131, %v2127
    %v2164 = vpack.c.b16 %v2132, %v2128
    %v2165 = vpack.c.b16 %v2133, %v2129
    %v2166 = vpack.c.b16 %v2134, %v2130
    %2199 = vmatprep.subr.bf16.mxu0 %v2164
    %2200 = vmatpush1.bf16.msra.mxu0 %v2163
    %2201 = vmatprep.subr.bf16.mxu0 %v2160
    %2202 = vmatpush1.bf16.msra.mxu0 %v2159
    %2203 = vmatprep.subr.bf16.mxu0 %v2156
    %2204 = vmatpush1.bf16.msra.mxu0 %v2155
    %2205 = vmatprep.subr.bf16.mxu0 %v2152
    %2206 = vmatpush1.bf16.msra.mxu0 %v2151
    %2207 = vmatprep.subr.bf16.mxu0 %v2148
    %2208 = vmatpush1.bf16.msra.mxu0 %v2147
    %2209 = vmatprep.subr.bf16.mxu0 %v2144
    %2210 = vmatpush1.bf16.msra.mxu0 %v2143
    %2211 = vmatprep.subr.bf16.mxu0 %v2140
    %2212 = vmatpush1.bf16.msra.mxu0 %v2139
    %2213 = vmatprep.subr.bf16.mxu0 %v2136
    %2214 = vmatpush1.bf16.msra.mxu0 %v2135
    %2215 = vmatprep.subr.bf16.mxu0 0
    %2216 = vmatpush2.bf16.msra.mxu0 0
    %2217 = vmatprep.subr.bf16.mxu0 0
    %2218 = vmatpush2.bf16.msra.mxu0 0
    %2219 = vmatprep.subr.bf16.mxu0 0
    %2220 = vmatpush2.bf16.msra.mxu0 0
    %2221 = vmatprep.subr.bf16.mxu0 0
    %2222 = vmatpush2.bf16.msra.mxu0 0
    %2223 = vmatprep.subr.bf16.mxu0 0
    %2224 = vmatpush2.bf16.msra.mxu0 0
    %2225 = vmatprep.subr.bf16.mxu0 0
    %2226 = vmatpush2.bf16.msra.mxu0 0
    %2227 = vmatprep.subr.bf16.mxu0 0
    %2228 = vmatpush2.bf16.msra.mxu0 0
    %2229 = vmatprep.subr.bf16.mxu0 0
    %2230 = vmatpush2.bf16.msra.mxu0 0
    %2231 = vmatprep.mubr.bf16.mxu0 0
    %2232 = vmatmul.mubr.bf16.gmra.mxu0 0
    %v2233 = vpop.f32.mrf.mxu0
    %v2234 = vadd.f32 0.0, %v2233
    %v2235 = vpop.f32.mrf.mxu0
    %v2236 = vadd.f32 0.0, %v2235
    %v2237 = vpop.f32.mrf.mxu0
    %v2238 = vpop.f32.mrf.mxu0
    %2239 = vdwg.mxu0
    %2240 = vmatprep.subr.bf16.mxu0 %v2166
    %2241 = vmatpush1.bf16.msra.mxu0 %v2165
    %2242 = vmatprep.subr.bf16.mxu0 %v2162
    %2243 = vmatpush1.bf16.msra.mxu0 %v2161
    %2244 = vmatprep.subr.bf16.mxu0 %v2158
    %2245 = vmatpush1.bf16.msra.mxu0 %v2157
    %2246 = vmatprep.subr.bf16.mxu0 %v2154
    %2247 = vmatpush1.bf16.msra.mxu0 %v2153
    %2248 = vmatprep.subr.bf16.mxu0 %v2150
    %2249 = vmatpush1.bf16.msra.mxu0 %v2149
    %2250 = vmatprep.subr.bf16.mxu0 %v2146
    %2251 = vmatpush1.bf16.msra.mxu0 %v2145
    %2252 = vmatprep.subr.bf16.mxu0 %v2142
    %2253 = vmatpush1.bf16.msra.mxu0 %v2141
    %2254 = vmatprep.subr.bf16.mxu0 %v2138
    %2255 = vmatpush1.bf16.msra.mxu0 %v2137
    %2256 = vmatprep.subr.bf16.mxu0 0
    %2257 = vmatpush2.bf16.msra.mxu0 0
    %2258 = vmatprep.subr.bf16.mxu0 0
    %2259 = vmatpush2.bf16.msra.mxu0 0
    %2260 = vmatprep.subr.bf16.mxu0 0
    %2261 = vmatpush2.bf16.msra.mxu0 0
    %2262 = vmatprep.subr.bf16.mxu0 0
    %2263 = vmatpush2.bf16.msra.mxu0 0
    %2264 = vmatprep.subr.bf16.mxu0 0
    %2265 = vmatpush2.bf16.msra.mxu0 0
    %2266 = vmatprep.subr.bf16.mxu0 0
    %2267 = vmatpush2.bf16.msra.mxu0 0
    %2268 = vmatprep.subr.bf16.mxu0 0
    %2269 = vmatpush2.bf16.msra.mxu0 0
    %2270 = vmatprep.subr.bf16.mxu0 0
    %2271 = vmatpush2.bf16.msra.mxu0 0
    %2272 = vmatprep.mubr.bf16.mxu0 0
    %2273 = vmatmul.mubr.bf16.gmra.mxu0 0
    %v2274 = vpop.f32.mrf.mxu0
    %v2275 = vadd.f32 0.0, %v2274
    %v2276 = vpop.f32.mrf.mxu0
    %v2277 = vadd.f32 0.0, %v2276
    %v2278 = vpop.f32.mrf.mxu0
    %v2279 = vpop.f32.mrf.mxu0
    %2280 = vdwg.mxu0
    %v2281 = vadd.f32 %v1837, %v2234
    %v2282 = vadd.f32 %v1839, %v2236
    %v2283 = vadd.f32 %v2001, %v2275
    %v2284 = vadd.f32 %v2003, %v2277
    %v2285 = vxor.u32 %v2281, 2147483648
    %v2286 = vmul.f32 %v2285, 1.442695
    %v2287 = vpow.pop %v2286
    %v2288 = vadd.f32 %v2287, 1.0
    %v2289 = vrcp.pop %v2288
    %v2290 = vmul.f32 1.0, %v2289
    %v2291 = vxor.u32 %v2282, 2147483648
    %v2292 = vmul.f32 %v2291, 1.442695
    %v2293 = vpow.pop %v2292
    %v2294 = vadd.f32 %v2293, 1.0
    %v2295 = vrcp.pop %v2294
    %v2296 = vmul.f32 1.0, %v2295
    %v2297 = vtanh.pop %v2283
    %v2298 = vxor.u32 %v2284, 2147483648
    %v2299 = vmul.f32 %v2298, 1.442695
    %v2300 = vpow.pop %v2299
    %v2301 = vadd.f32 %v2300, 1.0
    %v2302 = vrcp.pop %v2301
    %v2303 = vmul.f32 1.0, %v2302
    %v2304 = vmul.f32 %v2296, 0.0
    %v2305 = vmul.f32 %v2290, %v2297
    %v2306 = vadd.f32 %v2304, %v2305
    %v2307 = vtanh.pop %v2306
    %v2308 = vmul.f32 %v2303, %v2307
    %v2309 = vpack.c.bf16 %v2308, %v2308
    %2310 = vmatprep.subr.bf16.mxu0 %v2164
    %2311 = vmatpush1.bf16.msra.mxu0 %v2163
    %2312 = vmatprep.subr.bf16.mxu0 %v2160
    %2313 = vmatpush1.bf16.msra.mxu0 %v2159
    %2314 = vmatprep.subr.bf16.mxu0 %v2156
    %2315 = vmatpush1.bf16.msra.mxu0 %v2155
    %2316 = vmatprep.subr.bf16.mxu0 %v2152
    %2317 = vmatpush1.bf16.msra.mxu0 %v2151
    %2318 = vmatprep.subr.bf16.mxu0 %v2148
    %2319 = vmatpush1.bf16.msra.mxu0 %v2147
    %2320 = vmatprep.subr.bf16.mxu0 %v2144
    %2321 = vmatpush1.bf16.msra.mxu0 %v2143
    %2322 = vmatprep.subr.bf16.mxu0 %v2140
    %2323 = vmatpush1.bf16.msra.mxu0 %v2139
    %2324 = vmatprep.subr.bf16.mxu0 %v2136
    %2325 = vmatpush1.bf16.msra.mxu0 %v2135
    %2326 = vmatprep.subr.bf16.mxu0 0
    %2327 = vmatpush2.bf16.msra.mxu0 0
    %2328 = vmatprep.subr.bf16.mxu0 0
    %2329 = vmatpush2.bf16.msra.mxu0 0
    %2330 = vmatprep.subr.bf16.mxu0 0
    %2331 = vmatpush2.bf16.msra.mxu0 0
    %2332 = vmatprep.subr.bf16.mxu0 0
    %2333 = vmatpush2.bf16.msra.mxu0 0
    %2334 = vmatprep.subr.bf16.mxu0 0
    %2335 = vmatpush2.bf16.msra.mxu0 0
    %2336 = vmatprep.subr.bf16.mxu0 0
    %2337 = vmatpush2.bf16.msra.mxu0 0
    %2338 = vmatprep.subr.bf16.mxu0 0
    %2339 = vmatpush2.bf16.msra.mxu0 0
    %2340 = vmatprep.subr.bf16.mxu0 0
    %2341 = vmatpush2.bf16.msra.mxu0 0
    %2342 = vmatprep.mubr.bf16.mxu0 0
    %2343 = vmatmul.mubr.bf16.gmra.mxu0 %v2309
    %v2344 = vpop.f32.mrf.mxu0
    %v2345 = vadd.f32 0.0, %v2344
    %v2346 = vpop.f32.mrf.mxu0
    %v2347 = vadd.f32 0.0, %v2346
    %v2348 = vpop.f32.mrf.mxu0
    %v2349 = vpop.f32.mrf.mxu0
    %2350 = vdwg.mxu0
    %2351 = vmatprep.subr.bf16.mxu0 %v2166
    %2352 = vmatpush1.bf16.msra.mxu0 %v2165
    %2353 = vmatprep.subr.bf16.mxu0 %v2162
    %2354 = vmatpush1.bf16.msra.mxu0 %v2161
    %2355 = vmatprep.subr.bf16.mxu0 %v2158
    %2356 = vmatpush1.bf16.msra.mxu0 %v2157
    %2357 = vmatprep.subr.bf16.mxu0 %v2154
    %2358 = vmatpush1.bf16.msra.mxu0 %v2153
    %2359 = vmatprep.subr.bf16.mxu0 %v2150
    %2360 = vmatpush1.bf16.msra.mxu0 %v2149
    %2361 = vmatprep.subr.bf16.mxu0 %v2146
    %2362 = vmatpush1.bf16.msra.mxu0 %v2145
    %2363 = vmatprep.subr.bf16.mxu0 %v2142
    %2364 = vmatpush1.bf16.msra.mxu0 %v2141
    %2365 = vmatprep.subr.bf16.mxu0 %v2138
    %2366 = vmatpush1.bf16.msra.mxu0 %v2137
    %2367 = vmatprep.subr.bf16.mxu0 0
    %2368 = vmatpush2.bf16.msra.mxu0 0
    %2369 = vmatprep.subr.bf16.mxu0 0
    %2370 = vmatpush2.bf16.msra.mxu0 0
    %2371 = vmatprep.subr.bf16.mxu0 0
    %2372 = vmatpush2.bf16.msra.mxu0 0
    %2373 = vmatprep.subr.bf16.mxu0 0
    %2374 = vmatpush2.bf16.msra.mxu0 0
    %2375 = vmatprep.subr.bf16.mxu0 0
    %2376 = vmatpush2.bf16.msra.mxu0 0
    %2377 = vmatprep.subr.bf16.mxu0 0
    %2378 = vmatpush2.bf16.msra.mxu0 0
    %2379 = vmatprep.subr.bf16.mxu0 0
    %2380 = vmatpush2.bf16.msra.mxu0 0
    %2381 = vmatprep.subr.bf16.mxu0 0
    %2382 = vmatpush2.bf16.msra.mxu0 0
    %2383 = vmatprep.mubr.bf16.mxu0 0
    %2384 = vmatmul.mubr.bf16.gmra.mxu0 %v2309
    %v2385 = vpop.f32.mrf.mxu0
    %v2386 = vadd.f32 0.0, %v2385
    %v2387 = vpop.f32.mrf.mxu0
    %v2388 = vadd.f32 0.0, %v2387
    %v2389 = vpop.f32.mrf.mxu0
    %v2390 = vpop.f32.mrf.mxu0
    %2391 = vdwg.mxu0
    %v2396 = vrot.slane %v2345, 7
    %v2397 = vrot.slane %v2347, 7
    %v2398 = vrot.slane %v2386, 7
    %v2399 = vrot.slane %v2388, 7
    %v2404 = vadd.f32 %v1837, %v2396
    %v2405 = vadd.f32 %v1839, %v2397
    %v2406 = vadd.f32 %v2001, %v2398
    %v2407 = vadd.f32 %v2003, %v2399
    %v2408 = vxor.u32 %v2404, 2147483648
    %v2409 = vmul.f32 %v2408, 1.442695
    %v2410 = vpow.pop %v2409
    %v2411 = vadd.f32 %v2410, 1.0
    %v2412 = vrcp.pop %v2411
    %v2413 = vmul.f32 1.0, %v2412
    %v2414 = vxor.u32 %v2405, 2147483648
    %v2415 = vmul.f32 %v2414, 1.442695
    %v2416 = vpow.pop %v2415
    %v2417 = vadd.f32 %v2416, 1.0
    %v2418 = vrcp.pop %v2417
    %v2419 = vmul.f32 1.0, %v2418
    %v2420 = vtanh.pop %v2406
    %v2421 = vxor.u32 %v2407, 2147483648
    %v2422 = vmul.f32 %v2421, 1.442695
    %v2423 = vpow.pop %v2422
    %v2424 = vadd.f32 %v2423, 1.0
    %v2425 = vrcp.pop %v2424
    %v2426 = vmul.f32 1.0, %v2425
    %v2428 = vrot.slane %v2306, 7
    %v2430 = vmul.f32 %v2419, %v2428
    %v2431 = vmul.f32 %v2413, %v2420
    %v2432 = vadd.f32 %v2430, %v2431
    %v2433 = vtanh.pop %v2432
    %v2434 = vmul.f32 %v2426, %v2433
    %v2435 = vpack.c.bf16 %v2434, %v2434
    %v2437 = vshrl.u32 %v2435, 16
    %2440 = vmatprep.subr.bf16.mxu0 %v2164
    %2441 = vmatpush1.bf16.msra.mxu0 %v2163
    %2442 = vmatprep.subr.bf16.mxu0 %v2160
    %2443 = vmatpush1.bf16.msra.mxu0 %v2159
    %2444 = vmatprep.subr.bf16.mxu0 %v2156
    %2445 = vmatpush1.bf16.msra.mxu0 %v2155
    %2446 = vmatprep.subr.bf16.mxu0 %v2152
    %2447 = vmatpush1.bf16.msra.mxu0 %v2151
    %2448 = vmatprep.subr.bf16.mxu0 %v2148
    %2449 = vmatpush1.bf16.msra.mxu0 %v2147
    %2450 = vmatprep.subr.bf16.mxu0 %v2144
    %2451 = vmatpush1.bf16.msra.mxu0 %v2143
    %2452 = vmatprep.subr.bf16.mxu0 %v2140
    %2453 = vmatpush1.bf16.msra.mxu0 %v2139
    %2454 = vmatprep.subr.bf16.mxu0 %v2136
    %2455 = vmatpush1.bf16.msra.mxu0 %v2135
    %2456 = vmatprep.subr.bf16.mxu0 0
    %2457 = vmatpush2.bf16.msra.mxu0 0
    %2458 = vmatprep.subr.bf16.mxu0 0
    %2459 = vmatpush2.bf16.msra.mxu0 0
    %2460 = vmatprep.subr.bf16.mxu0 0
    %2461 = vmatpush2.bf16.msra.mxu0 0
    %2462 = vmatprep.subr.bf16.mxu0 0
    %2463 = vmatpush2.bf16.msra.mxu0 0
    %2464 = vmatprep.subr.bf16.mxu0 0
    %2465 = vmatpush2.bf16.msra.mxu0 0
    %2466 = vmatprep.subr.bf16.mxu0 0
    %2467 = vmatpush2.bf16.msra.mxu0 0
    %2468 = vmatprep.subr.bf16.mxu0 0
    %2469 = vmatpush2.bf16.msra.mxu0 0
    %2470 = vmatprep.subr.bf16.mxu0 0
    %2471 = vmatpush2.bf16.msra.mxu0 0
    %2472 = vmatprep.mubr.bf16.mxu0 0
    %2473 = vmatmul.mubr.bf16.gmra.mxu0 %v2437
    %v2474 = vpop.f32.mrf.mxu0
    %v2475 = vadd.f32 0.0, %v2474
    %v2476 = vpop.f32.mrf.mxu0
    %v2477 = vadd.f32 0.0, %v2476
    %v2478 = vpop.f32.mrf.mxu0
    %v2479 = vpop.f32.mrf.mxu0
    %2480 = vdwg.mxu0
    %2481 = vmatprep.subr.bf16.mxu0 %v2166
    %2482 = vmatpush1.bf16.msra.mxu0 %v2165
    %2483 = vmatprep.subr.bf16.mxu0 %v2162
    %2484 = vmatpush1.bf16.msra.mxu0 %v2161
    %2485 = vmatprep.subr.bf16.mxu0 %v2158
    %2486 = vmatpush1.bf16.msra.mxu0 %v2157
    %2487 = vmatprep.subr.bf16.mxu0 %v2154
    %2488 = vmatpush1.bf16.msra.mxu0 %v2153
    %2489 = vmatprep.subr.bf16.mxu0 %v2150
    %2490 = vmatpush1.bf16.msra.mxu0 %v2149
    %2491 = vmatprep.subr.bf16.mxu0 %v2146
    %2492 = vmatpush1.bf16.msra.mxu0 %v2145
    %2493 = vmatprep.subr.bf16.mxu0 %v2142
    %2494 = vmatpush1.bf16.msra.mxu0 %v2141
    %2495 = vmatprep.subr.bf16.mxu0 %v2138
    %2496 = vmatpush1.bf16.msra.mxu0 %v2137
    %2497 = vmatprep.subr.bf16.mxu0 0
    %2498 = vmatpush2.bf16.msra.mxu0 0
    %2499 = vmatprep.subr.bf16.mxu0 0
    %2500 = vmatpush2.bf16.msra.mxu0 0
    %2501 = vmatprep.subr.bf16.mxu0 0
    %2502 = vmatpush2.bf16.msra.mxu0 0
    %2503 = vmatprep.subr.bf16.mxu0 0
    %2504 = vmatpush2.bf16.msra.mxu0 0
    %2505 = vmatprep.subr.bf16.mxu0 0
    %2506 = vmatpush2.bf16.msra.mxu0 0
    %2507 = vmatprep.subr.bf16.mxu0 0
    %2508 = vmatpush2.bf16.msra.mxu0 0
    %2509 = vmatprep.subr.bf16.mxu0 0
    %2510 = vmatpush2.bf16.msra.mxu0 0
    %2511 = vmatprep.subr.bf16.mxu0 0
    %2512 = vmatpush2.bf16.msra.mxu0 0
    %2513 = vmatprep.mubr.bf16.mxu0 0
    %2514 = vmatmul.mubr.bf16.gmra.mxu0 %v2437
    %v2515 = vpop.f32.mrf.mxu0
    %v2516 = vadd.f32 0.0, %v2515
    %v2517 = vpop.f32.mrf.mxu0
    %v2518 = vadd.f32 0.0, %v2517
    %v2519 = vpop.f32.mrf.mxu0
    %v2520 = vpop.f32.mrf.mxu0
    %2521 = vdwg.mxu0
    %v2526 = vrot.slane %v2475, 6
    %v2527 = vrot.slane %v2477, 6
    %v2528 = vrot.slane %v2516, 6
    %v2529 = vrot.slane %v2518, 6
    %v2534 = vadd.f32 %v1837, %v2526
    %v2535 = vadd.f32 %v1839, %v2527
    %v2536 = vadd.f32 %v2001, %v2528
    %v2537 = vadd.f32 %v2003, %v2529
    %v2538 = vxor.u32 %v2534, 2147483648
    %v2539 = vmul.f32 %v2538, 1.442695
    %v2540 = vpow.pop %v2539
    %v2541 = vadd.f32 %v2540, 1.0
    %v2542 = vrcp.pop %v2541
    %v2543 = vmul.f32 1.0, %v2542
    %v2544 = vxor.u32 %v2535, 2147483648
    %v2545 = vmul.f32 %v2544, 1.442695
    %v2546 = vpow.pop %v2545
    %v2547 = vadd.f32 %v2546, 1.0
    %v2548 = vrcp.pop %v2547
    %v2549 = vmul.f32 1.0, %v2548
    %v2550 = vtanh.pop %v2536
    %v2551 = vxor.u32 %v2537, 2147483648
    %v2552 = vmul.f32 %v2551, 1.442695
    %v2553 = vpow.pop %v2552
    %v2554 = vadd.f32 %v2553, 1.0
    %v2555 = vrcp.pop %v2554
    %v2556 = vmul.f32 1.0, %v2555
    %v2558 = vrot.slane %v2432, 7
    %v2560 = vmul.f32 %v2549, %v2558
    %v2561 = vmul.f32 %v2543, %v2550
    %v2562 = vadd.f32 %v2560, %v2561
    %v2563 = vtanh.pop %v2562
    %v2564 = vmul.f32 %v2556, %v2563
    %v2565 = vpack.c.bf16 %v2564, %v2564
    %v2567 = vrot.slane %v2565, 1
    %2569 = vmatprep.subr.bf16.mxu0 %v2164
    %2570 = vmatpush1.bf16.msra.mxu0 %v2163
    %2571 = vmatprep.subr.bf16.mxu0 %v2160
    %2572 = vmatpush1.bf16.msra.mxu0 %v2159
    %2573 = vmatprep.subr.bf16.mxu0 %v2156
    %2574 = vmatpush1.bf16.msra.mxu0 %v2155
    %2575 = vmatprep.subr.bf16.mxu0 %v2152
    %2576 = vmatpush1.bf16.msra.mxu0 %v2151
    %2577 = vmatprep.subr.bf16.mxu0 %v2148
    %2578 = vmatpush1.bf16.msra.mxu0 %v2147
    %2579 = vmatprep.subr.bf16.mxu0 %v2144
    %2580 = vmatpush1.bf16.msra.mxu0 %v2143
    %2581 = vmatprep.subr.bf16.mxu0 %v2140
    %2582 = vmatpush1.bf16.msra.mxu0 %v2139
    %2583 = vmatprep.subr.bf16.mxu0 %v2136
    %2584 = vmatpush1.bf16.msra.mxu0 %v2135
    %2585 = vmatprep.subr.bf16.mxu0 0
    %2586 = vmatpush2.bf16.msra.mxu0 0
    %2587 = vmatprep.subr.bf16.mxu0 0
    %2588 = vmatpush2.bf16.msra.mxu0 0
    %2589 = vmatprep.subr.bf16.mxu0 0
    %2590 = vmatpush2.bf16.msra.mxu0 0
    %2591 = vmatprep.subr.bf16.mxu0 0
    %2592 = vmatpush2.bf16.msra.mxu0 0
    %2593 = vmatprep.subr.bf16.mxu0 0
    %2594 = vmatpush2.bf16.msra.mxu0 0
    %2595 = vmatprep.subr.bf16.mxu0 0
    %2596 = vmatpush2.bf16.msra.mxu0 0
    %2597 = vmatprep.subr.bf16.mxu0 0
    %2598 = vmatpush2.bf16.msra.mxu0 0
    %2599 = vmatprep.subr.bf16.mxu0 0
    %2600 = vmatpush2.bf16.msra.mxu0 0
    %2601 = vmatprep.mubr.bf16.mxu0 0
    %2602 = vmatmul.mubr.bf16.gmra.mxu0 %v2567
    %v2603 = vpop.f32.mrf.mxu0
    %v2604 = vadd.f32 0.0, %v2603
    %v2605 = vpop.f32.mrf.mxu0
    %v2606 = vadd.f32 0.0, %v2605
    %v2607 = vpop.f32.mrf.mxu0
    %v2608 = vpop.f32.mrf.mxu0
    %2609 = vdwg.mxu0
    %2610 = vmatprep.subr.bf16.mxu0 %v2166
    %2611 = vmatpush1.bf16.msra.mxu0 %v2165
    %2612 = vmatprep.subr.bf16.mxu0 %v2162
    %2613 = vmatpush1.bf16.msra.mxu0 %v2161
    %2614 = vmatprep.subr.bf16.mxu0 %v2158
    %2615 = vmatpush1.bf16.msra.mxu0 %v2157
    %2616 = vmatprep.subr.bf16.mxu0 %v2154
    %2617 = vmatpush1.bf16.msra.mxu0 %v2153
    %2618 = vmatprep.subr.bf16.mxu0 %v2150
    %2619 = vmatpush1.bf16.msra.mxu0 %v2149
    %2620 = vmatprep.subr.bf16.mxu0 %v2146
    %2621 = vmatpush1.bf16.msra.mxu0 %v2145
    %2622 = vmatprep.subr.bf16.mxu0 %v2142
    %2623 = vmatpush1.bf16.msra.mxu0 %v2141
    %2624 = vmatprep.subr.bf16.mxu0 %v2138
    %2625 = vmatpush1.bf16.msra.mxu0 %v2137
    %2626 = vmatprep.subr.bf16.mxu0 0
    %2627 = vmatpush2.bf16.msra.mxu0 0
    %2628 = vmatprep.subr.bf16.mxu0 0
    %2629 = vmatpush2.bf16.msra.mxu0 0
    %2630 = vmatprep.subr.bf16.mxu0 0
    %2631 = vmatpush2.bf16.msra.mxu0 0
    %2632 = vmatprep.subr.bf16.mxu0 0
    %2633 = vmatpush2.bf16.msra.mxu0 0
    %2634 = vmatprep.subr.bf16.mxu0 0
    %2635 = vmatpush2.bf16.msra.mxu0 0
    %2636 = vmatprep.subr.bf16.mxu0 0
    %2637 = vmatpush2.bf16.msra.mxu0 0
    %2638 = vmatprep.subr.bf16.mxu0 0
    %2639 = vmatpush2.bf16.msra.mxu0 0
    %2640 = vmatprep.subr.bf16.mxu0 0
    %2641 = vmatpush2.bf16.msra.mxu0 0
    %2642 = vmatprep.mubr.bf16.mxu0 0
    %2643 = vmatmul.mubr.bf16.gmra.mxu0 %v2567
    %v2644 = vpop.f32.mrf.mxu0
    %v2645 = vadd.f32 0.0, %v2644
    %v2646 = vpop.f32.mrf.mxu0
    %v2647 = vadd.f32 0.0, %v2646
    %v2648 = vpop.f32.mrf.mxu0
    %v2649 = vpop.f32.mrf.mxu0
    %2650 = vdwg.mxu0
    %v2655 = vrot.slane %v2604, 5
    %v2656 = vrot.slane %v2606, 5
    %v2657 = vrot.slane %v2645, 5
    %v2658 = vrot.slane %v2647, 5
    %v2663 = vadd.f32 %v1837, %v2655
    %v2664 = vadd.f32 %v1839, %v2656
    %v2665 = vadd.f32 %v2001, %v2657
    %v2666 = vadd.f32 %v2003, %v2658
    %v2667 = vxor.u32 %v2663, 2147483648
    %v2668 = vmul.f32 %v2667, 1.442695
    %v2669 = vpow.pop %v2668
    %v2670 = vadd.f32 %v2669, 1.0
    %v2671 = vrcp.pop %v2670
    %v2672 = vmul.f32 1.0, %v2671
    %v2673 = vxor.u32 %v2664, 2147483648
    %v2674 = vmul.f32 %v2673, 1.442695
    %v2675 = vpow.pop %v2674
    %v2676 = vadd.f32 %v2675, 1.0
    %v2677 = vrcp.pop %v2676
    %v2678 = vmul.f32 1.0, %v2677
    %v2679 = vtanh.pop %v2665
    %v2680 = vxor.u32 %v2666, 2147483648
    %v2681 = vmul.f32 %v2680, 1.442695
    %v2682 = vpow.pop %v2681
    %v2683 = vadd.f32 %v2682, 1.0
    %v2684 = vrcp.pop %v2683
    %v2685 = vmul.f32 1.0, %v2684
    %v2687 = vrot.slane %v2562, 7
    %v2689 = vmul.f32 %v2678, %v2687
    %v2690 = vmul.f32 %v2672, %v2679
    %v2691 = vadd.f32 %v2689, %v2690
    %v2692 = vtanh.pop %v2691
    %v2693 = vmul.f32 %v2685, %v2692
    %v2694 = vpack.c.bf16 %v2693, %v2693
    %v2696 = vshrl.u32 %v2694, 16
    %v2698 = vrot.slane %v2696, 1
    %2700 = vmatprep.subr.bf16.mxu0 %v2164
    %2701 = vmatpush1.bf16.msra.mxu0 %v2163
    %2702 = vmatprep.subr.bf16.mxu0 %v2160
    %2703 = vmatpush1.bf16.msra.mxu0 %v2159
    %2704 = vmatprep.subr.bf16.mxu0 %v2156
    %2705 = vmatpush1.bf16.msra.mxu0 %v2155
    %2706 = vmatprep.subr.bf16.mxu0 %v2152
    %2707 = vmatpush1.bf16.msra.mxu0 %v2151
    %2708 = vmatprep.subr.bf16.mxu0 %v2148
    %2709 = vmatpush1.bf16.msra.mxu0 %v2147
    %2710 = vmatprep.subr.bf16.mxu0 %v2144
    %2711 = vmatpush1.bf16.msra.mxu0 %v2143
    %2712 = vmatprep.subr.bf16.mxu0 %v2140
    %2713 = vmatpush1.bf16.msra.mxu0 %v2139
    %2714 = vmatprep.subr.bf16.mxu0 %v2136
    %2715 = vmatpush1.bf16.msra.mxu0 %v2135
    %2716 = vmatprep.subr.bf16.mxu0 0
    %2717 = vmatpush2.bf16.msra.mxu0 0
    %2718 = vmatprep.subr.bf16.mxu0 0
    %2719 = vmatpush2.bf16.msra.mxu0 0
    %2720 = vmatprep.subr.bf16.mxu0 0
    %2721 = vmatpush2.bf16.msra.mxu0 0
    %2722 = vmatprep.subr.bf16.mxu0 0
    %2723 = vmatpush2.bf16.msra.mxu0 0
    %2724 = vmatprep.subr.bf16.mxu0 0
    %2725 = vmatpush2.bf16.msra.mxu0 0
    %2726 = vmatprep.subr.bf16.mxu0 0
    %2727 = vmatpush2.bf16.msra.mxu0 0
    %2728 = vmatprep.subr.bf16.mxu0 0
    %2729 = vmatpush2.bf16.msra.mxu0 0
    %2730 = vmatprep.subr.bf16.mxu0 0
    %2731 = vmatpush2.bf16.msra.mxu0 0
    %2732 = vmatprep.mubr.bf16.mxu0 0
    %2733 = vmatmul.mubr.bf16.gmra.mxu0 %v2698
    %v2734 = vpop.f32.mrf.mxu0
    %v2735 = vadd.f32 0.0, %v2734
    %v2736 = vpop.f32.mrf.mxu0
    %v2737 = vadd.f32 0.0, %v2736
    %v2738 = vpop.f32.mrf.mxu0
    %v2739 = vpop.f32.mrf.mxu0
    %2740 = vdwg.mxu0
    %2741 = vmatprep.subr.bf16.mxu0 %v2166
    %2742 = vmatpush1.bf16.msra.mxu0 %v2165
    %2743 = vmatprep.subr.bf16.mxu0 %v2162
    %2744 = vmatpush1.bf16.msra.mxu0 %v2161
    %2745 = vmatprep.subr.bf16.mxu0 %v2158
    %2746 = vmatpush1.bf16.msra.mxu0 %v2157
    %2747 = vmatprep.subr.bf16.mxu0 %v2154
    %2748 = vmatpush1.bf16.msra.mxu0 %v2153
    %2749 = vmatprep.subr.bf16.mxu0 %v2150
    %2750 = vmatpush1.bf16.msra.mxu0 %v2149
    %2751 = vmatprep.subr.bf16.mxu0 %v2146
    %2752 = vmatpush1.bf16.msra.mxu0 %v2145
    %2753 = vmatprep.subr.bf16.mxu0 %v2142
    %2754 = vmatpush1.bf16.msra.mxu0 %v2141
    %2755 = vmatprep.subr.bf16.mxu0 %v2138
    %2756 = vmatpush1.bf16.msra.mxu0 %v2137
    %2757 = vmatprep.subr.bf16.mxu0 0
    %2758 = vmatpush2.bf16.msra.mxu0 0
    %2759 = vmatprep.subr.bf16.mxu0 0
    %2760 = vmatpush2.bf16.msra.mxu0 0
    %2761 = vmatprep.subr.bf16.mxu0 0
    %2762 = vmatpush2.bf16.msra.mxu0 0
    %2763 = vmatprep.subr.bf16.mxu0 0
    %2764 = vmatpush2.bf16.msra.mxu0 0
    %2765 = vmatprep.subr.bf16.mxu0 0
    %2766 = vmatpush2.bf16.msra.mxu0 0
    %2767 = vmatprep.subr.bf16.mxu0 0
    %2768 = vmatpush2.bf16.msra.mxu0 0
    %2769 = vmatprep.subr.bf16.mxu0 0
    %2770 = vmatpush2.bf16.msra.mxu0 0
    %2771 = vmatprep.subr.bf16.mxu0 0
    %2772 = vmatpush2.bf16.msra.mxu0 0
    %2773 = vmatprep.mubr.bf16.mxu0 0
    %2774 = vmatmul.mubr.bf16.gmra.mxu0 %v2698
    %v2775 = vpop.f32.mrf.mxu0
    %v2776 = vadd.f32 0.0, %v2775
    %v2777 = vpop.f32.mrf.mxu0
    %v2778 = vadd.f32 0.0, %v2777
    %v2779 = vpop.f32.mrf.mxu0
    %v2780 = vpop.f32.mrf.mxu0
    %2781 = vdwg.mxu0
    %v2786 = vrot.slane %v2735, 4
    %v2787 = vrot.slane %v2737, 4
    %v2788 = vrot.slane %v2776, 4
    %v2789 = vrot.slane %v2778, 4
    %v2794 = vadd.f32 %v1837, %v2786
    %v2795 = vadd.f32 %v1839, %v2787
    %v2796 = vadd.f32 %v2001, %v2788
    %v2797 = vadd.f32 %v2003, %v2789
    %v2798 = vxor.u32 %v2794, 2147483648
    %v2799 = vmul.f32 %v2798, 1.442695
    %v2800 = vpow.pop %v2799
    %v2801 = vadd.f32 %v2800, 1.0
    %v2802 = vrcp.pop %v2801
    %v2803 = vmul.f32 1.0, %v2802
    %v2804 = vxor.u32 %v2795, 2147483648
    %v2805 = vmul.f32 %v2804, 1.442695
    %v2806 = vpow.pop %v2805
    %v2807 = vadd.f32 %v2806, 1.0
    %v2808 = vrcp.pop %v2807
    %v2809 = vmul.f32 1.0, %v2808
    %v2810 = vtanh.pop %v2796
    %v2811 = vxor.u32 %v2797, 2147483648
    %v2812 = vmul.f32 %v2811, 1.442695
    %v2813 = vpow.pop %v2812
    %v2814 = vadd.f32 %v2813, 1.0
    %v2815 = vrcp.pop %v2814
    %v2816 = vmul.f32 1.0, %v2815
    %v2818 = vrot.slane %v2691, 7
    %v2820 = vmul.f32 %v2809, %v2818
    %v2821 = vmul.f32 %v2803, %v2810
    %v2822 = vadd.f32 %v2820, %v2821
    %v2823 = vtanh.pop %v2822
    %v2824 = vmul.f32 %v2816, %v2823
    %v2825 = vpack.c.bf16 %v2824, %v2824
    %v2827 = vrot.slane %v2825, 2
    %2829 = vmatprep.subr.bf16.mxu0 %v2164
    %2830 = vmatpush1.bf16.msra.mxu0 %v2163
    %2831 = vmatprep.subr.bf16.mxu0 %v2160
    %2832 = vmatpush1.bf16.msra.mxu0 %v2159
    %2833 = vmatprep.subr.bf16.mxu0 %v2156
    %2834 = vmatpush1.bf16.msra.mxu0 %v2155
    %2835 = vmatprep.subr.bf16.mxu0 %v2152
    %2836 = vmatpush1.bf16.msra.mxu0 %v2151
    %2837 = vmatprep.subr.bf16.mxu0 %v2148
    %2838 = vmatpush1.bf16.msra.mxu0 %v2147
    %2839 = vmatprep.subr.bf16.mxu0 %v2144
    %2840 = vmatpush1.bf16.msra.mxu0 %v2143
    %2841 = vmatprep.subr.bf16.mxu0 %v2140
    %2842 = vmatpush1.bf16.msra.mxu0 %v2139
    %2843 = vmatprep.subr.bf16.mxu0 %v2136
    %2844 = vmatpush1.bf16.msra.mxu0 %v2135
    %2845 = vmatprep.subr.bf16.mxu0 0
    %2846 = vmatpush2.bf16.msra.mxu0 0
    %2847 = vmatprep.subr.bf16.mxu0 0
    %2848 = vmatpush2.bf16.msra.mxu0 0
    %2849 = vmatprep.subr.bf16.mxu0 0
    %2850 = vmatpush2.bf16.msra.mxu0 0
    %2851 = vmatprep.subr.bf16.mxu0 0
    %2852 = vmatpush2.bf16.msra.mxu0 0
    %2853 = vmatprep.subr.bf16.mxu0 0
    %2854 = vmatpush2.bf16.msra.mxu0 0
    %2855 = vmatprep.subr.bf16.mxu0 0
    %2856 = vmatpush2.bf16.msra.mxu0 0
    %2857 = vmatprep.subr.bf16.mxu0 0
    %2858 = vmatpush2.bf16.msra.mxu0 0
    %2859 = vmatprep.subr.bf16.mxu0 0
    %2860 = vmatpush2.bf16.msra.mxu0 0
    %2861 = vmatprep.mubr.bf16.mxu0 0
    %2862 = vmatmul.mubr.bf16.gmra.mxu0 %v2827
    %v2863 = vpop.f32.mrf.mxu0
    %v2864 = vadd.f32 0.0, %v2863
    %v2865 = vpop.f32.mrf.mxu0
    %v2866 = vadd.f32 0.0, %v2865
    %v2867 = vpop.f32.mrf.mxu0
    %v2868 = vpop.f32.mrf.mxu0
    %2869 = vdwg.mxu0
    %2870 = vmatprep.subr.bf16.mxu0 %v2166
    %2871 = vmatpush1.bf16.msra.mxu0 %v2165
    %2872 = vmatprep.subr.bf16.mxu0 %v2162
    %2873 = vmatpush1.bf16.msra.mxu0 %v2161
    %2874 = vmatprep.subr.bf16.mxu0 %v2158
    %2875 = vmatpush1.bf16.msra.mxu0 %v2157
    %2876 = vmatprep.subr.bf16.mxu0 %v2154
    %2877 = vmatpush1.bf16.msra.mxu0 %v2153
    %2878 = vmatprep.subr.bf16.mxu0 %v2150
    %2879 = vmatpush1.bf16.msra.mxu0 %v2149
    %2880 = vmatprep.subr.bf16.mxu0 %v2146
    %2881 = vmatpush1.bf16.msra.mxu0 %v2145
    %2882 = vmatprep.subr.bf16.mxu0 %v2142
    %2883 = vmatpush1.bf16.msra.mxu0 %v2141
    %2884 = vmatprep.subr.bf16.mxu0 %v2138
    %2885 = vmatpush1.bf16.msra.mxu0 %v2137
    %2886 = vmatprep.subr.bf16.mxu0 0
    %2887 = vmatpush2.bf16.msra.mxu0 0
    %2888 = vmatprep.subr.bf16.mxu0 0
    %2889 = vmatpush2.bf16.msra.mxu0 0
    %2890 = vmatprep.subr.bf16.mxu0 0
    %2891 = vmatpush2.bf16.msra.mxu0 0
    %2892 = vmatprep.subr.bf16.mxu0 0
    %2893 = vmatpush2.bf16.msra.mxu0 0
    %2894 = vmatprep.subr.bf16.mxu0 0
    %2895 = vmatpush2.bf16.msra.mxu0 0
    %2896 = vmatprep.subr.bf16.mxu0 0
    %2897 = vmatpush2.bf16.msra.mxu0 0
    %2898 = vmatprep.subr.bf16.mxu0 0
    %2899 = vmatpush2.bf16.msra.mxu0 0
    %2900 = vmatprep.subr.bf16.mxu0 0
    %2901 = vmatpush2.bf16.msra.mxu0 0
    %2902 = vmatprep.mubr.bf16.mxu0 0
    %2903 = vmatmul.mubr.bf16.gmra.mxu0 %v2827
    %v2904 = vpop.f32.mrf.mxu0
    %v2905 = vadd.f32 0.0, %v2904
    %v2906 = vpop.f32.mrf.mxu0
    %v2907 = vadd.f32 0.0, %v2906
    %v2908 = vpop.f32.mrf.mxu0
    %v2909 = vpop.f32.mrf.mxu0
    %2910 = vdwg.mxu0
    %v2915 = vrot.slane %v2864, 3
    %v2916 = vrot.slane %v2866, 3
    %v2917 = vrot.slane %v2905, 3
    %v2918 = vrot.slane %v2907, 3
    %v2923 = vadd.f32 %v1837, %v2915
    %v2924 = vadd.f32 %v1839, %v2916
    %v2925 = vadd.f32 %v2001, %v2917
    %v2926 = vadd.f32 %v2003, %v2918
    %v2927 = vxor.u32 %v2923, 2147483648
    %v2928 = vmul.f32 %v2927, 1.442695
    %v2929 = vpow.pop %v2928
    %v2930 = vadd.f32 %v2929, 1.0
    %v2931 = vrcp.pop %v2930
    %v2932 = vmul.f32 1.0, %v2931
    %v2933 = vxor.u32 %v2924, 2147483648
    %v2934 = vmul.f32 %v2933, 1.442695
    %v2935 = vpow.pop %v2934
    %v2936 = vadd.f32 %v2935, 1.0
    %v2937 = vrcp.pop %v2936
    %v2938 = vmul.f32 1.0, %v2937
    %v2939 = vtanh.pop %v2925
    %v2940 = vxor.u32 %v2926, 2147483648
    %v2941 = vmul.f32 %v2940, 1.442695
    %v2942 = vpow.pop %v2941
    %v2943 = vadd.f32 %v2942, 1.0
    %v2944 = vrcp.pop %v2943
    %v2945 = vmul.f32 1.0, %v2944
    %v2947 = vrot.slane %v2822, 7
    %v2949 = vmul.f32 %v2938, %v2947
    %v2950 = vmul.f32 %v2932, %v2939
    %v2951 = vadd.f32 %v2949, %v2950
    %v2952 = vtanh.pop %v2951
    %v2953 = vmul.f32 %v2945, %v2952
    %v2954 = vpack.c.bf16 %v2953, %v2953
    %v2956 = vshrl.u32 %v2954, 16
    %v2958 = vrot.slane %v2956, 2
    %2960 = vmatprep.subr.bf16.mxu0 %v2164
    %2961 = vmatpush1.bf16.msra.mxu0 %v2163
    %2962 = vmatprep.subr.bf16.mxu0 %v2160
    %2963 = vmatpush1.bf16.msra.mxu0 %v2159
    %2964 = vmatprep.subr.bf16.mxu0 %v2156
    %2965 = vmatpush1.bf16.msra.mxu0 %v2155
    %2966 = vmatprep.subr.bf16.mxu0 %v2152
    %2967 = vmatpush1.bf16.msra.mxu0 %v2151
    %2968 = vmatprep.subr.bf16.mxu0 %v2148
    %2969 = vmatpush1.bf16.msra.mxu0 %v2147
    %2970 = vmatprep.subr.bf16.mxu0 %v2144
    %2971 = vmatpush1.bf16.msra.mxu0 %v2143
    %2972 = vmatprep.subr.bf16.mxu0 %v2140
    %2973 = vmatpush1.bf16.msra.mxu0 %v2139
    %2974 = vmatprep.subr.bf16.mxu0 %v2136
    %2975 = vmatpush1.bf16.msra.mxu0 %v2135
    %2976 = vmatprep.subr.bf16.mxu0 0
    %2977 = vmatpush2.bf16.msra.mxu0 0
    %2978 = vmatprep.subr.bf16.mxu0 0
    %2979 = vmatpush2.bf16.msra.mxu0 0
    %2980 = vmatprep.subr.bf16.mxu0 0
    %2981 = vmatpush2.bf16.msra.mxu0 0
    %2982 = vmatprep.subr.bf16.mxu0 0
    %2983 = vmatpush2.bf16.msra.mxu0 0
    %2984 = vmatprep.subr.bf16.mxu0 0
    %2985 = vmatpush2.bf16.msra.mxu0 0
    %2986 = vmatprep.subr.bf16.mxu0 0
    %2987 = vmatpush2.bf16.msra.mxu0 0
    %2988 = vmatprep.subr.bf16.mxu0 0
    %2989 = vmatpush2.bf16.msra.mxu0 0
    %2990 = vmatprep.subr.bf16.mxu0 0
    %2991 = vmatpush2.bf16.msra.mxu0 0
    %2992 = vmatprep.mubr.bf16.mxu0 0
    %2993 = vmatmul.mubr.bf16.gmra.mxu0 %v2958
    %v2994 = vpop.f32.mrf.mxu0
    %v2995 = vadd.f32 0.0, %v2994
    %v2996 = vpop.f32.mrf.mxu0
    %v2997 = vadd.f32 0.0, %v2996
    %v2998 = vpop.f32.mrf.mxu0
    %v2999 = vpop.f32.mrf.mxu0
    %3000 = vdwg.mxu0
    %3001 = vmatprep.subr.bf16.mxu0 %v2166
    %3002 = vmatpush1.bf16.msra.mxu0 %v2165
    %3003 = vmatprep.subr.bf16.mxu0 %v2162
    %3004 = vmatpush1.bf16.msra.mxu0 %v2161
    %3005 = vmatprep.subr.bf16.mxu0 %v2158
    %3006 = vmatpush1.bf16.msra.mxu0 %v2157
    %3007 = vmatprep.subr.bf16.mxu0 %v2154
    %3008 = vmatpush1.bf16.msra.mxu0 %v2153
    %3009 = vmatprep.subr.bf16.mxu0 %v2150
    %3010 = vmatpush1.bf16.msra.mxu0 %v2149
    %3011 = vmatprep.subr.bf16.mxu0 %v2146
    %3012 = vmatpush1.bf16.msra.mxu0 %v2145
    %3013 = vmatprep.subr.bf16.mxu0 %v2142
    %3014 = vmatpush1.bf16.msra.mxu0 %v2141
    %3015 = vmatprep.subr.bf16.mxu0 %v2138
    %3016 = vmatpush1.bf16.msra.mxu0 %v2137
    %3017 = vmatprep.subr.bf16.mxu0 0
    %3018 = vmatpush2.bf16.msra.mxu0 0
    %3019 = vmatprep.subr.bf16.mxu0 0
    %3020 = vmatpush2.bf16.msra.mxu0 0
    %3021 = vmatprep.subr.bf16.mxu0 0
    %3022 = vmatpush2.bf16.msra.mxu0 0
    %3023 = vmatprep.subr.bf16.mxu0 0
    %3024 = vmatpush2.bf16.msra.mxu0 0
    %3025 = vmatprep.subr.bf16.mxu0 0
    %3026 = vmatpush2.bf16.msra.mxu0 0
    %3027 = vmatprep.subr.bf16.mxu0 0
    %3028 = vmatpush2.bf16.msra.mxu0 0
    %3029 = vmatprep.subr.bf16.mxu0 0
    %3030 = vmatpush2.bf16.msra.mxu0 0
    %3031 = vmatprep.subr.bf16.mxu0 0
    %3032 = vmatpush2.bf16.msra.mxu0 0
    %3033 = vmatprep.mubr.bf16.mxu0 0
    %3034 = vmatmul.mubr.bf16.gmra.mxu0 %v2958
    %v3035 = vpop.f32.mrf.mxu0
    %v3036 = vadd.f32 0.0, %v3035
    %v3037 = vpop.f32.mrf.mxu0
    %v3038 = vadd.f32 0.0, %v3037
    %v3039 = vpop.f32.mrf.mxu0
    %v3040 = vpop.f32.mrf.mxu0
    %3041 = vdwg.mxu0
    %v3046 = vrot.slane %v2995, 2
    %v3047 = vrot.slane %v2997, 2
    %v3048 = vrot.slane %v3036, 2
    %v3049 = vrot.slane %v3038, 2
    %v3054 = vadd.f32 %v1837, %v3046
    %v3055 = vadd.f32 %v1839, %v3047
    %v3056 = vadd.f32 %v2001, %v3048
    %v3057 = vadd.f32 %v2003, %v3049
    %v3058 = vxor.u32 %v3054, 2147483648
    %v3059 = vmul.f32 %v3058, 1.442695
    %v3060 = vpow.pop %v3059
    %v3061 = vadd.f32 %v3060, 1.0
    %v3062 = vrcp.pop %v3061
    %v3063 = vmul.f32 1.0, %v3062
    %v3064 = vxor.u32 %v3055, 2147483648
    %v3065 = vmul.f32 %v3064, 1.442695
    %v3066 = vpow.pop %v3065
    %v3067 = vadd.f32 %v3066, 1.0
    %v3068 = vrcp.pop %v3067
    %v3069 = vmul.f32 1.0, %v3068
    %v3070 = vtanh.pop %v3056
    %v3071 = vxor.u32 %v3057, 2147483648
    %v3072 = vmul.f32 %v3071, 1.442695
    %v3073 = vpow.pop %v3072
    %v3074 = vadd.f32 %v3073, 1.0
    %v3075 = vrcp.pop %v3074
    %v3076 = vmul.f32 1.0, %v3075
    %v3078 = vrot.slane %v2951, 7
    %v3080 = vmul.f32 %v3069, %v3078
    %v3081 = vmul.f32 %v3063, %v3070
    %v3082 = vadd.f32 %v3080, %v3081
    %v3083 = vtanh.pop %v3082
    %v3084 = vmul.f32 %v3076, %v3083
    %v3085 = vpack.c.bf16 %v3084, %v3084
    %v3087 = vrot.slane %v3085, 3
    %3089 = vmatprep.subr.bf16.mxu0 %v2164
    %3090 = vmatpush1.bf16.msra.mxu0 %v2163
    %3091 = vmatprep.subr.bf16.mxu0 %v2160
    %3092 = vmatpush1.bf16.msra.mxu0 %v2159
    %3093 = vmatprep.subr.bf16.mxu0 %v2156
    %3094 = vmatpush1.bf16.msra.mxu0 %v2155
    %3095 = vmatprep.subr.bf16.mxu0 %v2152
    %3096 = vmatpush1.bf16.msra.mxu0 %v2151
    %3097 = vmatprep.subr.bf16.mxu0 %v2148
    %3098 = vmatpush1.bf16.msra.mxu0 %v2147
    %3099 = vmatprep.subr.bf16.mxu0 %v2144
    %3100 = vmatpush1.bf16.msra.mxu0 %v2143
    %3101 = vmatprep.subr.bf16.mxu0 %v2140
    %3102 = vmatpush1.bf16.msra.mxu0 %v2139
    %3103 = vmatprep.subr.bf16.mxu0 %v2136
    %3104 = vmatpush1.bf16.msra.mxu0 %v2135
    %3105 = vmatprep.subr.bf16.mxu0 0
    %3106 = vmatpush2.bf16.msra.mxu0 0
    %3107 = vmatprep.subr.bf16.mxu0 0
    %3108 = vmatpush2.bf16.msra.mxu0 0
    %3109 = vmatprep.subr.bf16.mxu0 0
    %3110 = vmatpush2.bf16.msra.mxu0 0
    %3111 = vmatprep.subr.bf16.mxu0 0
    %3112 = vmatpush2.bf16.msra.mxu0 0
    %3113 = vmatprep.subr.bf16.mxu0 0
    %3114 = vmatpush2.bf16.msra.mxu0 0
    %3115 = vmatprep.subr.bf16.mxu0 0
    %3116 = vmatpush2.bf16.msra.mxu0 0
    %3117 = vmatprep.subr.bf16.mxu0 0
    %3118 = vmatpush2.bf16.msra.mxu0 0
    %3119 = vmatprep.subr.bf16.mxu0 0
    %3120 = vmatpush2.bf16.msra.mxu0 0
    %3121 = vmatprep.mubr.bf16.mxu0 0
    %3122 = vmatmul.mubr.bf16.gmra.mxu0 %v3087
    %v3123 = vpop.f32.mrf.mxu0
    %v3124 = vadd.f32 0.0, %v3123
    %v3125 = vpop.f32.mrf.mxu0
    %v3126 = vadd.f32 0.0, %v3125
    %v3127 = vpop.f32.mrf.mxu0
    %v3128 = vpop.f32.mrf.mxu0
    %3129 = vdwg.mxu0
    %3130 = vmatprep.subr.bf16.mxu0 %v2166
    %3131 = vmatpush1.bf16.msra.mxu0 %v2165
    %3132 = vmatprep.subr.bf16.mxu0 %v2162
    %3133 = vmatpush1.bf16.msra.mxu0 %v2161
    %3134 = vmatprep.subr.bf16.mxu0 %v2158
    %3135 = vmatpush1.bf16.msra.mxu0 %v2157
    %3136 = vmatprep.subr.bf16.mxu0 %v2154
    %3137 = vmatpush1.bf16.msra.mxu0 %v2153
    %3138 = vmatprep.subr.bf16.mxu0 %v2150
    %3139 = vmatpush1.bf16.msra.mxu0 %v2149
    %3140 = vmatprep.subr.bf16.mxu0 %v2146
    %3141 = vmatpush1.bf16.msra.mxu0 %v2145
    %3142 = vmatprep.subr.bf16.mxu0 %v2142
    %3143 = vmatpush1.bf16.msra.mxu0 %v2141
    %3144 = vmatprep.subr.bf16.mxu0 %v2138
    %3145 = vmatpush1.bf16.msra.mxu0 %v2137
    %3146 = vmatprep.subr.bf16.mxu0 0
    %3147 = vmatpush2.bf16.msra.mxu0 0
    %3148 = vmatprep.subr.bf16.mxu0 0
    %3149 = vmatpush2.bf16.msra.mxu0 0
    %3150 = vmatprep.subr.bf16.mxu0 0
    %3151 = vmatpush2.bf16.msra.mxu0 0
    %3152 = vmatprep.subr.bf16.mxu0 0
    %3153 = vmatpush2.bf16.msra.mxu0 0
    %3154 = vmatprep.subr.bf16.mxu0 0
    %3155 = vmatpush2.bf16.msra.mxu0 0
    %3156 = vmatprep.subr.bf16.mxu0 0
    %3157 = vmatpush2.bf16.msra.mxu0 0
    %3158 = vmatprep.subr.bf16.mxu0 0
    %3159 = vmatpush2.bf16.msra.mxu0 0
    %3160 = vmatprep.subr.bf16.mxu0 0
    %3161 = vmatpush2.bf16.msra.mxu0 0
    %3162 = vmatprep.mubr.bf16.mxu0 0
    %3163 = vmatmul.mubr.bf16.gmra.mxu0 %v3087
    %v3164 = vpop.f32.mrf.mxu0
    %v3165 = vadd.f32 0.0, %v3164
    %v3166 = vpop.f32.mrf.mxu0
    %v3167 = vadd.f32 0.0, %v3166
    %v3168 = vpop.f32.mrf.mxu0
    %v3169 = vpop.f32.mrf.mxu0
    %3170 = vdwg.mxu0
    %v3175 = vrot.slane %v3124, 1
    %v3176 = vrot.slane %v3126, 1
    %v3177 = vrot.slane %v3165, 1
    %v3178 = vrot.slane %v3167, 1
    %v3183 = vadd.f32 %v1837, %v3175
    %v3184 = vadd.f32 %v1839, %v3176
    %v3185 = vadd.f32 %v2001, %v3177
    %v3186 = vadd.f32 %v2003, %v3178
    %v3187 = vxor.u32 %v3183, 2147483648
    %v3188 = vmul.f32 %v3187, 1.442695
    %v3189 = vpow.pop %v3188
    %v3190 = vadd.f32 %v3189, 1.0
    %v3191 = vrcp.pop %v3190
    %v3192 = vmul.f32 1.0, %v3191
    %v3193 = vxor.u32 %v3184, 2147483648
    %v3194 = vmul.f32 %v3193, 1.442695
    %v3195 = vpow.pop %v3194
    %v3196 = vadd.f32 %v3195, 1.0
    %v3197 = vrcp.pop %v3196
    %v3198 = vmul.f32 1.0, %v3197
    %v3199 = vtanh.pop %v3185
    %v3200 = vxor.u32 %v3186, 2147483648
    %v3201 = vmul.f32 %v3200, 1.442695
    %v3202 = vpow.pop %v3201
    %v3203 = vadd.f32 %v3202, 1.0
    %v3204 = vrcp.pop %v3203
    %v3205 = vmul.f32 1.0, %v3204
    %v3207 = vrot.slane %v3082, 7
    %v3209 = vmul.f32 %v3198, %v3207
    %v3210 = vmul.f32 %v3192, %v3199
    %v3211 = vadd.f32 %v3209, %v3210
    %v3212 = vtanh.pop %v3211
    %v3213 = vmul.f32 %v3205, %v3212
    %v3214 = vpack.c.bf16 %v3213, %v3213
    %v3215 = vld [vmem:[#allocation10] sm:$0xff]
    %v3216 = vld [vmem:[#allocation10 + $0x8] sm:$0xff]
    %v3217 = vld [vmem:[#allocation10 + $0x10] sm:$0xff]
    %v3218 = vld [vmem:[#allocation10 + $0x18] sm:$0xff]
    %v3219 = vld [vmem:[#allocation10 + $0x20] sm:$0xff]
    %v3220 = vld [vmem:[#allocation10 + $0x28] sm:$0xff]
    %v3221 = vld [vmem:[#allocation10 + $0x30] sm:$0xff]
    %v3222 = vld [vmem:[#allocation10 + $0x38] sm:$0xff]
    %v3223 = vld [vmem:[#allocation10 + $0x40] sm:$0xff]
    %v3224 = vld [vmem:[#allocation10 + $0x48] sm:$0xff]
    %v3225 = vld [vmem:[#allocation10 + $0x50] sm:$0xff]
    %v3226 = vld [vmem:[#allocation10 + $0x58] sm:$0xff]
    %v3227 = vld [vmem:[#allocation10 + $0x60] sm:$0xff]
    %v3228 = vld [vmem:[#allocation10 + $0x68] sm:$0xff]
    %v3229 = vld [vmem:[#allocation10 + $0x70] sm:$0xff]
    %v3230 = vld [vmem:[#allocation10 + $0x78] sm:$0xff]
    %v3231 = vld [vmem:[#allocation10 + $0x80] sm:$0xff]
    %v3232 = vld [vmem:[#allocation10 + $0x88] sm:$0xff]
    %v3233 = vld [vmem:[#allocation10 + $0x90] sm:$0xff]
    %v3234 = vld [vmem:[#allocation10 + $0x98] sm:$0xff]
    %v3235 = vld [vmem:[#allocation10 + $0xa0] sm:$0xff]
    %v3236 = vld [vmem:[#allocation10 + $0xa8] sm:$0xff]
    %v3237 = vld [vmem:[#allocation10 + $0xb0] sm:$0xff]
    %v3238 = vld [vmem:[#allocation10 + $0xb8] sm:$0xff]
    %v3239 = vld [vmem:[#allocation10 + $0xc0] sm:$0xff]
    %v3240 = vld [vmem:[#allocation10 + $0xc8] sm:$0xff]
    %v3241 = vld [vmem:[#allocation10 + $0xd0] sm:$0xff]
    %v3242 = vld [vmem:[#allocation10 + $0xd8] sm:$0xff]
    %v3243 = vld [vmem:[#allocation10 + $0xe0] sm:$0xff]
    %v3244 = vld [vmem:[#allocation10 + $0xe8] sm:$0xff]
    %v3245 = vld [vmem:[#allocation10 + $0xf0] sm:$0xff]
    %v3246 = vld [vmem:[#allocation10 + $0xf8] sm:$0xff]
    %v3247 = vld [vmem:[#allocation10 + $0x100] sm:$0xff]
    %v3248 = vld [vmem:[#allocation10 + $0x108] sm:$0xff]
    %v3249 = vld [vmem:[#allocation10 + $0x110] sm:$0xff]
    %v3250 = vld [vmem:[#allocation10 + $0x118] sm:$0xff]
    %v3251 = vld [vmem:[#allocation10 + $0x120] sm:$0xff]
    %v3252 = vld [vmem:[#allocation10 + $0x128] sm:$0xff]
    %v3253 = vld [vmem:[#allocation10 + $0x130] sm:$0xff]
    %v3254 = vld [vmem:[#allocation10 + $0x138] sm:$0xff]
    %v3255 = vld [vmem:[#allocation10 + $0x140] sm:$0xff]
    %v3256 = vld [vmem:[#allocation10 + $0x148] sm:$0xff]
    %v3257 = vld [vmem:[#allocation10 + $0x150] sm:$0xff]
    %v3258 = vld [vmem:[#allocation10 + $0x158] sm:$0xff]
    %v3259 = vld [vmem:[#allocation10 + $0x160] sm:$0xff]
    %v3260 = vld [vmem:[#allocation10 + $0x168] sm:$0xff]
    %v3261 = vld [vmem:[#allocation10 + $0x170] sm:$0xff]
    %v3262 = vld [vmem:[#allocation10 + $0x178] sm:$0xff]
    %v3263 = vld [vmem:[#allocation10 + $0x180] sm:$0xff]
    %v3264 = vld [vmem:[#allocation10 + $0x188] sm:$0xff]
    %v3265 = vld [vmem:[#allocation10 + $0x190] sm:$0xff]
    %v3266 = vld [vmem:[#allocation10 + $0x198] sm:$0xff]
    %v3267 = vld [vmem:[#allocation10 + $0x1a0] sm:$0xff]
    %v3268 = vld [vmem:[#allocation10 + $0x1a8] sm:$0xff]
    %v3269 = vld [vmem:[#allocation10 + $0x1b0] sm:$0xff]
    %v3270 = vld [vmem:[#allocation10 + $0x1b8] sm:$0xff]
    %v3271 = vld [vmem:[#allocation10 + $0x1c0] sm:$0xff]
    %v3272 = vld [vmem:[#allocation10 + $0x1c8] sm:$0xff]
    %v3273 = vld [vmem:[#allocation10 + $0x1d0] sm:$0xff]
    %v3274 = vld [vmem:[#allocation10 + $0x1d8] sm:$0xff]
    %v3275 = vld [vmem:[#allocation10 + $0x1e0] sm:$0xff]
    %v3276 = vld [vmem:[#allocation10 + $0x1e8] sm:$0xff]
    %v3277 = vld [vmem:[#allocation10 + $0x1f0] sm:$0xff]
    %v3278 = vld [vmem:[#allocation10 + $0x1f8] sm:$0xff]
    %v3279 = vld [vmem:[%s5] sm:$0xff]
    %v3281 = vshrl.u32 %v3214, 16
    %v3283 = vrot.slane %v3281, 3
    %v3349 = vunpack.c.l.b16 %v3215
    %v3350 = vunpack.c.h.b16 %v3215
    %v3351 = vunpack.c.l.b16 %v3216
    %v3352 = vunpack.c.h.b16 %v3216
    %v3353 = vunpack.c.l.b16 %v3217
    %v3354 = vunpack.c.h.b16 %v3217
    %v3355 = vunpack.c.l.b16 %v3218
    %v3356 = vunpack.c.h.b16 %v3218
    %v3357 = vunpack.c.l.b16 %v3219
    %v3358 = vunpack.c.h.b16 %v3219
    %v3359 = vunpack.c.l.b16 %v3220
    %v3360 = vunpack.c.h.b16 %v3220
    %v3361 = vunpack.c.l.b16 %v3221
    %v3362 = vunpack.c.h.b16 %v3221
    %v3363 = vunpack.c.l.b16 %v3222
    %v3364 = vunpack.c.h.b16 %v3222
    %v3365 = vunpack.c.l.b16 %v3223
    %v3366 = vunpack.c.h.b16 %v3223
    %v3367 = vunpack.c.l.b16 %v3224
    %v3368 = vunpack.c.h.b16 %v3224
    %v3369 = vunpack.c.l.b16 %v3225
    %v3370 = vunpack.c.h.b16 %v3225
    %v3371 = vunpack.c.l.b16 %v3226
    %v3372 = vunpack.c.h.b16 %v3226
    %v3373 = vunpack.c.l.b16 %v3227
    %v3374 = vunpack.c.h.b16 %v3227
    %v3375 = vunpack.c.l.b16 %v3228
    %v3376 = vunpack.c.h.b16 %v3228
    %v3377 = vunpack.c.l.b16 %v3229
    %v3378 = vunpack.c.h.b16 %v3229
    %v3379 = vunpack.c.l.b16 %v3230
    %v3380 = vunpack.c.h.b16 %v3230
    %v3381 = vunpack.c.l.b16 %v3231
    %v3382 = vunpack.c.h.b16 %v3231
    %v3383 = vunpack.c.l.b16 %v3232
    %v3384 = vunpack.c.h.b16 %v3232
    %v3385 = vunpack.c.l.b16 %v3233
    %v3386 = vunpack.c.h.b16 %v3233
    %v3387 = vunpack.c.l.b16 %v3234
    %v3388 = vunpack.c.h.b16 %v3234
    %v3389 = vunpack.c.l.b16 %v3235
    %v3390 = vunpack.c.h.b16 %v3235
    %v3391 = vunpack.c.l.b16 %v3236
    %v3392 = vunpack.c.h.b16 %v3236
    %v3393 = vunpack.c.l.b16 %v3237
    %v3394 = vunpack.c.h.b16 %v3237
    %v3395 = vunpack.c.l.b16 %v3238
    %v3396 = vunpack.c.h.b16 %v3238
    %v3397 = vunpack.c.l.b16 %v3239
    %v3398 = vunpack.c.h.b16 %v3239
    %v3399 = vunpack.c.l.b16 %v3240
    %v3400 = vunpack.c.h.b16 %v3240
    %v3401 = vunpack.c.l.b16 %v3241
    %v3402 = vunpack.c.h.b16 %v3241
    %v3403 = vunpack.c.l.b16 %v3242
    %v3404 = vunpack.c.h.b16 %v3242
    %v3405 = vunpack.c.l.b16 %v3243
    %v3406 = vunpack.c.h.b16 %v3243
    %v3407 = vunpack.c.l.b16 %v3244
    %v3408 = vunpack.c.h.b16 %v3244
    %v3409 = vunpack.c.l.b16 %v3245
    %v3410 = vunpack.c.h.b16 %v3245
    %v3411 = vunpack.c.l.b16 %v3246
    %v3412 = vunpack.c.h.b16 %v3246
    %v3413 = vunpack.c.l.b16 %v3247
    %v3414 = vunpack.c.h.b16 %v3247
    %v3415 = vunpack.c.l.b16 %v3248
    %v3416 = vunpack.c.h.b16 %v3248
    %v3417 = vunpack.c.l.b16 %v3249
    %v3418 = vunpack.c.h.b16 %v3249
    %v3419 = vunpack.c.l.b16 %v3250
    %v3420 = vunpack.c.h.b16 %v3250
    %v3421 = vunpack.c.l.b16 %v3251
    %v3422 = vunpack.c.h.b16 %v3251
    %v3423 = vunpack.c.l.b16 %v3252
    %v3424 = vunpack.c.h.b16 %v3252
    %v3425 = vunpack.c.l.b16 %v3253
    %v3426 = vunpack.c.h.b16 %v3253
    %v3427 = vunpack.c.l.b16 %v3254
    %v3428 = vunpack.c.h.b16 %v3254
    %v3429 = vunpack.c.l.b16 %v3255
    %v3430 = vunpack.c.h.b16 %v3255
    %v3431 = vunpack.c.l.b16 %v3256
    %v3432 = vunpack.c.h.b16 %v3256
    %v3433 = vunpack.c.l.b16 %v3257
    %v3434 = vunpack.c.h.b16 %v3257
    %v3435 = vunpack.c.l.b16 %v3258
    %v3436 = vunpack.c.h.b16 %v3258
    %v3437 = vunpack.c.l.b16 %v3259
    %v3438 = vunpack.c.h.b16 %v3259
    %v3439 = vunpack.c.l.b16 %v3260
    %v3440 = vunpack.c.h.b16 %v3260
    %v3441 = vunpack.c.l.b16 %v3261
    %v3442 = vunpack.c.h.b16 %v3261
    %v3443 = vunpack.c.l.b16 %v3262
    %v3444 = vunpack.c.h.b16 %v3262
    %v3445 = vunpack.c.l.b16 %v3263
    %v3446 = vunpack.c.h.b16 %v3263
    %v3447 = vunpack.c.l.b16 %v3264
    %v3448 = vunpack.c.h.b16 %v3264
    %v3449 = vunpack.c.l.b16 %v3265
    %v3450 = vunpack.c.h.b16 %v3265
    %v3451 = vunpack.c.l.b16 %v3266
    %v3452 = vunpack.c.h.b16 %v3266
    %v3453 = vunpack.c.l.b16 %v3267
    %v3454 = vunpack.c.h.b16 %v3267
    %v3455 = vunpack.c.l.b16 %v3268
    %v3456 = vunpack.c.h.b16 %v3268
    %v3457 = vunpack.c.l.b16 %v3269
    %v3458 = vunpack.c.h.b16 %v3269
    %v3459 = vunpack.c.l.b16 %v3270
    %v3460 = vunpack.c.h.b16 %v3270
    %v3461 = vunpack.c.l.b16 %v3271
    %v3462 = vunpack.c.h.b16 %v3271
    %v3463 = vunpack.c.l.b16 %v3272
    %v3464 = vunpack.c.h.b16 %v3272
    %v3465 = vunpack.c.l.b16 %v3273
    %v3466 = vunpack.c.h.b16 %v3273
    %v3467 = vunpack.c.l.b16 %v3274
    %v3468 = vunpack.c.h.b16 %v3274
    %v3469 = vunpack.c.l.b16 %v3275
    %v3470 = vunpack.c.h.b16 %v3275
    %v3471 = vunpack.c.l.b16 %v3276
    %v3472 = vunpack.c.h.b16 %v3276
    %v3473 = vunpack.c.l.b16 %v3277
    %v3474 = vunpack.c.h.b16 %v3277
    %v3475 = vunpack.c.l.b16 %v3278
    %v3476 = vunpack.c.h.b16 %v3278
    %v3477 = vpack.c.b16 %v3357, %v3349
    %v3478 = vpack.c.b16 %v3358, %v3350
    %v3479 = vpack.c.b16 %v3359, %v3351
    %v3480 = vpack.c.b16 %v3360, %v3352
    %v3481 = vpack.c.b16 %v3361, %v3353
    %v3482 = vpack.c.b16 %v3362, %v3354
    %v3483 = vpack.c.b16 %v3363, %v3355
    %v3484 = vpack.c.b16 %v3364, %v3356
    %v3485 = vpack.c.b16 %v3373, %v3365
    %v3486 = vpack.c.b16 %v3374, %v3366
    %v3487 = vpack.c.b16 %v3375, %v3367
    %v3488 = vpack.c.b16 %v3376, %v3368
    %v3489 = vpack.c.b16 %v3377, %v3369
    %v3490 = vpack.c.b16 %v3378, %v3370
    %v3491 = vpack.c.b16 %v3379, %v3371
    %v3492 = vpack.c.b16 %v3380, %v3372
    %v3493 = vpack.c.b16 %v3389, %v3381
    %v3494 = vpack.c.b16 %v3390, %v3382
    %v3495 = vpack.c.b16 %v3391, %v3383
    %v3496 = vpack.c.b16 %v3392, %v3384
    %v3497 = vpack.c.b16 %v3393, %v3385
    %v3498 = vpack.c.b16 %v3394, %v3386
    %v3499 = vpack.c.b16 %v3395, %v3387
    %v3500 = vpack.c.b16 %v3396, %v3388
    %v3501 = vpack.c.b16 %v3405, %v3397
    %v3502 = vpack.c.b16 %v3406, %v3398
    %v3503 = vpack.c.b16 %v3407, %v3399
    %v3504 = vpack.c.b16 %v3408, %v3400
    %v3505 = vpack.c.b16 %v3409, %v3401
    %v3506 = vpack.c.b16 %v3410, %v3402
    %v3507 = vpack.c.b16 %v3411, %v3403
    %v3508 = vpack.c.b16 %v3412, %v3404
    %v3509 = vpack.c.b16 %v3421, %v3413
    %v3510 = vpack.c.b16 %v3422, %v3414
    %v3511 = vpack.c.b16 %v3423, %v3415
    %v3512 = vpack.c.b16 %v3424, %v3416
    %v3513 = vpack.c.b16 %v3425, %v3417
    %v3514 = vpack.c.b16 %v3426, %v3418
    %v3515 = vpack.c.b16 %v3427, %v3419
    %v3516 = vpack.c.b16 %v3428, %v3420
    %v3517 = vpack.c.b16 %v3437, %v3429
    %v3518 = vpack.c.b16 %v3438, %v3430
    %v3519 = vpack.c.b16 %v3439, %v3431
    %v3520 = vpack.c.b16 %v3440, %v3432
    %v3521 = vpack.c.b16 %v3441, %v3433
    %v3522 = vpack.c.b16 %v3442, %v3434
    %v3523 = vpack.c.b16 %v3443, %v3435
    %v3524 = vpack.c.b16 %v3444, %v3436
    %v3525 = vpack.c.b16 %v3453, %v3445
    %v3526 = vpack.c.b16 %v3454, %v3446
    %v3527 = vpack.c.b16 %v3455, %v3447
    %v3528 = vpack.c.b16 %v3456, %v3448
    %v3529 = vpack.c.b16 %v3457, %v3449
    %v3530 = vpack.c.b16 %v3458, %v3450
    %v3531 = vpack.c.b16 %v3459, %v3451
    %v3532 = vpack.c.b16 %v3460, %v3452
    %v3533 = vpack.c.b16 %v3469, %v3461
    %v3534 = vpack.c.b16 %v3470, %v3462
    %v3535 = vpack.c.b16 %v3471, %v3463
    %v3536 = vpack.c.b16 %v3472, %v3464
    %v3537 = vpack.c.b16 %v3473, %v3465
    %v3538 = vpack.c.b16 %v3474, %v3466
    %v3539 = vpack.c.b16 %v3475, %v3467
    %v3540 = vpack.c.b16 %v3476, %v3468
    %v3606 = vlaneseq
    %v3607 = vshrl.u32 %v3606, 7
    %v3608 = vsub.s32 0, %v3607
    %v3609 = vrot.slane %v3279, %v3608
    %v3610 = vlaneseq
    %v3611 = vshrl.u32 %v3610, 7
    %v3612 = vsub.s32 1, %v3611
    %v3613 = vrot.slane %v3279, %v3612
    %v3614 = vlaneseq
    %v3615 = vshrl.u32 %v3614, 7
    %v3616 = vsub.s32 2, %v3615
    %v3617 = vrot.slane %v3279, %v3616
    %v3618 = vlaneseq
    %v3619 = vshrl.u32 %v3618, 7
    %v3620 = vsub.s32 3, %v3619
    %v3621 = vrot.slane %v3279, %v3620
    %v3622 = vlaneseq
    %v3623 = vshrl.u32 %v3622, 7
    %v3624 = vsub.s32 4, %v3623
    %v3625 = vrot.slane %v3279, %v3624
    %v3626 = vlaneseq
    %v3627 = vshrl.u32 %v3626, 7
    %v3628 = vsub.s32 5, %v3627
    %v3629 = vrot.slane %v3279, %v3628
    %v3630 = vlaneseq
    %v3631 = vshrl.u32 %v3630, 7
    %v3632 = vsub.s32 6, %v3631
    %v3633 = vrot.slane %v3279, %v3632
    %v3634 = vlaneseq
    %v3635 = vshrl.u32 %v3634, 7
    %v3636 = vsub.s32 7, %v3635
    %v3637 = vrot.slane %v3279, %v3636
    %3646 = vmatprep.subr.bf16.mxu0 %v3534
    %3647 = vmatpush1.bf16.msra.mxu0 %v3533
    %3648 = vmatprep.subr.bf16.mxu0 %v3526
    %3649 = vmatpush1.bf16.msra.mxu0 %v3525
    %3650 = vmatprep.subr.bf16.mxu0 %v3518
    %3651 = vmatpush1.bf16.msra.mxu0 %v3517
    %3652 = vmatprep.subr.bf16.mxu0 %v3510
    %3653 = vmatpush1.bf16.msra.mxu0 %v3509
    %3654 = vmatprep.subr.bf16.mxu0 %v3502
    %3655 = vmatpush1.bf16.msra.mxu0 %v3501
    %3656 = vmatprep.subr.bf16.mxu0 %v3494
    %3657 = vmatpush1.bf16.msra.mxu0 %v3493
    %3658 = vmatprep.subr.bf16.mxu0 %v3486
    %3659 = vmatpush1.bf16.msra.mxu0 %v3485
    %3660 = vmatprep.subr.bf16.mxu0 %v3478
    %3661 = vmatpush1.bf16.msra.mxu0 %v3477
    %3662 = vmatprep.subr.bf16.mxu0 0
    %3663 = vmatpush2.bf16.msra.mxu0 0
    %3664 = vmatprep.subr.bf16.mxu0 0
    %3665 = vmatpush2.bf16.msra.mxu0 0
    %3666 = vmatprep.subr.bf16.mxu0 0
    %3667 = vmatpush2.bf16.msra.mxu0 0
    %3668 = vmatprep.subr.bf16.mxu0 0
    %3669 = vmatpush2.bf16.msra.mxu0 0
    %3670 = vmatprep.subr.bf16.mxu0 0
    %3671 = vmatpush2.bf16.msra.mxu0 0
    %3672 = vmatprep.subr.bf16.mxu0 0
    %3673 = vmatpush2.bf16.msra.mxu0 0
    %3674 = vmatprep.subr.bf16.mxu0 0
    %3675 = vmatpush2.bf16.msra.mxu0 0
    %3676 = vmatprep.subr.bf16.mxu0 0
    %3677 = vmatpush2.bf16.msra.mxu0 0
    %3678 = vmatprep.mubr.bf16.mxu0 0
    %3679 = vmatmul.mubr.bf16.gmra.mxu0 %v3283
    %v3680 = vpop.f32.mrf.mxu0
    %v3681 = vadd.f32 %v3609, %v3680
    %v3682 = vpop.f32.mrf.mxu0
    %v3683 = vadd.f32 %v3613, %v3682
    %v3684 = vpop.f32.mrf.mxu0
    %v3685 = vpop.f32.mrf.mxu0
    %3686 = vdwg.mxu0
    %3687 = vmatprep.subr.bf16.mxu0 %v3536
    %3688 = vmatpush1.bf16.msra.mxu0 %v3535
    %3689 = vmatprep.subr.bf16.mxu0 %v3528
    %3690 = vmatpush1.bf16.msra.mxu0 %v3527
    %3691 = vmatprep.subr.bf16.mxu0 %v3520
    %3692 = vmatpush1.bf16.msra.mxu0 %v3519
    %3693 = vmatprep.subr.bf16.mxu0 %v3512
    %3694 = vmatpush1.bf16.msra.mxu0 %v3511
    %3695 = vmatprep.subr.bf16.mxu0 %v3504
    %3696 = vmatpush1.bf16.msra.mxu0 %v3503
    %3697 = vmatprep.subr.bf16.mxu0 %v3496
    %3698 = vmatpush1.bf16.msra.mxu0 %v3495
    %3699 = vmatprep.subr.bf16.mxu0 %v3488
    %3700 = vmatpush1.bf16.msra.mxu0 %v3487
    %3701 = vmatprep.subr.bf16.mxu0 %v3480
    %3702 = vmatpush1.bf16.msra.mxu0 %v3479
    %3703 = vmatprep.subr.bf16.mxu0 0
    %3704 = vmatpush2.bf16.msra.mxu0 0
    %3705 = vmatprep.subr.bf16.mxu0 0
    %3706 = vmatpush2.bf16.msra.mxu0 0
    %3707 = vmatprep.subr.bf16.mxu0 0
    %3708 = vmatpush2.bf16.msra.mxu0 0
    %3709 = vmatprep.subr.bf16.mxu0 0
    %3710 = vmatpush2.bf16.msra.mxu0 0
    %3711 = vmatprep.subr.bf16.mxu0 0
    %3712 = vmatpush2.bf16.msra.mxu0 0
    %3713 = vmatprep.subr.bf16.mxu0 0
    %3714 = vmatpush2.bf16.msra.mxu0 0
    %3715 = vmatprep.subr.bf16.mxu0 0
    %3716 = vmatpush2.bf16.msra.mxu0 0
    %3717 = vmatprep.subr.bf16.mxu0 0
    %3718 = vmatpush2.bf16.msra.mxu0 0
    %3719 = vmatprep.mubr.bf16.mxu0 0
    %3720 = vmatmul.mubr.bf16.gmra.mxu0 %v3283
    %v3721 = vpop.f32.mrf.mxu0
    %v3722 = vadd.f32 %v3617, %v3721
    %v3723 = vpop.f32.mrf.mxu0
    %v3724 = vadd.f32 %v3621, %v3723
    %v3725 = vpop.f32.mrf.mxu0
    %v3726 = vpop.f32.mrf.mxu0
    %3727 = vdwg.mxu0
    %3728 = vmatprep.subr.bf16.mxu0 %v3538
    %3729 = vmatpush1.bf16.msra.mxu0 %v3537
    %3730 = vmatprep.subr.bf16.mxu0 %v3530
    %3731 = vmatpush1.bf16.msra.mxu0 %v3529
    %3732 = vmatprep.subr.bf16.mxu0 %v3522
    %3733 = vmatpush1.bf16.msra.mxu0 %v3521
    %3734 = vmatprep.subr.bf16.mxu0 %v3514
    %3735 = vmatpush1.bf16.msra.mxu0 %v3513
    %3736 = vmatprep.subr.bf16.mxu0 %v3506
    %3737 = vmatpush1.bf16.msra.mxu0 %v3505
    %3738 = vmatprep.subr.bf16.mxu0 %v3498
    %3739 = vmatpush1.bf16.msra.mxu0 %v3497
    %3740 = vmatprep.subr.bf16.mxu0 %v3490
    %3741 = vmatpush1.bf16.msra.mxu0 %v3489
    %3742 = vmatprep.subr.bf16.mxu0 %v3482
    %3743 = vmatpush1.bf16.msra.mxu0 %v3481
    %3744 = vmatprep.subr.bf16.mxu0 0
    %3745 = vmatpush2.bf16.msra.mxu0 0
    %3746 = vmatprep.subr.bf16.mxu0 0
    %3747 = vmatpush2.bf16.msra.mxu0 0
    %3748 = vmatprep.subr.bf16.mxu0 0
    %3749 = vmatpush2.bf16.msra.mxu0 0
    %3750 = vmatprep.subr.bf16.mxu0 0
    %3751 = vmatpush2.bf16.msra.mxu0 0
    %3752 = vmatprep.subr.bf16.mxu0 0
    %3753 = vmatpush2.bf16.msra.mxu0 0
    %3754 = vmatprep.subr.bf16.mxu0 0
    %3755 = vmatpush2.bf16.msra.mxu0 0
    %3756 = vmatprep.subr.bf16.mxu0 0
    %3757 = vmatpush2.bf16.msra.mxu0 0
    %3758 = vmatprep.subr.bf16.mxu0 0
    %3759 = vmatpush2.bf16.msra.mxu0 0
    %3760 = vmatprep.mubr.bf16.mxu0 0
    %3761 = vmatmul.mubr.bf16.gmra.mxu0 %v3283
    %v3762 = vpop.f32.mrf.mxu0
    %v3763 = vadd.f32 %v3625, %v3762
    %v3764 = vpop.f32.mrf.mxu0
    %v3765 = vadd.f32 %v3629, %v3764
    %v3766 = vpop.f32.mrf.mxu0
    %v3767 = vpop.f32.mrf.mxu0
    %3768 = vdwg.mxu0
    %3769 = vmatprep.subr.bf16.mxu0 %v3540
    %3770 = vmatpush1.bf16.msra.mxu0 %v3539
    %3771 = vmatprep.subr.bf16.mxu0 %v3532
    %3772 = vmatpush1.bf16.msra.mxu0 %v3531
    %3773 = vmatprep.subr.bf16.mxu0 %v3524
    %3774 = vmatpush1.bf16.msra.mxu0 %v3523
    %3775 = vmatprep.subr.bf16.mxu0 %v3516
    %3776 = vmatpush1.bf16.msra.mxu0 %v3515
    %3777 = vmatprep.subr.bf16.mxu0 %v3508
    %3778 = vmatpush1.bf16.msra.mxu0 %v3507
    %3779 = vmatprep.subr.bf16.mxu0 %v3500
    %3780 = vmatpush1.bf16.msra.mxu0 %v3499
    %3781 = vmatprep.subr.bf16.mxu0 %v3492
    %3782 = vmatpush1.bf16.msra.mxu0 %v3491
    %3783 = vmatprep.subr.bf16.mxu0 %v3484
    %3784 = vmatpush1.bf16.msra.mxu0 %v3483
    %3785 = vmatprep.subr.bf16.mxu0 0
    %3786 = vmatpush2.bf16.msra.mxu0 0
    %3787 = vmatprep.subr.bf16.mxu0 0
    %3788 = vmatpush2.bf16.msra.mxu0 0
    %3789 = vmatprep.subr.bf16.mxu0 0
    %3790 = vmatpush2.bf16.msra.mxu0 0
    %3791 = vmatprep.subr.bf16.mxu0 0
    %3792 = vmatpush2.bf16.msra.mxu0 0
    %3793 = vmatprep.subr.bf16.mxu0 0
    %3794 = vmatpush2.bf16.msra.mxu0 0
    %3795 = vmatprep.subr.bf16.mxu0 0
    %3796 = vmatpush2.bf16.msra.mxu0 0
    %3797 = vmatprep.subr.bf16.mxu0 0
    %3798 = vmatpush2.bf16.msra.mxu0 0
    %3799 = vmatprep.subr.bf16.mxu0 0
    %3800 = vmatpush2.bf16.msra.mxu0 0
    %3801 = vmatprep.mubr.bf16.mxu0 0
    %3802 = vmatmul.mubr.bf16.gmra.mxu0 %v3283
    %v3803 = vpop.f32.mrf.mxu0
    %v3804 = vadd.f32 %v3633, %v3803
    %v3805 = vpop.f32.mrf.mxu0
    %v3806 = vadd.f32 %v3637, %v3805
    %v3807 = vpop.f32.mrf.mxu0
    %v3808 = vpop.f32.mrf.mxu0
    %3809 = vdwg.mxu0
    %v3818 = vcombine.low %v3681, %v3683
    %v3819 = vcombine.low %v3722, %v3724
    %v3820 = vcombine.low %v3763, %v3765
    %v3821 = vcombine.low %v3804, %v3806
    %v3823 = vunpack.c.l.s4 1966171168
    %v3824 = vunpack.c.0.s8 %v3823
    %v3825 = vlaneseq
    %v3826 = vshrl.u32 %v3825, 7
    %v3827 = vsub.s32 %v3824, %v3826
    %v3828 = vrot.slane %v3818, %v3827
    %v3830 = vunpack.c.l.s4 1966171168
    %v3831 = vunpack.c.0.s8 %v3830
    %v3832 = vlaneseq
    %v3833 = vshrl.u32 %v3832, 7
    %v3834 = vsub.s32 %v3831, %v3833
    %v3835 = vrot.slane %v3819, %v3834
    %v3837 = vunpack.c.l.s4 1966171168
    %v3838 = vunpack.c.0.s8 %v3837
    %v3839 = vlaneseq
    %v3840 = vshrl.u32 %v3839, 7
    %v3841 = vsub.s32 %v3838, %v3840
    %v3842 = vrot.slane %v3820, %v3841
    %v3844 = vunpack.c.l.s4 1966171168
    %v3845 = vunpack.c.0.s8 %v3844
    %v3846 = vlaneseq
    %v3847 = vshrl.u32 %v3846, 7
    %v3848 = vsub.s32 %v3845, %v3847
    %v3849 = vrot.slane %v3821, %v3848
    %v3850 = vcombine.low %v3828, %v3835
    %v3851 = vcombine.low %v3842, %v3849
    %v3853 = vunpack.c.l.s4 1966171168
    %v3854 = vunpack.c.0.s8 %v3853
    %v3855 = vlaneseq
    %v3856 = vshrl.u32 %v3855, 7
    %v3857 = vsub.s32 %v3854, %v3856
    %v3858 = vrot.slane %v3850, %v3857
    %v3860 = vunpack.c.l.s4 1966171168
    %v3861 = vunpack.c.0.s8 %v3860
    %v3862 = vlaneseq
    %v3863 = vshrl.u32 %v3862, 7
    %v3864 = vsub.s32 %v3861, %v3863
    %v3865 = vrot.slane %v3851, %v3864
    %v3866 = vcombine.low %v3858, %v3865
    %3868 = vst [vmem:[#allocation11] sm:$0xff] %v3866
    // Predicated region
    $region46: #{tpu_custom_call.1} parent=1 // pred_check
      _
    $region47: #{tpu_custom_call.1} parent=1 // pred_check_branch
      %3870 = sbr.rel (0) target = $region49
    $region48: #{tpu_custom_call.1} parent=1 // pred_region
      %s3872 = ssub.s32 128, 128
      %3873 = vsyncadd [#allocation4], %s3872
      %s3875 = sshll.u32 [#allocation11], 4
      %s3876 = int_to_ptr.vmem [resolvable:$true] %s3875
      %3878 = dma.vmem_to_hbm [thread:$0]  %s3876, 128, %s6, [#allocation4]
    $region49: #{tpu_custom_call.1} parent=1 // pred_fallthru
      _
    // Predicated region
    $region50: #{tpu_custom_call.1} parent=1 // pred_check
      _
    $region51: #{tpu_custom_call.1} parent=1 // pred_check_branch
      %3880 = sbr.rel (0) target = $region53
    $region52: #{tpu_custom_call.1} parent=1 // pred_region
      %3881 = dma.done [#allocation4], 128
    $region53: #{tpu_custom_call.1} parent=1 // pred_fallthru
      _
    %3882 = vsyncpa [#allocation3], 1
    %3883 = vsyncpa [#allocation6], 1
    %3884 = vsyncpa [#allocation9], 1
    %3885 = vsyncpa [#allocation4], 1

</llo_original>
